<compile_context>
chip_gen: v5e
topology: v5e:2x2
jax: 0.10.0
libtpu: 0.0.40
codegen_flags: <defaults>
</compile_context>

<pallas_src>
import jax
import jax.numpy as jnp
import numpy as np
from jax.experimental import pallas as pl
from jax.experimental.pallas import tpu as pltpu

BN_EPS = 1e-5
LANE = 128
VMEM_LIMIT = 32 * 1024 * 1024  # explicit, safe on v5e / v6e / v7x


def _round_up(x, m):
    return (x + m - 1) // m * m


# --------------- pass 1: 3x3x3 conv + per-slab BN partial stats -------------

def _conv3d_stats_kernel(x0_ref, x1_ref, x2_ref, w_ref, y_ref, stat_ref):
    """One (n, d) output slab.

    x{0,1,2}_ref: (H+2, W+2, Cp) bf16 halo'd activation slabs at depths
                  clamp(d-1), d, clamp(d+1).  H/W zero halo is already in HBM;
                  the depth halo is emulated by gating the clamped slabs.
    w_ref:        (3, 9*Cp, Cp) bf16, rows ordered (kh, kw, ci) per kd.
    y_ref:        (H, W, Cp) bf16 pre-BN conv output slab.
    stat_ref:     (2, Cp) f32 per-channel [sum, sumsq] partials for this slab.
    """
    H, W, Cp = y_ref.shape
    d = pl.program_id(1)
    last = pl.num_programs(1) - 1
    # Depth-boundary gates: the d-1 / d+1 slabs are clamped copies at the
    # volume boundary and must not contribute (implicit zero depth padding).
    gates = ((d > 0).astype(jnp.float32), None, (d < last).astype(jnp.float32))

    acc = jnp.zeros((H * W, Cp), jnp.float32)
    for kd, (x_ref, gate) in enumerate(zip((x0_ref, x1_ref, x2_ref), gates)):
        x = x_ref[...]                                      # (H+2, W+2, Cp) bf16
        # in-VMEM patch columns from shifted static slices (no HBM im2col)
        cols = jnp.concatenate(
            [x[kh:kh + H, kw:kw + W, :] for kh in range(3) for kw in range(3)],
            axis=-1,
        ).reshape(H * W, 9 * Cp)
        contrib = jnp.dot(cols, w_ref[kd],
                          preferred_element_type=jnp.float32)
        acc = acc + (contrib if gate is None else contrib * gate)

    y_ref[...] = acc.reshape(H, W, Cp).astype(y_ref.dtype)
    # BN partials only (from the f32 accumulator); the global reduction over
    # all N*D*H*W rows happens outside — training-mode BN is a cross-tile stat.
    stat_ref[0:1, :] = jnp.sum(acc, axis=0, keepdims=True)
    stat_ref[1:2, :] = jnp.sum(acc * acc, axis=0, keepdims=True)


def conv3d_pass1(act, w3):
    """act: (N, D, H+2, W+2, Cp) bf16 halo-embedded activation."""
    N, D, Hp2, Wp2, Cp = act.shape
    H, W = Hp2 - 2, Wp2 - 2

    halo_lo = pl.BlockSpec((None, None, Hp2, Wp2, Cp),
                           lambda n, d: (n, jnp.maximum(d - 1, 0), 0, 0, 0))
    halo_mid = pl.BlockSpec((None, None, Hp2, Wp2, Cp),
                            lambda n, d: (n, d, 0, 0, 0))
    halo_hi = pl.BlockSpec((None, None, Hp2, Wp2, Cp),
                           lambda n, d: (n, jnp.minimum(d + 1, D - 1), 0, 0, 0))

    return pl.pallas_call(
        _conv3d_stats_kernel,
        grid=(N, D),
        in_specs=[
            halo_lo, halo_mid, halo_hi,
            pl.BlockSpec((3, 9 * Cp, Cp), lambda n, d: (0, 0, 0)),  # VMEM-resident
        ],
        out_specs=[
            pl.BlockSpec((None, None, H, W, Cp), lambda n, d: (n, d, 0, 0, 0)),
            pl.BlockSpec((None, None, 2, Cp), lambda n, d: (n, d, 0, 0)),
        ],
        out_shape=(
            jax.ShapeDtypeStruct((N, D, H, W, Cp), jnp.bfloat16),
            jax.ShapeDtypeStruct((N, D, 2, Cp), jnp.float32),
        ),
        compiler_params=pltpu.CompilerParams(
            dimension_semantics=("parallel", "parallel"),
            vmem_limit_bytes=VMEM_LIMIT),
    )(act, act, act, w3)


# ------------- pass 2: fused BN apply + ReLU + halo re-embedding -------------

def _bn_relu_pad_kernel(y_ref, scale_ref, shift_ref, o_ref):
    """y_ref: (H, W, Cp) bf16 pre-BN conv slab; o_ref: (H+2, W+2, Cp) bf16
    halo-embedded activation slab (zero H/W border, next conv's padding)."""
    H, W, Cp = y_ref.shape
    t = jnp.maximum(
        y_ref[...].astype(jnp.float32) * scale_ref[...] + shift_ref[...], 0.0)
    o_ref[...] = jnp.zeros(o_ref.shape, o_ref.dtype)           # zero halo border
    o_ref[1:1 + H, 1:1 + W, :] = t.astype(o_ref.dtype)         # interior


def bn_relu_pass2(y, scale, shift):
    N, D, H, W, Cp = y.shape
    return pl.pallas_call(
        _bn_relu_pad_kernel,
        grid=(N, D),
        in_specs=[
            pl.BlockSpec((None, None, H, W, Cp), lambda n, d: (n, d, 0, 0, 0)),
            pl.BlockSpec((1, Cp), lambda n, d: (0, 0)),
            pl.BlockSpec((1, Cp), lambda n, d: (0, 0)),
        ],
        out_specs=pl.BlockSpec((None, None, H + 2, W + 2, Cp),
                               lambda n, d: (n, d, 0, 0, 0)),
        out_shape=jax.ShapeDtypeStruct((N, D, H + 2, W + 2, Cp), jnp.bfloat16),
        compiler_params=pltpu.CompilerParams(
            dimension_semantics=("parallel", "parallel"),
            vmem_limit_bytes=VMEM_LIMIT),
    )(y, scale, shift)


# --------------------------------- wrapper ----------------------------------

def conv_stack_forward(x_ndhwc, params):
    """ConvStack forward.  x_ndhwc: (N, D, H, W, C) float32."""
    N, D, H, W, C = x_ndhwc.shape
    Cp = _round_up(C, LANE)
    M = N * D * H * W
    # Activation carried halo-embedded (H/W zero border), channel-padded
    # (lane-dense) and in bf16 (MXU input).  Single pad for the whole stack.
    act = jnp.pad(x_ndhwc,
                  ((0, 0), (0, 0), (1, 1), (1, 1), (0, Cp - C))
                  ).astype(jnp.bfloat16)

    for (w, b, gamma, beta) in params:          # three ConvKnl3 units
        del b  # conv bias is exactly cancelled by training-mode BN mean subtraction
        wp = jnp.pad(w, ((0, 0),) * 3 + ((0, Cp - C), (0, Cp - C)))
        w3 = wp.reshape(3, 9 * Cp, Cp).astype(jnp.bfloat16)  # rows = (kh, kw, ci)

        y, partials = conv3d_pass1(act, w3)

        # Combine per-slab partials -> PyTorch training-mode BN stats
        # (biased variance), then fold gamma/beta into one scale/shift (f32).
        s = jnp.sum(partials[:, :, 0, :], axis=(0, 1))
        ss = jnp.sum(partials[:, :, 1, :], axis=(0, 1))
        mean = s / M
        var = jnp.maximum(ss / M - mean * mean, 0.0)
        gp = jnp.pad(gamma.reshape(-1), (0, Cp - C), constant_values=1.0)
        bp = jnp.pad(beta.reshape(-1), (0, Cp - C))
        scale = gp * jax.lax.rsqrt(var + BN_EPS)
        shift = bp - mean * scale

        act = bn_relu_pass2(y, scale.reshape(1, Cp), shift.reshape(1, Cp))

    return act[:, :, 1:1 + H, 1:1 + W, :C].astype(jnp.float32)


# ------------------------------- pure-JAX ref --------------------------------

def reference_forward(x_ndhwc, params):
    """Pure-JAX reference matching PyTorch ConvStack (training-mode BN), with
    the same bf16 rounding of conv inputs/weights that the kernel applies."""
    y = x_ndhwc
    for (w, b, gamma, beta) in params:
        xin = y.astype(jnp.bfloat16).astype(jnp.float32)
        wr = w.astype(jnp.bfloat16).astype(jnp.float32)
        y = jax.lax.conv_general_dilated(
            xin, wr, window_strides=(1, 1, 1), padding=((1, 1),) * 3,
            dimension_numbers=("NDHWC", "DHWIO", "NDHWC"),
            precision=jax.lax.Precision.HIGHEST)
        y = y + b.reshape(1, 1, 1, 1, -1)
        mean = jnp.mean(y, axis=(0, 1, 2, 3), keepdims=True)
        var = jnp.mean(jnp.square(y - mean), axis=(0, 1, 2, 3), keepdims=True)
        y = (y - mean) * jax.lax.rsqrt(var + BN_EPS)
        y = y * gamma.reshape(1, 1, 1, 1, -1) + beta.reshape(1, 1, 1, 1, -1)
        y = jnp.maximum(y, 0.0)
    return y


def make_params(key, in_ch, num_layers=3):
    params = []
    for _ in range(num_layers):
        key, k1, k2, k3, k4 = jax.random.split(key, 5)
        w = 0.2 * jax.random.normal(k1, (3, 3, 3, in_ch, in_ch), jnp.float32)
        b = 0.1 * jax.random.normal(k2, (1, in_ch), jnp.float32)
        gamma = 1.0 + 0.1 * jax.random.normal(k3, (1, in_ch), jnp.float32)
        beta = 0.1 * jax.random.normal(k4, (1, in_ch), jnp.float32)
        params.append((w, b, gamma, beta))
    return params


if __name__ == "__main__":
    N, C, D, H, W = 2, 4, 8, 8, 8
    key = jax.random.PRNGKey(0)
    key, kx = jax.random.split(key)

    # PyTorch-style NCDHW input, transposed to the kernel's NDHWC layout.
    x_ncdhw = jax.random.normal(kx, (N, C, D, H, W), jnp.float32)
    x_ndhwc = jnp.transpose(x_ncdhw, (0, 2, 3, 4, 1))

    params = make_params(key, C)

    fwd = jax.jit(conv_stack_forward)
    out = jax.block_until_ready(fwd(x_ndhwc, params))

    ref = jax.block_until_ready(reference_forward(x_ndhwc, params))
    np.testing.assert_allclose(np.asarray(out), np.asarray(ref),
                               rtol=2e-2, atol=2e-2)

    # Back to NCDHW if the caller wants PyTorch layout.
    _ = jnp.transpose(out, (0, 4, 1, 2, 3))
    print("KERNEL_OK")
</pallas_src>

<mosaic_0001>
module attributes {stable_mosaic.version = 11 : i64} {
  func.func @_conv3d_stats_kernel(%arg0: i32, %arg1: i32, %arg2: memref<1x1x10x10x128xbf16, #tpu.memory_space<vmem>>, %arg3: memref<1x1x10x10x128xbf16, #tpu.memory_space<vmem>>, %arg4: memref<1x1x10x10x128xbf16, #tpu.memory_space<vmem>>, %arg5: memref<3x1152x128xbf16, #tpu.memory_space<vmem>>, %arg6: memref<1x1x8x8x128xbf16, #tpu.memory_space<vmem>>, %arg7: memref<1x1x2x128xf32, #tpu.memory_space<vmem>>) attributes {dimension_semantics = [#tpu.dimension_semantics<parallel>, #tpu.dimension_semantics<parallel>], iteration_bounds = array<i64: 2, 8>, scalar_prefetch = 0 : i64, scratch_operands = 0 : i64, tpu.core_type = #tpu.core_type<tc>, window_params = [{transform_indices = @transform_0, window_bounds = array<i64: 1, 1, 10, 10, 128>}, {transform_indices = @transform_1, window_bounds = array<i64: 1, 1, 10, 10, 128>}, {transform_indices = @transform_2, window_bounds = array<i64: 1, 1, 10, 10, 128>}, {pipeline_mode = #tpu.pipeline_mode<synchronous>, transform_indices = @transform_3, window_bounds = array<i64: 3, 1152, 128>}, {transform_indices = @transform_4, window_bounds = array<i64: 1, 1, 8, 8, 128>}, {transform_indices = @transform_5, window_bounds = array<i64: 1, 1, 2, 128>}]} {
    %c0_i32 = arith.constant 0 : i32
    %0 = arith.cmpi sgt, %arg1, %c0_i32 : i32
    %1 = arith.extui %0 : i1 to i32
    %2 = arith.sitofp %1 : i32 to f32
    %c7_i32 = arith.constant 7 : i32
    %3 = arith.cmpi slt, %arg1, %c7_i32 : i32
    %4 = arith.extui %3 : i1 to i32
    %5 = arith.sitofp %4 : i32 to f32
    %cst = arith.constant 0.000000e+00 : f32
    %6 = vector.broadcast %cst : f32 to vector<64x128xf32>
    %c0 = arith.constant 0 : index
    %c0_0 = arith.constant 0 : index
    %c0_1 = arith.constant 0 : index
    %c0_2 = arith.constant 0 : index
    %c0_3 = arith.constant 0 : index
    %7 = vector.load %arg2[%c0, %c0_0, %c0_1, %c0_2, %c0_3] : memref<1x1x10x10x128xbf16, #tpu.memory_space<vmem>>, vector<1x1x10x10x128xbf16>
    %8 = vector.shape_cast %7 : vector<1x1x10x10x128xbf16> to vector<10x10x128xbf16>
    %9 = vector.extract_strided_slice %8 {offsets = [0, 0, 0], sizes = [8, 8, 128], strides = [1, 1, 1]} : vector<10x10x128xbf16> to vector<8x8x128xbf16>
    %10 = vector.extract_strided_slice %8 {offsets = [0, 1, 0], sizes = [8, 8, 128], strides = [1, 1, 1]} : vector<10x10x128xbf16> to vector<8x8x128xbf16>
    %11 = vector.extract_strided_slice %8 {offsets = [0, 2, 0], sizes = [8, 8, 128], strides = [1, 1, 1]} : vector<10x10x128xbf16> to vector<8x8x128xbf16>
    %12 = vector.extract_strided_slice %8 {offsets = [1, 0, 0], sizes = [8, 8, 128], strides = [1, 1, 1]} : vector<10x10x128xbf16> to vector<8x8x128xbf16>
    %13 = vector.extract_strided_slice %8 {offsets = [1, 1, 0], sizes = [8, 8, 128], strides = [1, 1, 1]} : vector<10x10x128xbf16> to vector<8x8x128xbf16>
    %14 = vector.extract_strided_slice %8 {offsets = [1, 2, 0], sizes = [8, 8, 128], strides = [1, 1, 1]} : vector<10x10x128xbf16> to vector<8x8x128xbf16>
    %15 = vector.extract_strided_slice %8 {offsets = [2, 0, 0], sizes = [8, 8, 128], strides = [1, 1, 1]} : vector<10x10x128xbf16> to vector<8x8x128xbf16>
    %16 = vector.extract_strided_slice %8 {offsets = [2, 1, 0], sizes = [8, 8, 128], strides = [1, 1, 1]} : vector<10x10x128xbf16> to vector<8x8x128xbf16>
    %17 = vector.extract_strided_slice %8 {offsets = [2, 2, 0], sizes = [8, 8, 128], strides = [1, 1, 1]} : vector<10x10x128xbf16> to vector<8x8x128xbf16>
    %18 = tpu.concatenate %9, %10, %11, %12, %13, %14, %15, %16, %17 in 2 : vector<8x8x128xbf16>, vector<8x8x128xbf16>, vector<8x8x128xbf16>, vector<8x8x128xbf16>, vector<8x8x128xbf16>, vector<8x8x128xbf16>, vector<8x8x128xbf16>, vector<8x8x128xbf16>, vector<8x8x128xbf16> -> vector<8x8x1152xbf16>
    %19 = vector.shape_cast %18 : vector<8x8x1152xbf16> to vector<64x1152xbf16>
    %c0_4 = arith.constant 0 : index
    %c0_5 = arith.constant 0 : index
    %c0_6 = arith.constant 0 : index
    %20 = vector.load %arg5[%c0_4, %c0_5, %c0_6] : memref<3x1152x128xbf16, #tpu.memory_space<vmem>>, vector<1x1152x128xbf16>
    %21 = vector.shape_cast %20 : vector<1x1152x128xbf16> to vector<1152x128xbf16>
    %cst_7 = arith.constant dense<0.000000e+00> : vector<64x128xf32>
    %22 = tpu.matmul %19, %21, %cst_7 {dimension_numbers = #tpu.dot_dimension_numbers<[1], [0], [0], [1], [0, 0, 1, 1], [], []>} : vector<64x1152xbf16>, vector<1152x128xbf16>, vector<64x128xf32> -> vector<64x128xf32>
    %23 = vector.broadcast %2 : f32 to vector<64x128xf32>
    %24 = arith.mulf %22, %23 : vector<64x128xf32>
    %25 = arith.addf %6, %24 : vector<64x128xf32>
    %c0_8 = arith.constant 0 : index
    %c0_9 = arith.constant 0 : index
    %c0_10 = arith.constant 0 : index
    %c0_11 = arith.constant 0 : index
    %c0_12 = arith.constant 0 : index
    %26 = vector.load %arg3[%c0_8, %c0_9, %c0_10, %c0_11, %c0_12] : memref<1x1x10x10x128xbf16, #tpu.memory_space<vmem>>, vector<1x1x10x10x128xbf16>
    %27 = vector.shape_cast %26 : vector<1x1x10x10x128xbf16> to vector<10x10x128xbf16>
    %28 = vector.extract_strided_slice %27 {offsets = [0, 0, 0], sizes = [8, 8, 128], strides = [1, 1, 1]} : vector<10x10x128xbf16> to vector<8x8x128xbf16>
    %29 = vector.extract_strided_slice %27 {offsets = [0, 1, 0], sizes = [8, 8, 128], strides = [1, 1, 1]} : vector<10x10x128xbf16> to vector<8x8x128xbf16>
    %30 = vector.extract_strided_slice %27 {offsets = [0, 2, 0], sizes = [8, 8, 128], strides = [1, 1, 1]} : vector<10x10x128xbf16> to vector<8x8x128xbf16>
    %31 = vector.extract_strided_slice %27 {offsets = [1, 0, 0], sizes = [8, 8, 128], strides = [1, 1, 1]} : vector<10x10x128xbf16> to vector<8x8x128xbf16>
    %32 = vector.extract_strided_slice %27 {offsets = [1, 1, 0], sizes = [8, 8, 128], strides = [1, 1, 1]} : vector<10x10x128xbf16> to vector<8x8x128xbf16>
    %33 = vector.extract_strided_slice %27 {offsets = [1, 2, 0], sizes = [8, 8, 128], strides = [1, 1, 1]} : vector<10x10x128xbf16> to vector<8x8x128xbf16>
    %34 = vector.extract_strided_slice %27 {offsets = [2, 0, 0], sizes = [8, 8, 128], strides = [1, 1, 1]} : vector<10x10x128xbf16> to vector<8x8x128xbf16>
    %35 = vector.extract_strided_slice %27 {offsets = [2, 1, 0], sizes = [8, 8, 128], strides = [1, 1, 1]} : vector<10x10x128xbf16> to vector<8x8x128xbf16>
    %36 = vector.extract_strided_slice %27 {offsets = [2, 2, 0], sizes = [8, 8, 128], strides = [1, 1, 1]} : vector<10x10x128xbf16> to vector<8x8x128xbf16>
    %37 = tpu.concatenate %28, %29, %30, %31, %32, %33, %34, %35, %36 in 2 : vector<8x8x128xbf16>, vector<8x8x128xbf16>, vector<8x8x128xbf16>, vector<8x8x128xbf16>, vector<8x8x128xbf16>, vector<8x8x128xbf16>, vector<8x8x128xbf16>, vector<8x8x128xbf16>, vector<8x8x128xbf16> -> vector<8x8x1152xbf16>
    %38 = vector.shape_cast %37 : vector<8x8x1152xbf16> to vector<64x1152xbf16>
    %c1 = arith.constant 1 : index
    %c0_13 = arith.constant 0 : index
    %c0_14 = arith.constant 0 : index
    %39 = vector.load %arg5[%c1, %c0_13, %c0_14] : memref<3x1152x128xbf16, #tpu.memory_space<vmem>>, vector<1x1152x128xbf16>
    %40 = vector.shape_cast %39 : vector<1x1152x128xbf16> to vector<1152x128xbf16>
    %cst_15 = arith.constant dense<0.000000e+00> : vector<64x128xf32>
    %41 = tpu.matmul %38, %40, %cst_15 {dimension_numbers = #tpu.dot_dimension_numbers<[1], [0], [0], [1], [0, 0, 1, 1], [], []>} : vector<64x1152xbf16>, vector<1152x128xbf16>, vector<64x128xf32> -> vector<64x128xf32>
    %42 = arith.addf %25, %41 : vector<64x128xf32>
    %c0_16 = arith.constant 0 : index
    %c0_17 = arith.constant 0 : index
    %c0_18 = arith.constant 0 : index
    %c0_19 = arith.constant 0 : index
    %c0_20 = arith.constant 0 : index
    %43 = vector.load %arg4[%c0_16, %c0_17, %c0_18, %c0_19, %c0_20] : memref<1x1x10x10x128xbf16, #tpu.memory_space<vmem>>, vector<1x1x10x10x128xbf16>
    %44 = vector.shape_cast %43 : vector<1x1x10x10x128xbf16> to vector<10x10x128xbf16>
    %45 = vector.extract_strided_slice %44 {offsets = [0, 0, 0], sizes = [8, 8, 128], strides = [1, 1, 1]} : vector<10x10x128xbf16> to vector<8x8x128xbf16>
    %46 = vector.extract_strided_slice %44 {offsets = [0, 1, 0], sizes = [8, 8, 128], strides = [1, 1, 1]} : vector<10x10x128xbf16> to vector<8x8x128xbf16>
    %47 = vector.extract_strided_slice %44 {offsets = [0, 2, 0], sizes = [8, 8, 128], strides = [1, 1, 1]} : vector<10x10x128xbf16> to vector<8x8x128xbf16>
    %48 = vector.extract_strided_slice %44 {offsets = [1, 0, 0], sizes = [8, 8, 128], strides = [1, 1, 1]} : vector<10x10x128xbf16> to vector<8x8x128xbf16>
    %49 = vector.extract_strided_slice %44 {offsets = [1, 1, 0], sizes = [8, 8, 128], strides = [1, 1, 1]} : vector<10x10x128xbf16> to vector<8x8x128xbf16>
    %50 = vector.extract_strided_slice %44 {offsets = [1, 2, 0], sizes = [8, 8, 128], strides = [1, 1, 1]} : vector<10x10x128xbf16> to vector<8x8x128xbf16>
    %51 = vector.extract_strided_slice %44 {offsets = [2, 0, 0], sizes = [8, 8, 128], strides = [1, 1, 1]} : vector<10x10x128xbf16> to vector<8x8x128xbf16>
    %52 = vector.extract_strided_slice %44 {offsets = [2, 1, 0], sizes = [8, 8, 128], strides = [1, 1, 1]} : vector<10x10x128xbf16> to vector<8x8x128xbf16>
    %53 = vector.extract_strided_slice %44 {offsets = [2, 2, 0], sizes = [8, 8, 128], strides = [1, 1, 1]} : vector<10x10x128xbf16> to vector<8x8x128xbf16>
    %54 = tpu.concatenate %45, %46, %47, %48, %49, %50, %51, %52, %53 in 2 : vector<8x8x128xbf16>, vector<8x8x128xbf16>, vector<8x8x128xbf16>, vector<8x8x128xbf16>, vector<8x8x128xbf16>, vector<8x8x128xbf16>, vector<8x8x128xbf16>, vector<8x8x128xbf16>, vector<8x8x128xbf16> -> vector<8x8x1152xbf16>
    %55 = vector.shape_cast %54 : vector<8x8x1152xbf16> to vector<64x1152xbf16>
    %c2 = arith.constant 2 : index
    %c0_21 = arith.constant 0 : index
    %c0_22 = arith.constant 0 : index
    %56 = vector.load %arg5[%c2, %c0_21, %c0_22] : memref<3x1152x128xbf16, #tpu.memory_space<vmem>>, vector<1x1152x128xbf16>
    %57 = vector.shape_cast %56 : vector<1x1152x128xbf16> to vector<1152x128xbf16>
    %cst_23 = arith.constant dense<0.000000e+00> : vector<64x128xf32>
    %58 = tpu.matmul %55, %57, %cst_23 {dimension_numbers = #tpu.dot_dimension_numbers<[1], [0], [0], [1], [0, 0, 1, 1], [], []>} : vector<64x1152xbf16>, vector<1152x128xbf16>, vector<64x128xf32> -> vector<64x128xf32>
    %59 = vector.broadcast %5 : f32 to vector<64x128xf32>
    %60 = arith.mulf %58, %59 : vector<64x128xf32>
    %61 = arith.addf %42, %60 : vector<64x128xf32>
    %62 = vector.shape_cast %61 : vector<64x128xf32> to vector<8x8x128xf32>
    %63 = arith.truncf %62 : vector<8x8x128xf32> to vector<8x8x128xbf16>
    %c0_24 = arith.constant 0 : index
    %c0_25 = arith.constant 0 : index
    %c0_26 = arith.constant 0 : index
    %c0_27 = arith.constant 0 : index
    %c0_28 = arith.constant 0 : index
    %64 = vector.load %arg6[%c0_24, %c0_25, %c0_26, %c0_27, %c0_28] : memref<1x1x8x8x128xbf16, #tpu.memory_space<vmem>>, vector<1x1x8x8x128xbf16>
    %65 = vector.shape_cast %64 : vector<1x1x8x8x128xbf16> to vector<8x8x128xbf16>
    %66 = vector.shape_cast %63 : vector<8x8x128xbf16> to vector<1x1x8x8x128xbf16>
    tpu.vector_store %arg6[%c0_24, %c0_25, %c0_26, %c0_27, %c0_28], %66 {strides = array<i32>} : memref<1x1x8x8x128xbf16, #tpu.memory_space<vmem>>, vector<1x1x8x8x128xbf16>,
    %cst_29 = arith.constant dense<0.000000e+00> : vector<128xf32>
    %67 = vector.multi_reduction <add>, %61, %cst_29 [0] : vector<64x128xf32> to vector<128xf32>
    %68 = vector.shape_cast %67 : vector<128xf32> to vector<1x128xf32>
    %c0_30 = arith.constant 0 : index
    %c0_31 = arith.constant 0 : index
    %c0_32 = arith.constant 0 : index
    %c0_33 = arith.constant 0 : index
    %69 = vector.load %arg7[%c0_30, %c0_31, %c0_32, %c0_33] : memref<1x1x2x128xf32, #tpu.memory_space<vmem>>, vector<1x1x1x128xf32>
    %70 = vector.shape_cast %69 : vector<1x1x1x128xf32> to vector<1x128xf32>
    %71 = vector.shape_cast %68 : vector<1x128xf32> to vector<1x1x1x128xf32>
    tpu.vector_store %arg7[%c0_30, %c0_31, %c0_32, %c0_33], %71 {strides = array<i32>} : memref<1x1x2x128xf32, #tpu.memory_space<vmem>>, vector<1x1x1x128xf32>,
    %72 = arith.mulf %61, %61 : vector<64x128xf32>
    %cst_34 = arith.constant dense<0.000000e+00> : vector<128xf32>
    %73 = vector.multi_reduction <add>, %72, %cst_34 [0] : vector<64x128xf32> to vector<128xf32>
    %74 = vector.shape_cast %73 : vector<128xf32> to vector<1x128xf32>
    %c0_35 = arith.constant 0 : index
    %c0_36 = arith.constant 0 : index
    %c1_37 = arith.constant 1 : index
    %c0_38 = arith.constant 0 : index
    %75 = vector.load %arg7[%c0_35, %c0_36, %c1_37, %c0_38] : memref<1x1x2x128xf32, #tpu.memory_space<vmem>>, vector<1x1x1x128xf32>
    %76 = vector.shape_cast %75 : vector<1x1x1x128xf32> to vector<1x128xf32>
    %77 = vector.shape_cast %74 : vector<1x128xf32> to vector<1x1x1x128xf32>
    tpu.vector_store %arg7[%c0_35, %c0_36, %c1_37, %c0_38], %77 {strides = array<i32>} : memref<1x1x2x128xf32, #tpu.memory_space<vmem>>, vector<1x1x1x128xf32>,
    return
  }
  func.func @transform_0(%arg0: i32, %arg1: i32) -> (i32, i32, i32, i32, i32) {
    %c1_i32 = arith.constant 1 : i32
    %0 = arith.subi %arg1, %c1_i32 : i32
    %c0_i32 = arith.constant 0 : i32
    %1 = arith.maxsi %0, %c0_i32 : i32
    %c0_i32_0 = arith.constant 0 : i32
    %c0_i32_1 = arith.constant 0 : i32
    %c0_i32_2 = arith.constant 0 : i32
    %c0_i32_3 = arith.constant 0 : i32
    return %arg0, %1, %c0_i32_0, %c0_i32_1, %c0_i32_2 : i32, i32, i32, i32, i32
  }
  func.func @transform_1(%arg0: i32, %arg1: i32) -> (i32, i32, i32, i32, i32) {
    %c0_i32 = arith.constant 0 : i32
    %c0_i32_0 = arith.constant 0 : i32
    %c0_i32_1 = arith.constant 0 : i32
    %c0_i32_2 = arith.constant 0 : i32
    return %arg0, %arg1, %c0_i32, %c0_i32_0, %c0_i32_1 : i32, i32, i32, i32, i32
  }
  func.func @transform_2(%arg0: i32, %arg1: i32) -> (i32, i32, i32, i32, i32) {
    %c1_i32 = arith.constant 1 : i32
    %0 = arith.addi %arg1, %c1_i32 : i32
    %c7_i32 = arith.constant 7 : i32
    %1 = arith.minsi %0, %c7_i32 : i32
    %c0_i32 = arith.constant 0 : i32
    %c0_i32_0 = arith.constant 0 : i32
    %c0_i32_1 = arith.constant 0 : i32
    %c0_i32_2 = arith.constant 0 : i32
    return %arg0, %1, %c0_i32, %c0_i32_0, %c0_i32_1 : i32, i32, i32, i32, i32
  }
  func.func @transform_3(%arg0: i32, %arg1: i32) -> (i32, i32, i32) {
    %c0_i32 = arith.constant 0 : i32
    %c0_i32_0 = arith.constant 0 : i32
    %c0_i32_1 = arith.constant 0 : i32
    %c0_i32_2 = arith.constant 0 : i32
    return %c0_i32, %c0_i32_0, %c0_i32_1 : i32, i32, i32
  }
  func.func @transform_4(%arg0: i32, %arg1: i32) -> (i32, i32, i32, i32, i32) {
    %c0_i32 = arith.constant 0 : i32
    %c0_i32_0 = arith.constant 0 : i32
    %c0_i32_1 = arith.constant 0 : i32
    %c0_i32_2 = arith.constant 0 : i32
    return %arg0, %arg1, %c0_i32, %c0_i32_0, %c0_i32_1 : i32, i32, i32, i32, i32
  }
  func.func @transform_5(%arg0: i32, %arg1: i32) -> (i32, i32, i32, i32) {
    %c0_i32 = arith.constant 0 : i32
    %c0_i32_0 = arith.constant 0 : i32
    %c0_i32_1 = arith.constant 0 : i32
    return %arg0, %arg1, %c0_i32, %c0_i32_0 : i32, i32, i32, i32
  }
}

module attributes {stable_mosaic.version = 11 : i64} {
  func.func @_bn_relu_pad_kernel(%arg0: i32, %arg1: i32, %arg2: memref<1x1x8x8x128xbf16, #tpu.memory_space<vmem>>, %arg3: memref<1x128xf32, #tpu.memory_space<vmem>>, %arg4: memref<1x128xf32, #tpu.memory_space<vmem>>, %arg5: memref<1x1x10x10x128xbf16, #tpu.memory_space<vmem>>) attributes {dimension_semantics = [#tpu.dimension_semantics<parallel>, #tpu.dimension_semantics<parallel>], iteration_bounds = array<i64: 2, 8>, scalar_prefetch = 0 : i64, scratch_operands = 0 : i64, tpu.core_type = #tpu.core_type<tc>, window_params = [{transform_indices = @transform_0, window_bounds = array<i64: 1, 1, 8, 8, 128>}, {pipeline_mode = #tpu.pipeline_mode<synchronous>, transform_indices = @transform_1, window_bounds = array<i64: 1, 128>}, {pipeline_mode = #tpu.pipeline_mode<synchronous>, transform_indices = @transform_2, window_bounds = array<i64: 1, 128>}, {transform_indices = @transform_3, window_bounds = array<i64: 1, 1, 10, 10, 128>}]} {
    %c0 = arith.constant 0 : index
    %c0_0 = arith.constant 0 : index
    %c0_1 = arith.constant 0 : index
    %c0_2 = arith.constant 0 : index
    %c0_3 = arith.constant 0 : index
    %0 = vector.load %arg2[%c0, %c0_0, %c0_1, %c0_2, %c0_3] : memref<1x1x8x8x128xbf16, #tpu.memory_space<vmem>>, vector<1x1x8x8x128xbf16>
    %1 = vector.shape_cast %0 : vector<1x1x8x8x128xbf16> to vector<8x8x128xbf16>
    %2 = arith.extf %1 : vector<8x8x128xbf16> to vector<8x8x128xf32>
    %c0_4 = arith.constant 0 : index
    %c0_5 = arith.constant 0 : index
    %3 = vector.load %arg3[%c0_4, %c0_5] : memref<1x128xf32, #tpu.memory_space<vmem>>, vector<1x128xf32>
    %4 = vector.shape_cast %3 : vector<1x128xf32> to vector<1x1x128xf32>
    %5 = vector.broadcast %4 : vector<1x1x128xf32> to vector<8x8x128xf32>
    %6 = arith.mulf %2, %5 : vector<8x8x128xf32>
    %c0_6 = arith.constant 0 : index
    %c0_7 = arith.constant 0 : index
    %7 = vector.load %arg4[%c0_6, %c0_7] : memref<1x128xf32, #tpu.memory_space<vmem>>, vector<1x128xf32>
    %8 = vector.shape_cast %7 : vector<1x128xf32> to vector<1x1x128xf32>
    %9 = vector.broadcast %8 : vector<1x1x128xf32> to vector<8x8x128xf32>
    %10 = arith.addf %6, %9 : vector<8x8x128xf32>
    %cst = arith.constant 0.000000e+00 : f32
    %11 = vector.broadcast %cst : f32 to vector<8x8x128xf32>
    %12 = arith.maximumf %10, %11 : vector<8x8x128xf32>
    %cst_8 = arith.constant 0.000000e+00 : bf16
    %13 = vector.broadcast %cst_8 : bf16 to vector<10x10x128xbf16>
    %c0_9 = arith.constant 0 : index
    %c0_10 = arith.constant 0 : index
    %c0_11 = arith.constant 0 : index
    %c0_12 = arith.constant 0 : index
    %c0_13 = arith.constant 0 : index
    %14 = vector.load %arg5[%c0_9, %c0_10, %c0_11, %c0_12, %c0_13] : memref<1x1x10x10x128xbf16, #tpu.memory_space<vmem>>, vector<1x1x10x10x128xbf16>
    %15 = vector.shape_cast %14 : vector<1x1x10x10x128xbf16> to vector<10x10x128xbf16>
    %16 = vector.shape_cast %13 : vector<10x10x128xbf16> to vector<1x1x10x10x128xbf16>
    tpu.vector_store %arg5[%c0_9, %c0_10, %c0_11, %c0_12, %c0_13], %16 {strides = array<i32>} : memref<1x1x10x10x128xbf16, #tpu.memory_space<vmem>>, vector<1x1x10x10x128xbf16>,
    %17 = arith.truncf %12 : vector<8x8x128xf32> to vector<8x8x128xbf16>
    %c0_14 = arith.constant 0 : index
    %c0_15 = arith.constant 0 : index
    %c1 = arith.constant 1 : index
    %c1_16 = arith.constant 1 : index
    %c0_17 = arith.constant 0 : index
    %18 = vector.load %arg5[%c0_14, %c0_15, %c1, %c1_16, %c0_17] : memref<1x1x10x10x128xbf16, #tpu.memory_space<vmem>>, vector<1x1x8x8x128xbf16>
    %19 = vector.shape_cast %18 : vector<1x1x8x8x128xbf16> to vector<8x8x128xbf16>
    %20 = vector.shape_cast %17 : vector<8x8x128xbf16> to vector<1x1x8x8x128xbf16>
    tpu.vector_store %arg5[%c0_14, %c0_15, %c1, %c1_16, %c0_17], %20 {strides = array<i32>} : memref<1x1x10x10x128xbf16, #tpu.memory_space<vmem>>, vector<1x1x8x8x128xbf16>,
    return
  }
  func.func @transform_0(%arg0: i32, %arg1: i32) -> (i32, i32, i32, i32, i32) {
    %c0_i32 = arith.constant 0 : i32
    %c0_i32_0 = arith.constant 0 : i32
    %c0_i32_1 = arith.constant 0 : i32
    %c0_i32_2 = arith.constant 0 : i32
    return %arg0, %arg1, %c0_i32, %c0_i32_0, %c0_i32_1 : i32, i32, i32, i32, i32
  }
  func.func @transform_1(%arg0: i32, %arg1: i32) -> (i32, i32) {
    %c0_i32 = arith.constant 0 : i32
    %c0_i32_0 = arith.constant 0 : i32
    %c0_i32_1 = arith.constant 0 : i32
    return %c0_i32, %c0_i32_0 : i32, i32
  }
  func.func @transform_2(%arg0: i32, %arg1: i32) -> (i32, i32) {
    %c0_i32 = arith.constant 0 : i32
    %c0_i32_0 = arith.constant 0 : i32
    %c0_i32_1 = arith.constant 0 : i32
    return %c0_i32, %c0_i32_0 : i32, i32
  }
  func.func @transform_3(%arg0: i32, %arg1: i32) -> (i32, i32, i32, i32, i32) {
    %c0_i32 = arith.constant 0 : i32
    %c0_i32_0 = arith.constant 0 : i32
    %c0_i32_1 = arith.constant 0 : i32
    %c0_i32_2 = arith.constant 0 : i32
    return %arg0, %arg1, %c0_i32, %c0_i32_0, %c0_i32_1 : i32, i32, i32, i32, i32
  }
}

</mosaic_0001>

<llo_original>
// kernel: conv_stack_forward.7
$region0: #{conv_stack_forward.7}
  #allocation0 [shape = 'u32[]', space=smem, size = 0x4, offset = 0x4, fixed_abs, tag = 'smem constant byte address 0x4 - core index']
  #allocation1 [shape = 'u32[72,128]{1,0:T(1,128)}', space=vmem, size = 0x9000, scoped, tag = 'internal scratch']
  %s0 = inlined_call_operand.vmem [shape: bf16[2,8,8,8,128], index: 0, kind: input, shape index: {}]
  %s1 = inlined_call_operand.vmem [shape: f32[1,128], index: 1, kind: input, shape index: {}]
  %s2 = inlined_call_operand.vmem [shape: f32[1,128], index: 2, kind: input, shape index: {}]
  %s3 = inlined_call_operand.vmem [shape: bf16[2,8,10,10,128], index: 3, kind: output, shape index: {}]
  %s4 = sld [smem:[#allocation0]]
  $region45: #{conv_stack_forward.7} parent=0
    _
  %s6 = ssub.s32 1, %s4
  %s7 = scalar_select 0, %s6, %s4
  loop: start=0, step=1, limit=18
  $region2: #{conv_stack_forward.7} parent=0 // loop_pre_header
    _
  $region3: #{conv_stack_forward.7} parent=0 // loop_header
    %s9 = sphi 0, %s13
    %p10 = scmp.ge.s32.totalorder %s9, 18
    %s16 = sphi 0, %s28
    %s17 = sphi 0, %s24
    %s18 = sphi 0, %s16
    %s19 = sphi 0, %s17
    %s20 = sphi 0, %s18
    %s21 = sphi 0, %s19
    %s33 = sphi 0, %s35
    %s36 = sphi 0, %s33
    %s37 = sphi 0, %s36
    %s53 = sphi 0, %s37
    %s57 = sphi 0, %s57
    %s59 = sphi 0, %s57
    %s60 = sphi 0, %s59
    %s74 = sphi 0, %s60
    %s78 = sphi 0, %s78
    %s80 = sphi 0, %s78
    %s81 = sphi 0, %s80
    %s95 = sphi 0, %s81
    %s103 = sphi 0, %s105
    %s106 = sphi 0, %s103
    %s107 = sphi 0, %s106
    %s123 = sphi 0, %s107
  $region4: #{conv_stack_forward.7} parent=0 // loop_header_branch
    %12 = sbr.rel (%p10) target = $region8
  $region5: #{conv_stack_forward.7} parent=0 // loop_body
    %s14 = ssub.s32 %s9, 1
    %s15 = ssub.s32 %s9, 2
    %s22 = sadd.s32 1, %s17
    %p23 = scmp.ge.s32.totalorder %s22, 8
    %s24 = scalar_select %p23, 0, %s22
    %s25 = sadd.s32 1, %s16
    %s26 = scalar_select %p23, %s25, %s16
    %p27 = scmp.ge.s32.totalorder %s26, 2
    %s28 = scalar_select %p27, 0, %s26
    %s29 = ssub.s32 %s16, %s28
    %s30 = ssub.s32 %s17, %s24
    %s31 = sor.u32 %s29, %s30
    %p32 = scmp.eq.s32.totalorder %s31, 0
    %s34 = sadd.s32 %s33, 1
    %s35 = scalar_select %p32, %s33, %s34
    %p38 = pneg %p32
    %p39 = scmp.eq.s32.totalorder %s9, 15
    %p40 = por %p38, %p39
    %p41 = scmp.ne.s32.totalorder %s33, %s36
    %p42 = scmp.eq.s32.totalorder %s9, 0
    %p43 = por %p41, %p42
    %p44 = scmp.ne.s32.totalorder %s33, %s36
    %p45 = scmp.eq.s32.totalorder %s14, 15
    %p46 = por %p44, %p45
    %p47 = scmp.ne.s32.totalorder %s36, %s37
    %p48 = scmp.eq.s32.totalorder %s14, 0
    %p49 = por %p47, %p48
    %p50 = scmp.ne.s32.totalorder %s36, %s37
    %p51 = scmp.eq.s32.totalorder %s15, 15
    %p52 = por %p50, %p51
    %p54 = scmp.ne.s32.totalorder %s37, %s53
    %p55 = scmp.eq.s32.totalorder %s15, 0
    %p56 = por %p54, %p55
    %s58 = sadd.s32 %s57, 1
    %p61 = scmp.eq.s32.totalorder %s9, 15
    %p62 = scmp.ne.s32.totalorder %s57, %s59
    %p63 = scmp.eq.s32.totalorder %s9, 0
    %p64 = por %p62, %p63
    %p65 = scmp.ne.s32.totalorder %s57, %s59
    %p66 = scmp.eq.s32.totalorder %s14, 15
    %p67 = por %p65, %p66
    %p68 = scmp.ne.s32.totalorder %s59, %s60
    %p69 = scmp.eq.s32.totalorder %s14, 0
    %p70 = por %p68, %p69
    %p71 = scmp.ne.s32.totalorder %s59, %s60
    %p72 = scmp.eq.s32.totalorder %s15, 15
    %p73 = por %p71, %p72
    %p75 = scmp.ne.s32.totalorder %s60, %s74
    %p76 = scmp.eq.s32.totalorder %s15, 0
    %p77 = por %p75, %p76
    %s79 = sadd.s32 %s78, 1
    %p82 = scmp.eq.s32.totalorder %s9, 15
    %p83 = scmp.ne.s32.totalorder %s78, %s80
    %p84 = scmp.eq.s32.totalorder %s9, 0
    %p85 = por %p83, %p84
    %p86 = scmp.ne.s32.totalorder %s78, %s80
    %p87 = scmp.eq.s32.totalorder %s14, 15
    %p88 = por %p86, %p87
    %p89 = scmp.ne.s32.totalorder %s80, %s81
    %p90 = scmp.eq.s32.totalorder %s14, 0
    %p91 = por %p89, %p90
    %p92 = scmp.ne.s32.totalorder %s80, %s81
    %p93 = scmp.eq.s32.totalorder %s15, 15
    %p94 = por %p92, %p93
    %p96 = scmp.ne.s32.totalorder %s81, %s95
    %p97 = scmp.eq.s32.totalorder %s15, 0
    %p98 = por %p96, %p97
    %s99 = ssub.s32 %s16, %s28
    %s100 = ssub.s32 %s17, %s24
    %s101 = sor.u32 %s99, %s100
    %p102 = scmp.eq.s32.totalorder %s101, 0
    %s104 = sadd.s32 %s103, 1
    %s105 = scalar_select %p102, %s103, %s104
    %p108 = pneg %p102
    %p109 = scmp.eq.s32.totalorder %s9, 15
    %p110 = por %p108, %p109
    %p111 = scmp.ne.s32.totalorder %s103, %s106
    %p112 = scmp.eq.s32.totalorder %s9, 0
    %p113 = por %p111, %p112
    %p114 = scmp.ne.s32.totalorder %s103, %s106
    %p115 = scmp.eq.s32.totalorder %s14, 15
    %p116 = por %p114, %p115
    %p117 = scmp.ne.s32.totalorder %s106, %s107
    %p118 = scmp.eq.s32.totalorder %s14, 0
    %p119 = por %p117, %p118
    %p120 = scmp.ne.s32.totalorder %s106, %s107
    %p121 = scmp.eq.s32.totalorder %s15, 15
    %p122 = por %p120, %p121
    %p124 = scmp.ne.s32.totalorder %s107, %s123
    %p125 = scmp.eq.s32.totalorder %s15, 0
    %p126 = por %p124, %p125
    %p127 = scmp.le.s32.totalorder 1, %s9
    %p128 = scmp.lt.s32.totalorder %s9, 17
    %p129 = pnand %p127, %p128
    %p130 = pneg %p129
    // Predicated region
    $region9: #{conv_stack_forward.7} parent=5 // pred_check
      _
    $region10: #{conv_stack_forward.7} parent=5 // pred_check_branch
      %132 = sbr.rel (%p129) target = $region12
    $region11: #{conv_stack_forward.7} parent=5 // pred_region
      %s133 = ssub.s32 %s9, 1
      // Predicated region
      $region13: #{conv_stack_forward.7} parent=11 // pred_check
        %p134 = pneg %p70
      $region14: #{conv_stack_forward.7} parent=11 // pred_check_branch
        %136 = sbr.rel (%p134) target = $region16
      $region15: #{conv_stack_forward.7} parent=11 // pred_region
        _
      $region16: #{conv_stack_forward.7} parent=11 // pred_fallthru
        _
      // Predicated region
      $region17: #{conv_stack_forward.7} parent=11 // pred_check
        %p137 = pneg %p91
      $region18: #{conv_stack_forward.7} parent=11 // pred_check_branch
        %139 = sbr.rel (%p137) target = $region20
      $region19: #{conv_stack_forward.7} parent=11 // pred_region
        _
      $region20: #{conv_stack_forward.7} parent=11 // pred_fallthru
        _
    $region12: #{conv_stack_forward.7} parent=5 // pred_fallthru
      _
    %p140 = scmp.lt.s32.totalorder %s9, 16
    // Predicated region
    $region21: #{conv_stack_forward.7} parent=5 // pred_check
      %p141 = pneg %p140
    $region22: #{conv_stack_forward.7} parent=5 // pred_check_branch
      %143 = sbr.rel (%p141) target = $region24
    $region23: #{conv_stack_forward.7} parent=5 // pred_region
      // Predicated region
      $region25: #{conv_stack_forward.7} parent=23 // pred_check
        %p144 = pneg %p43
      $region26: #{conv_stack_forward.7} parent=23 // pred_check_branch
        %146 = sbr.rel (%p144) target = $region28
      $region27: #{conv_stack_forward.7} parent=23 // pred_region
        %p147 = scmp.lt.s32.totalorder %s16, 1
        %s148 = scalar_select %p147, %s16, 1
        %p149 = scmp.lt.s32.totalorder %s17, 7
        %s150 = scalar_select %p149, %s17, 7
        %s151 = smul.addr %s150, 8
        %s152 = smul.addr %s148, 64
        %s153 = sadd.s32 %s151, %s152
        %s154 = smul.addr %s153, 4
        %s155 = scalar_lea.vmem %s0, %s154
      $region28: #{conv_stack_forward.7} parent=23 // pred_fallthru
        _
    $region24: #{conv_stack_forward.7} parent=5 // pred_fallthru
      _
    %p156 = scmp.le.s32.totalorder 1, %s9
    %p157 = scmp.lt.s32.totalorder %s9, 17
    %p158 = pnand %p156, %p157
    %p159 = pneg %p158
    // Predicated region
    $region29: #{conv_stack_forward.7} parent=5 // pred_check
      _
    $region30: #{conv_stack_forward.7} parent=5 // pred_check_branch
      %161 = sbr.rel (%p158) target = $region32
    $region31: #{conv_stack_forward.7} parent=5 // pred_region
      %s162 = ssub.s32 %s9, 1
      %p163 = scmp.lt.s32.totalorder %s18, 1
      %s164 = scalar_select %p163, %s18, 1
      %p165 = scmp.lt.s32.totalorder %s19, 7
      %s166 = scalar_select %p165, %s19, 7
      %s167 = smul.addr %s166, 8
      %s168 = smul.addr %s164, 64
      %s169 = sadd.s32 %s167, %s168
      %s170 = smul.addr %s169, 4
      %s171 = scalar_lea.vmem %s0, %s170
      %p172 = pneg %p49
      %p173 = pneg %p46
      %p174 = pneg %p70
      %p175 = pneg %p67
      %p176 = pneg %p91
      %p177 = pneg %p88
      %p178 = pneg %p119
      %p179 = pneg %p116
      %p180 = scmp.lt.s32.totalorder %s18, 1
      %s181 = scalar_select %p180, %s18, 1
      %p182 = scmp.lt.s32.totalorder %s19, 7
      %s183 = scalar_select %p182, %s19, 7
      %s184 = smul.addr %s183, 20
      %s185 = smul.addr %s181, 160
      %s186 = sadd.s32 %s184, %s185
      %s187 = smul.addr %s186, 4
      %s188 = scalar_lea.vmem %s3, %s187
      %p189 = scmp.lt.s32.totalorder %s18, 1
      %s190 = scalar_select %p189, %s18, 1
      %p191 = scmp.lt.s32.totalorder %s19, 7
      %s192 = scalar_select %p191, %s19, 7
      %s193 = smul.addr %s192, 8
      %s194 = smul.addr %s190, 64
      %s195 = sadd.s32 %s193, %s194
      %s196 = smul.addr %s195, 4
      %s197 = scalar_lea.vmem %s0, %s196
      %p198 = scmp.lt.s32.totalorder %s18, 1
      %s199 = scalar_select %p198, %s18, 1
      %p200 = scmp.lt.s32.totalorder %s19, 7
      %s201 = scalar_select %p200, %s19, 7
      %s202 = smul.addr %s201, 20
      %s203 = smul.addr %s199, 160
      %s204 = sadd.s32 %s202, %s203
      %s205 = smul.addr %s204, 4
      %s206 = scalar_lea.vmem %s3, %s205
      %v208 = vld [vmem:[%s197] sm:$0xf]
      %v209 = vld [vmem:[%s197 + $0x4] sm:$0xf]
      %v210 = vld [vmem:[%s197 + $0x8] sm:$0xf]
      %v211 = vld [vmem:[%s197 + $0xc] sm:$0xf]
      %v212 = vld [vmem:[%s197 + $0x10] sm:$0xf]
      %v213 = vld [vmem:[%s197 + $0x14] sm:$0xf]
      %v214 = vld [vmem:[%s197 + $0x18] sm:$0xf]
      %v215 = vld [vmem:[%s197 + $0x1c] sm:$0xf]
      %v216 = vunpack.c.l.bf16 %v208
      %v217 = vunpack.c.l.bf16 %v209
      %v218 = vunpack.c.l.bf16 %v210
      %v219 = vunpack.c.l.bf16 %v211
      %v220 = vunpack.c.l.bf16 %v212
      %v221 = vunpack.c.l.bf16 %v213
      %v222 = vunpack.c.l.bf16 %v214
      %v223 = vunpack.c.l.bf16 %v215
      %v224 = vld [vmem:[%s1] sm:$0x1]
      %v226 = vperm.slane %v224, 0
      %v228 = vmul.f32 %v216, %v226
      %v229 = vmul.f32 %v217, %v226
      %v230 = vmul.f32 %v218, %v226
      %v231 = vmul.f32 %v219, %v226
      %v232 = vmul.f32 %v220, %v226
      %v233 = vmul.f32 %v221, %v226
      %v234 = vmul.f32 %v222, %v226
      %v235 = vmul.f32 %v223, %v226
      %v236 = vld [vmem:[%s2] sm:$0x1]
      %v238 = vperm.slane %v236, 0
      %v240 = vadd.f32 %v228, %v238
      %v241 = vadd.f32 %v229, %v238
      %v242 = vadd.f32 %v230, %v238
      %v243 = vadd.f32 %v231, %v238
      %v244 = vadd.f32 %v232, %v238
      %v245 = vadd.f32 %v233, %v238
      %v246 = vadd.f32 %v234, %v238
      %v247 = vadd.f32 %v235, %v238
      %v248 = vmax.f32 %v240, 0.0
      %v249 = vmax.f32 %v241, 0.0
      %v250 = vmax.f32 %v242, 0.0
      %v251 = vmax.f32 %v243, 0.0
      %v252 = vmax.f32 %v244, 0.0
      %v253 = vmax.f32 %v245, 0.0
      %v254 = vmax.f32 %v246, 0.0
      %v255 = vmax.f32 %v247, 0.0
      %256 = vst [vmem:[%s206] sm:$0xf] 0
      %257 = vst [vmem:[%s206 + $0x4] sm:$0x1] 0
      %258 = vst [vmem:[%s206 + $0x8] sm:$0xf] 0
      %259 = vst [vmem:[%s206 + $0xc] sm:$0x1] 0
      %260 = vst [vmem:[%s206 + $0x10] sm:$0xf] 0
      %261 = vst [vmem:[%s206 + $0x14] sm:$0x1] 0
      %262 = vst [vmem:[%s206 + $0x18] sm:$0xf] 0
      %263 = vst [vmem:[%s206 + $0x1c] sm:$0x1] 0
      %264 = vst [vmem:[%s206 + $0x20] sm:$0xf] 0
      %265 = vst [vmem:[%s206 + $0x24] sm:$0x1] 0
      %266 = vst [vmem:[%s206 + $0x28] sm:$0xf] 0
      %267 = vst [vmem:[%s206 + $0x2c] sm:$0x1] 0
      %268 = vst [vmem:[%s206 + $0x30] sm:$0xf] 0
      %269 = vst [vmem:[%s206 + $0x34] sm:$0x1] 0
      %270 = vst [vmem:[%s206 + $0x38] sm:$0xf] 0
      %271 = vst [vmem:[%s206 + $0x3c] sm:$0x1] 0
      %272 = vst [vmem:[%s206 + $0x40] sm:$0xf] 0
      %273 = vst [vmem:[%s206 + $0x44] sm:$0x1] 0
      %274 = vst [vmem:[%s206 + $0x48] sm:$0xf] 0
      %275 = vst [vmem:[%s206 + $0x4c] sm:$0x1] 0
      %v276 = vpack.c.bf16 %v248, %v248
      %v277 = vpack.c.bf16 %v249, %v249
      %v278 = vpack.c.bf16 %v250, %v250
      %v279 = vpack.c.bf16 %v251, %v251
      %v280 = vpack.c.bf16 %v252, %v252
      %v281 = vpack.c.bf16 %v253, %v253
      %v282 = vpack.c.bf16 %v254, %v254
      %v283 = vpack.c.bf16 %v255, %v255
      %v285 = vshrl.u32 %v276, 16
      %v287 = vrot.slane %v285, 7
      %v288 = vshll.u32 %v276, 16
      %v290 = vor.u32 %v287, %v288
      %v291 = vrot.slane %v287, 4
      %v293 = vshrl.u32 %v277, 16
      %v295 = vrot.slane %v293, 7
      %v296 = vshll.u32 %v277, 16
      %v298 = vor.u32 %v295, %v296
      %v299 = vrot.slane %v295, 4
      %v301 = vshrl.u32 %v278, 16
      %v303 = vrot.slane %v301, 7
      %v304 = vshll.u32 %v278, 16
      %v306 = vor.u32 %v303, %v304
      %v307 = vrot.slane %v303, 4
      %v309 = vshrl.u32 %v279, 16
      %v311 = vrot.slane %v309, 7
      %v312 = vshll.u32 %v279, 16
      %v314 = vor.u32 %v311, %v312
      %v315 = vrot.slane %v311, 4
      %v317 = vshrl.u32 %v280, 16
      %v319 = vrot.slane %v317, 7
      %v320 = vshll.u32 %v280, 16
      %v322 = vor.u32 %v319, %v320
      %v323 = vrot.slane %v319, 4
      %v325 = vshrl.u32 %v281, 16
      %v327 = vrot.slane %v325, 7
      %v328 = vshll.u32 %v281, 16
      %v330 = vor.u32 %v327, %v328
      %v331 = vrot.slane %v327, 4
      %v333 = vshrl.u32 %v282, 16
      %v335 = vrot.slane %v333, 7
      %v336 = vshll.u32 %v282, 16
      %v338 = vor.u32 %v335, %v336
      %v339 = vrot.slane %v335, 4
      %v341 = vshrl.u32 %v283, 16
      %v343 = vrot.slane %v341, 7
      %v344 = vshll.u32 %v283, 16
      %v346 = vor.u32 %v343, %v344
      %v347 = vrot.slane %v343, 4
      %s364 = scalar_lea.vmem %s206, 8
      %vm365 = vcmask 1043456
      %vm366 = vsmask.f32 7938
      %vm367 = vmand %vm365, %vm366
      %v368 = vld [vmem:[%s364] sm:$0xf]
      %v369 = vsel %vm367, %v290, %v368
      %370 = vst [vmem:[%s364] sm:$0xf] %v369
      %vm371 = vcmask 1040384
      %vm372 = vsmask.f32 256
      %vm373 = vmand %vm371, %vm372
      %v374 = vld [vmem:[%s364 + $0x4] sm:$0x1]
      %v375 = vsel %vm373, %v291, %v374
      %376 = vst [vmem:[%s364 + $0x4] sm:$0x1] %v375
      %v377 = vld [vmem:[%s364 + $0x8] sm:$0xf]
      %v378 = vsel %vm367, %v298, %v377
      %379 = vst [vmem:[%s364 + $0x8] sm:$0xf] %v378
      %v380 = vld [vmem:[%s364 + $0xc] sm:$0x1]
      %v381 = vsel %vm373, %v299, %v380
      %382 = vst [vmem:[%s364 + $0xc] sm:$0x1] %v381
      %v383 = vld [vmem:[%s364 + $0x10] sm:$0xf]
      %v384 = vsel %vm367, %v306, %v383
      %385 = vst [vmem:[%s364 + $0x10] sm:$0xf] %v384
      %v386 = vld [vmem:[%s364 + $0x14] sm:$0x1]
      %v387 = vsel %vm373, %v307, %v386
      %388 = vst [vmem:[%s364 + $0x14] sm:$0x1] %v387
      %v389 = vld [vmem:[%s364 + $0x18] sm:$0xf]
      %v390 = vsel %vm367, %v314, %v389
      %391 = vst [vmem:[%s364 + $0x18] sm:$0xf] %v390
      %v392 = vld [vmem:[%s364 + $0x1c] sm:$0x1]
      %v393 = vsel %vm373, %v315, %v392
      %394 = vst [vmem:[%s364 + $0x1c] sm:$0x1] %v393
      %v395 = vld [vmem:[%s364 + $0x20] sm:$0xf]
      %v396 = vsel %vm367, %v322, %v395
      %397 = vst [vmem:[%s364 + $0x20] sm:$0xf] %v396
      %v398 = vld [vmem:[%s364 + $0x24] sm:$0x1]
      %v399 = vsel %vm373, %v323, %v398
      %400 = vst [vmem:[%s364 + $0x24] sm:$0x1] %v399
      %v401 = vld [vmem:[%s364 + $0x28] sm:$0xf]
      %v402 = vsel %vm367, %v330, %v401
      %403 = vst [vmem:[%s364 + $0x28] sm:$0xf] %v402
      %v404 = vld [vmem:[%s364 + $0x2c] sm:$0x1]
      %v405 = vsel %vm373, %v331, %v404
      %406 = vst [vmem:[%s364 + $0x2c] sm:$0x1] %v405
      %v407 = vld [vmem:[%s364 + $0x30] sm:$0xf]
      %v408 = vsel %vm367, %v338, %v407
      %409 = vst [vmem:[%s364 + $0x30] sm:$0xf] %v408
      %v410 = vld [vmem:[%s364 + $0x34] sm:$0x1]
      %v411 = vsel %vm373, %v339, %v410
      %412 = vst [vmem:[%s364 + $0x34] sm:$0x1] %v411
      %v413 = vld [vmem:[%s364 + $0x38] sm:$0xf]
      %v414 = vsel %vm367, %v346, %v413
      %415 = vst [vmem:[%s364 + $0x38] sm:$0xf] %v414
      %v416 = vld [vmem:[%s364 + $0x3c] sm:$0x1]
      %v417 = vsel %vm373, %v347, %v416
      %418 = vst [vmem:[%s364 + $0x3c] sm:$0x1] %v417
      %p419 = scmp.lt.s32.totalorder %s18, 1
      %s420 = scalar_select %p419, %s18, 1
      %p421 = scmp.lt.s32.totalorder %s19, 7
      %s422 = scalar_select %p421, %s19, 7
      %s423 = smul.addr %s422, 20
      %s424 = smul.addr %s420, 160
      %s425 = sadd.s32 %s423, %s424
      %s426 = smul.addr %s425, 4
      %s427 = scalar_lea.vmem %s3, %s426
      // Predicated region
      $region33: #{conv_stack_forward.7} parent=31 // pred_check
        %p428 = pneg %p116
      $region34: #{conv_stack_forward.7} parent=31 // pred_check_branch
        %430 = sbr.rel (%p428) target = $region36
      $region35: #{conv_stack_forward.7} parent=31 // pred_region
        _
      $region36: #{conv_stack_forward.7} parent=31 // pred_fallthru
        _
    $region32: #{conv_stack_forward.7} parent=5 // pred_fallthru
      _
    %p431 = scmp.le.s32.totalorder 2, %s9
    // Predicated region
    $region37: #{conv_stack_forward.7} parent=5 // pred_check
      %p432 = pneg %p431
    $region38: #{conv_stack_forward.7} parent=5 // pred_check_branch
      %434 = sbr.rel (%p432) target = $region40
    $region39: #{conv_stack_forward.7} parent=5 // pred_region
      %s435 = ssub.s32 %s9, 2
      // Predicated region
      $region41: #{conv_stack_forward.7} parent=39 // pred_check
        %p436 = pneg %p122
      $region42: #{conv_stack_forward.7} parent=39 // pred_check_branch
        %438 = sbr.rel (%p436) target = $region44
      $region43: #{conv_stack_forward.7} parent=39 // pred_region
        %p439 = scmp.lt.s32.totalorder %s20, 1
        %s440 = scalar_select %p439, %s20, 1
        %p441 = scmp.lt.s32.totalorder %s21, 7
        %s442 = scalar_select %p441, %s21, 7
        %s443 = smul.addr %s442, 20
        %s444 = smul.addr %s440, 160
        %s445 = sadd.s32 %s443, %s444
        %s446 = smul.addr %s445, 4
        %s447 = scalar_lea.vmem %s3, %s446
      $region44: #{conv_stack_forward.7} parent=39 // pred_fallthru
        _
    $region40: #{conv_stack_forward.7} parent=5 // pred_fallthru
      _
  $region6: #{conv_stack_forward.7} parent=0 // loop_footer
    %s13 = sadd.s32 1, %s9
  $region7: #{conv_stack_forward.7} parent=0 // loop_footer_branch
    %8 = sbr.rel target = $region3
  $region8: #{conv_stack_forward.7} parent=0 // loop_exit
    _

// kernel: conv_stack_forward.6
$region0: #{conv_stack_forward.6}
  #allocation0 [shape = 'u32[]', space=smem, size = 0x4, offset = 0x4, fixed_abs, tag = 'smem constant byte address 0x4 - core index']
  #allocation1 [shape = 'u32[72,128]{1,0:T(1,128)}', space=vmem, size = 0x9000, scoped, tag = 'internal scratch']
  %s0 = inlined_call_operand.vmem [shape: bf16[2,8,10,10,128], index: 0, kind: input, shape index: {}, may-alias: {0,1,2}]
  %s1 = inlined_call_operand.vmem [shape: bf16[2,8,10,10,128], index: 1, kind: input, shape index: {}, may-alias: {0,1,2}]
  %s2 = inlined_call_operand.vmem [shape: bf16[2,8,10,10,128], index: 2, kind: input, shape index: {}, may-alias: {0,1,2}]
  %s3 = inlined_call_operand.vmem [shape: bf16[3,1152,128], index: 3, kind: input, shape index: {}]
  %s4 = inlined_call_operand.vmem [shape: bf16[2,8,8,8,128], index: 4, kind: output, shape index: {0}]
  %s5 = inlined_call_operand.vmem [shape: f32[2,8,2,128], index: 5, kind: output, shape index: {1}]
  %6 = xla_tuple %s4, %s5
  %s7 = sld [smem:[#allocation0]]
  $region57: #{conv_stack_forward.6} parent=0
    _
  %s9 = ssub.s32 1, %s7
  %s10 = scalar_select 0, %s9, %s7
  loop: start=0, step=1, limit=18
  $region2: #{conv_stack_forward.6} parent=0 // loop_pre_header
    _
  $region3: #{conv_stack_forward.6} parent=0 // loop_header
    %s12 = sphi 0, %s16
    %p13 = scmp.ge.s32.totalorder %s12, 18
    %s19 = sphi 0, %s31
    %s20 = sphi 0, %s27
    %s21 = sphi 0, %s19
    %s22 = sphi 0, %s20
    %s23 = sphi 0, %s21
    %s24 = sphi 0, %s22
    %s42 = sphi 0, %s44
    %s45 = sphi 0, %s42
    %s46 = sphi 0, %s45
    %s62 = sphi 0, %s46
    %s70 = sphi 0, %s72
    %s73 = sphi 0, %s70
    %s74 = sphi 0, %s73
    %s90 = sphi 0, %s74
    %s104 = sphi 0, %s106
    %s107 = sphi 0, %s104
    %s108 = sphi 0, %s107
    %s124 = sphi 0, %s108
    %s128 = sphi 0, %s128
    %s130 = sphi 0, %s128
    %s131 = sphi 0, %s130
    %s145 = sphi 0, %s131
    %s153 = sphi 0, %s155
    %s156 = sphi 0, %s153
    %s157 = sphi 0, %s156
    %s173 = sphi 0, %s157
    %s181 = sphi 0, %s183
    %s184 = sphi 0, %s181
    %s185 = sphi 0, %s184
    %s201 = sphi 0, %s185
  $region4: #{conv_stack_forward.6} parent=0 // loop_header_branch
    %15 = sbr.rel (%p13) target = $region8
  $region5: #{conv_stack_forward.6} parent=0 // loop_body
    %s17 = ssub.s32 %s12, 1
    %s18 = ssub.s32 %s12, 2
    %s25 = sadd.s32 1, %s20
    %p26 = scmp.ge.s32.totalorder %s25, 8
    %s27 = scalar_select %p26, 0, %s25
    %s28 = sadd.s32 1, %s19
    %s29 = scalar_select %p26, %s28, %s19
    %p30 = scmp.ge.s32.totalorder %s29, 2
    %s31 = scalar_select %p30, 0, %s29
    %s32 = ssub.s32 %s20, 1
    %p33 = scmp.gt.s32.totalorder %s32, 0
    %s34 = scalar_select %p33, %s32, 0
    %s35 = ssub.s32 %s27, 1
    %p36 = scmp.gt.s32.totalorder %s35, 0
    %s37 = scalar_select %p36, %s35, 0
    %s38 = ssub.s32 %s19, %s31
    %s39 = ssub.s32 %s34, %s37
    %s40 = sor.u32 %s38, %s39
    %p41 = scmp.eq.s32.totalorder %s40, 0
    %s43 = sadd.s32 %s42, 1
    %s44 = scalar_select %p41, %s42, %s43
    %p47 = pneg %p41
    %p48 = scmp.eq.s32.totalorder %s12, 15
    %p49 = por %p47, %p48
    %p50 = scmp.ne.s32.totalorder %s42, %s45
    %p51 = scmp.eq.s32.totalorder %s12, 0
    %p52 = por %p50, %p51
    %p53 = scmp.ne.s32.totalorder %s42, %s45
    %p54 = scmp.eq.s32.totalorder %s17, 15
    %p55 = por %p53, %p54
    %p56 = scmp.ne.s32.totalorder %s45, %s46
    %p57 = scmp.eq.s32.totalorder %s17, 0
    %p58 = por %p56, %p57
    %p59 = scmp.ne.s32.totalorder %s45, %s46
    %p60 = scmp.eq.s32.totalorder %s18, 15
    %p61 = por %p59, %p60
    %p63 = scmp.ne.s32.totalorder %s46, %s62
    %p64 = scmp.eq.s32.totalorder %s18, 0
    %p65 = por %p63, %p64
    %s66 = ssub.s32 %s19, %s31
    %s67 = ssub.s32 %s20, %s27
    %s68 = sor.u32 %s66, %s67
    %p69 = scmp.eq.s32.totalorder %s68, 0
    %s71 = sadd.s32 %s70, 1
    %s72 = scalar_select %p69, %s70, %s71
    %p75 = pneg %p69
    %p76 = scmp.eq.s32.totalorder %s12, 15
    %p77 = por %p75, %p76
    %p78 = scmp.ne.s32.totalorder %s70, %s73
    %p79 = scmp.eq.s32.totalorder %s12, 0
    %p80 = por %p78, %p79
    %p81 = scmp.ne.s32.totalorder %s70, %s73
    %p82 = scmp.eq.s32.totalorder %s17, 15
    %p83 = por %p81, %p82
    %p84 = scmp.ne.s32.totalorder %s73, %s74
    %p85 = scmp.eq.s32.totalorder %s17, 0
    %p86 = por %p84, %p85
    %p87 = scmp.ne.s32.totalorder %s73, %s74
    %p88 = scmp.eq.s32.totalorder %s18, 15
    %p89 = por %p87, %p88
    %p91 = scmp.ne.s32.totalorder %s74, %s90
    %p92 = scmp.eq.s32.totalorder %s18, 0
    %p93 = por %p91, %p92
    %s94 = sadd.s32 %s20, 1
    %p95 = scmp.lt.s32.totalorder %s94, 7
    %s96 = scalar_select %p95, %s94, 7
    %s97 = sadd.s32 %s27, 1
    %p98 = scmp.lt.s32.totalorder %s97, 7
    %s99 = scalar_select %p98, %s97, 7
    %s100 = ssub.s32 %s19, %s31
    %s101 = ssub.s32 %s96, %s99
    %s102 = sor.u32 %s100, %s101
    %p103 = scmp.eq.s32.totalorder %s102, 0
    %s105 = sadd.s32 %s104, 1
    %s106 = scalar_select %p103, %s104, %s105
    %p109 = pneg %p103
    %p110 = scmp.eq.s32.totalorder %s12, 15
    %p111 = por %p109, %p110
    %p112 = scmp.ne.s32.totalorder %s104, %s107
    %p113 = scmp.eq.s32.totalorder %s12, 0
    %p114 = por %p112, %p113
    %p115 = scmp.ne.s32.totalorder %s104, %s107
    %p116 = scmp.eq.s32.totalorder %s17, 15
    %p117 = por %p115, %p116
    %p118 = scmp.ne.s32.totalorder %s107, %s108
    %p119 = scmp.eq.s32.totalorder %s17, 0
    %p120 = por %p118, %p119
    %p121 = scmp.ne.s32.totalorder %s107, %s108
    %p122 = scmp.eq.s32.totalorder %s18, 15
    %p123 = por %p121, %p122
    %p125 = scmp.ne.s32.totalorder %s108, %s124
    %p126 = scmp.eq.s32.totalorder %s18, 0
    %p127 = por %p125, %p126
    %s129 = sadd.s32 %s128, 1
    %p132 = scmp.eq.s32.totalorder %s12, 15
    %p133 = scmp.ne.s32.totalorder %s128, %s130
    %p134 = scmp.eq.s32.totalorder %s12, 0
    %p135 = por %p133, %p134
    %p136 = scmp.ne.s32.totalorder %s128, %s130
    %p137 = scmp.eq.s32.totalorder %s17, 15
    %p138 = por %p136, %p137
    %p139 = scmp.ne.s32.totalorder %s130, %s131
    %p140 = scmp.eq.s32.totalorder %s17, 0
    %p141 = por %p139, %p140
    %p142 = scmp.ne.s32.totalorder %s130, %s131
    %p143 = scmp.eq.s32.totalorder %s18, 15
    %p144 = por %p142, %p143
    %p146 = scmp.ne.s32.totalorder %s131, %s145
    %p147 = scmp.eq.s32.totalorder %s18, 0
    %p148 = por %p146, %p147
    %s149 = ssub.s32 %s19, %s31
    %s150 = ssub.s32 %s20, %s27
    %s151 = sor.u32 %s149, %s150
    %p152 = scmp.eq.s32.totalorder %s151, 0
    %s154 = sadd.s32 %s153, 1
    %s155 = scalar_select %p152, %s153, %s154
    %p158 = pneg %p152
    %p159 = scmp.eq.s32.totalorder %s12, 15
    %p160 = por %p158, %p159
    %p161 = scmp.ne.s32.totalorder %s153, %s156
    %p162 = scmp.eq.s32.totalorder %s12, 0
    %p163 = por %p161, %p162
    %p164 = scmp.ne.s32.totalorder %s153, %s156
    %p165 = scmp.eq.s32.totalorder %s17, 15
    %p166 = por %p164, %p165
    %p167 = scmp.ne.s32.totalorder %s156, %s157
    %p168 = scmp.eq.s32.totalorder %s17, 0
    %p169 = por %p167, %p168
    %p170 = scmp.ne.s32.totalorder %s156, %s157
    %p171 = scmp.eq.s32.totalorder %s18, 15
    %p172 = por %p170, %p171
    %p174 = scmp.ne.s32.totalorder %s157, %s173
    %p175 = scmp.eq.s32.totalorder %s18, 0
    %p176 = por %p174, %p175
    %s177 = ssub.s32 %s19, %s31
    %s178 = ssub.s32 %s20, %s27
    %s179 = sor.u32 %s177, %s178
    %p180 = scmp.eq.s32.totalorder %s179, 0
    %s182 = sadd.s32 %s181, 1
    %s183 = scalar_select %p180, %s181, %s182
    %p186 = pneg %p180
    %p187 = scmp.eq.s32.totalorder %s12, 15
    %p188 = por %p186, %p187
    %p189 = scmp.ne.s32.totalorder %s181, %s184
    %p190 = scmp.eq.s32.totalorder %s12, 0
    %p191 = por %p189, %p190
    %p192 = scmp.ne.s32.totalorder %s181, %s184
    %p193 = scmp.eq.s32.totalorder %s17, 15
    %p194 = por %p192, %p193
    %p195 = scmp.ne.s32.totalorder %s184, %s185
    %p196 = scmp.eq.s32.totalorder %s17, 0
    %p197 = por %p195, %p196
    %p198 = scmp.ne.s32.totalorder %s184, %s185
    %p199 = scmp.eq.s32.totalorder %s18, 15
    %p200 = por %p198, %p199
    %p202 = scmp.ne.s32.totalorder %s185, %s201
    %p203 = scmp.eq.s32.totalorder %s18, 0
    %p204 = por %p202, %p203
    %p205 = scmp.le.s32.totalorder 1, %s12
    %p206 = scmp.lt.s32.totalorder %s12, 17
    %p207 = pnand %p205, %p206
    %p208 = pneg %p207
    // Predicated region
    $region9: #{conv_stack_forward.6} parent=5 // pred_check
      _
    $region10: #{conv_stack_forward.6} parent=5 // pred_check_branch
      %210 = sbr.rel (%p207) target = $region12
    $region11: #{conv_stack_forward.6} parent=5 // pred_region
      %s211 = ssub.s32 %s12, 1
      // Predicated region
      $region13: #{conv_stack_forward.6} parent=11 // pred_check
        %p212 = pneg %p141
      $region14: #{conv_stack_forward.6} parent=11 // pred_check_branch
        %214 = sbr.rel (%p212) target = $region16
      $region15: #{conv_stack_forward.6} parent=11 // pred_region
        _
      $region16: #{conv_stack_forward.6} parent=11 // pred_fallthru
        _
    $region12: #{conv_stack_forward.6} parent=5 // pred_fallthru
      _
    %p215 = scmp.lt.s32.totalorder %s12, 16
    // Predicated region
    $region17: #{conv_stack_forward.6} parent=5 // pred_check
      %p216 = pneg %p215
    $region18: #{conv_stack_forward.6} parent=5 // pred_check_branch
      %218 = sbr.rel (%p216) target = $region20
    $region19: #{conv_stack_forward.6} parent=5 // pred_region
      // Predicated region
      $region21: #{conv_stack_forward.6} parent=19 // pred_check
        %p219 = pneg %p52
      $region22: #{conv_stack_forward.6} parent=19 // pred_check_branch
        %221 = sbr.rel (%p219) target = $region24
      $region23: #{conv_stack_forward.6} parent=19 // pred_region
        %s222 = ssub.s32 %s20, 1
        %p223 = scmp.gt.s32.totalorder %s222, 0
        %s224 = scalar_select %p223, %s222, 0
        %p225 = scmp.lt.s32.totalorder %s19, 1
        %s226 = scalar_select %p225, %s19, 1
        %p227 = scmp.lt.s32.totalorder %s224, 7
        %s228 = scalar_select %p227, %s224, 7
        %s229 = smul.addr %s228, 20
        %s230 = smul.addr %s226, 160
        %s231 = sadd.s32 %s229, %s230
        %s232 = smul.addr %s231, 4
        %s233 = scalar_lea.vmem %s0, %s232
        %s234 = ssub.s32 %s20, 1
        %p235 = scmp.gt.s32.totalorder %s234, 0
        %s236 = scalar_select %p235, %s234, 0
      $region24: #{conv_stack_forward.6} parent=19 // pred_fallthru
        _
      // Predicated region
      $region25: #{conv_stack_forward.6} parent=19 // pred_check
        %p237 = pneg %p80
      $region26: #{conv_stack_forward.6} parent=19 // pred_check_branch
        %239 = sbr.rel (%p237) target = $region28
      $region27: #{conv_stack_forward.6} parent=19 // pred_region
        %p240 = scmp.lt.s32.totalorder %s19, 1
        %s241 = scalar_select %p240, %s19, 1
        %p242 = scmp.lt.s32.totalorder %s20, 7
        %s243 = scalar_select %p242, %s20, 7
        %s244 = smul.addr %s243, 20
        %s245 = smul.addr %s241, 160
        %s246 = sadd.s32 %s244, %s245
        %s247 = smul.addr %s246, 4
        %s248 = scalar_lea.vmem %s1, %s247
      $region28: #{conv_stack_forward.6} parent=19 // pred_fallthru
        _
      // Predicated region
      $region29: #{conv_stack_forward.6} parent=19 // pred_check
        %p249 = pneg %p114
      $region30: #{conv_stack_forward.6} parent=19 // pred_check_branch
        %251 = sbr.rel (%p249) target = $region32
      $region31: #{conv_stack_forward.6} parent=19 // pred_region
        %s252 = sadd.s32 %s20, 1
        %p253 = scmp.lt.s32.totalorder %s252, 7
        %s254 = scalar_select %p253, %s252, 7
        %p255 = scmp.lt.s32.totalorder %s19, 1
        %s256 = scalar_select %p255, %s19, 1
        %p257 = scmp.lt.s32.totalorder %s254, 7
        %s258 = scalar_select %p257, %s254, 7
        %s259 = smul.addr %s258, 20
        %s260 = smul.addr %s256, 160
        %s261 = sadd.s32 %s259, %s260
        %s262 = smul.addr %s261, 4
        %s263 = scalar_lea.vmem %s2, %s262
        %s264 = sadd.s32 %s20, 1
        %p265 = scmp.lt.s32.totalorder %s264, 7
        %s266 = scalar_select %p265, %s264, 7
      $region32: #{conv_stack_forward.6} parent=19 // pred_fallthru
        _
    $region20: #{conv_stack_forward.6} parent=5 // pred_fallthru
      _
    %p267 = scmp.le.s32.totalorder 1, %s12
    %p268 = scmp.lt.s32.totalorder %s12, 17
    %p269 = pnand %p267, %p268
    %p270 = pneg %p269
    // Predicated region
    $region33: #{conv_stack_forward.6} parent=5 // pred_check
      _
    $region34: #{conv_stack_forward.6} parent=5 // pred_check_branch
      %272 = sbr.rel (%p269) target = $region36
    $region35: #{conv_stack_forward.6} parent=5 // pred_region
      %s273 = ssub.s32 %s12, 1
      %s274 = ssub.s32 %s22, 1
      %p275 = scmp.gt.s32.totalorder %s274, 0
      %s276 = scalar_select %p275, %s274, 0
      %p277 = scmp.lt.s32.totalorder %s21, 1
      %s278 = scalar_select %p277, %s21, 1
      %p279 = scmp.lt.s32.totalorder %s276, 7
      %s280 = scalar_select %p279, %s276, 7
      %s281 = smul.addr %s280, 20
      %s282 = smul.addr %s278, 160
      %s283 = sadd.s32 %s281, %s282
      %s284 = smul.addr %s283, 4
      %s285 = scalar_lea.vmem %s0, %s284
      %p286 = pneg %p58
      %p287 = pneg %p55
      %p288 = scmp.lt.s32.totalorder %s21, 1
      %s289 = scalar_select %p288, %s21, 1
      %p290 = scmp.lt.s32.totalorder %s22, 7
      %s291 = scalar_select %p290, %s22, 7
      %s292 = smul.addr %s291, 20
      %s293 = smul.addr %s289, 160
      %s294 = sadd.s32 %s292, %s293
      %s295 = smul.addr %s294, 4
      %s296 = scalar_lea.vmem %s1, %s295
      %p297 = pneg %p86
      %p298 = pneg %p83
      %s299 = sadd.s32 %s22, 1
      %p300 = scmp.lt.s32.totalorder %s299, 7
      %s301 = scalar_select %p300, %s299, 7
      %p302 = scmp.lt.s32.totalorder %s21, 1
      %s303 = scalar_select %p302, %s21, 1
      %p304 = scmp.lt.s32.totalorder %s301, 7
      %s305 = scalar_select %p304, %s301, 7
      %s306 = smul.addr %s305, 20
      %s307 = smul.addr %s303, 160
      %s308 = sadd.s32 %s306, %s307
      %s309 = smul.addr %s308, 4
      %s310 = scalar_lea.vmem %s2, %s309
      %p311 = pneg %p120
      %p312 = pneg %p117
      %p313 = pneg %p141
      %p314 = pneg %p138
      %p315 = pneg %p169
      %p316 = pneg %p166
      %p317 = scmp.lt.s32.totalorder %s21, 1
      %s318 = scalar_select %p317, %s21, 1
      %p319 = scmp.lt.s32.totalorder %s22, 7
      %s320 = scalar_select %p319, %s22, 7
      %s321 = smul.addr %s320, 8
      %s322 = smul.addr %s318, 64
      %s323 = sadd.s32 %s321, %s322
      %s324 = smul.addr %s323, 4
      %s325 = scalar_lea.vmem %s4, %s324
      %p326 = pneg %p197
      %p327 = pneg %p194
      %p328 = scmp.lt.s32.totalorder %s21, 1
      %s329 = scalar_select %p328, %s21, 1
      %p330 = scmp.lt.s32.totalorder %s22, 7
      %s331 = scalar_select %p330, %s22, 7
      %s332 = smul.addr %s329, 8
      %s333 = sadd.s32 %s331, %s332
      %s334 = smul.addr %s333, 2
      %s335 = scalar_lea.vmem %s5, %s334
      %s336 = ssub.s32 %s22, 1
      %p337 = scmp.gt.s32.totalorder %s336, 0
      %s338 = scalar_select %p337, %s336, 0
      %p339 = scmp.lt.s32.totalorder %s21, 1
      %s340 = scalar_select %p339, %s21, 1
      %p341 = scmp.lt.s32.totalorder %s338, 7
      %s342 = scalar_select %p341, %s338, 7
      %s343 = smul.addr %s342, 20
      %s344 = smul.addr %s340, 160
      %s345 = sadd.s32 %s343, %s344
      %s346 = smul.addr %s345, 4
      %s347 = scalar_lea.vmem %s0, %s346
      %s348 = ssub.s32 %s22, 1
      %p349 = scmp.gt.s32.totalorder %s348, 0
      %s350 = scalar_select %p349, %s348, 0
      %p351 = scmp.lt.s32.totalorder %s21, 1
      %s352 = scalar_select %p351, %s21, 1
      %p353 = scmp.lt.s32.totalorder %s22, 7
      %s354 = scalar_select %p353, %s22, 7
      %s355 = smul.addr %s354, 20
      %s356 = smul.addr %s352, 160
      %s357 = sadd.s32 %s355, %s356
      %s358 = smul.addr %s357, 4
      %s359 = scalar_lea.vmem %s1, %s358
      %s360 = sadd.s32 %s22, 1
      %p361 = scmp.lt.s32.totalorder %s360, 7
      %s362 = scalar_select %p361, %s360, 7
      %p363 = scmp.lt.s32.totalorder %s21, 1
      %s364 = scalar_select %p363, %s21, 1
      %p365 = scmp.lt.s32.totalorder %s362, 7
      %s366 = scalar_select %p365, %s362, 7
      %s367 = smul.addr %s366, 20
      %s368 = smul.addr %s364, 160
      %s369 = sadd.s32 %s367, %s368
      %s370 = smul.addr %s369, 4
      %s371 = scalar_lea.vmem %s2, %s370
      %s372 = sadd.s32 %s22, 1
      %p373 = scmp.lt.s32.totalorder %s372, 7
      %s374 = scalar_select %p373, %s372, 7
      %p375 = scmp.lt.s32.totalorder %s21, 1
      %s376 = scalar_select %p375, %s21, 1
      %p377 = scmp.lt.s32.totalorder %s22, 7
      %s378 = scalar_select %p377, %s22, 7
      %s379 = smul.addr %s378, 8
      %s380 = smul.addr %s376, 64
      %s381 = sadd.s32 %s379, %s380
      %s382 = smul.addr %s381, 4
      %s383 = scalar_lea.vmem %s4, %s382
      %p384 = scmp.lt.s32.totalorder %s21, 1
      %s385 = scalar_select %p384, %s21, 1
      %p386 = scmp.lt.s32.totalorder %s22, 7
      %s387 = scalar_select %p386, %s22, 7
      %s388 = smul.addr %s385, 8
      %s389 = sadd.s32 %s387, %s388
      %s390 = smul.addr %s389, 2
      %s391 = scalar_lea.vmem %s5, %s390
      %p392 = scmp.gt.s32.totalorder %s22, 0
      %s393 = scalar_select %p392, 1, 0
      %s394 = scvt.s32.f32 %s393
      %p395 = scmp.lt.s32.totalorder %s22, 7
      %s396 = scalar_select %p395, 1, 0
      %s397 = scvt.s32.f32 %s396
      %v398 = vld [vmem:[%s347] sm:$0xf]
      %v399 = vld [vmem:[%s347 + $0x4] sm:$0x1]
      %v400 = vld [vmem:[%s347 + $0x8] sm:$0xf]
      %v401 = vld [vmem:[%s347 + $0xc] sm:$0x1]
      %v402 = vld [vmem:[%s347 + $0x10] sm:$0xf]
      %v403 = vld [vmem:[%s347 + $0x14] sm:$0x1]
      %v404 = vld [vmem:[%s347 + $0x18] sm:$0xf]
      %v405 = vld [vmem:[%s347 + $0x1c] sm:$0x1]
      %v406 = vld [vmem:[%s347 + $0x20] sm:$0xf]
      %v407 = vld [vmem:[%s347 + $0x24] sm:$0x1]
      %v408 = vld [vmem:[%s347 + $0x28] sm:$0xf]
      %v409 = vld [vmem:[%s347 + $0x2c] sm:$0x1]
      %v410 = vld [vmem:[%s347 + $0x30] sm:$0xf]
      %v411 = vld [vmem:[%s347 + $0x34] sm:$0x1]
      %v412 = vld [vmem:[%s347 + $0x38] sm:$0xf]
      %v413 = vld [vmem:[%s347 + $0x3c] sm:$0x1]
      %v414 = vld [vmem:[%s347 + $0x40] sm:$0xf]
      %v415 = vld [vmem:[%s347 + $0x44] sm:$0x1]
      %v416 = vld [vmem:[%s347 + $0x48] sm:$0xf]
      %v417 = vld [vmem:[%s347 + $0x4c] sm:$0x1]
      %v434 = vunpack.c.l.b16 %v398
      %v435 = vunpack.c.l.b16 %v399
      %v436 = vunpack.c.l.b16 %v400
      %v437 = vunpack.c.l.b16 %v401
      %v438 = vunpack.c.l.b16 %v402
      %v439 = vunpack.c.l.b16 %v403
      %v440 = vunpack.c.l.b16 %v404
      %v441 = vunpack.c.l.b16 %v405
      %v442 = vunpack.c.l.b16 %v406
      %v443 = vunpack.c.l.b16 %v407
      %v444 = vunpack.c.l.b16 %v408
      %v445 = vunpack.c.l.b16 %v409
      %v446 = vunpack.c.l.b16 %v410
      %v447 = vunpack.c.l.b16 %v411
      %v448 = vunpack.c.l.b16 %v412
      %v449 = vunpack.c.l.b16 %v413
      %v450 = vpack.c.b16 %v435, %v434
      %v451 = vpack.c.b16 %v437, %v436
      %v452 = vpack.c.b16 %v439, %v438
      %v453 = vpack.c.b16 %v441, %v440
      %v454 = vpack.c.b16 %v443, %v442
      %v455 = vpack.c.b16 %v445, %v444
      %v456 = vpack.c.b16 %v447, %v446
      %v457 = vpack.c.b16 %v449, %v448
      %v459 = vshrl.u32 %v450, 16
      %v461 = vshll.u32 %v450, 16
      %v463 = vrot.slane %v461, 1
      %v464 = vor.u32 %v459, %v463
      %v466 = vshrl.u32 %v451, 16
      %v468 = vshll.u32 %v451, 16
      %v470 = vrot.slane %v468, 1
      %v471 = vor.u32 %v466, %v470
      %v473 = vshrl.u32 %v452, 16
      %v475 = vshll.u32 %v452, 16
      %v477 = vrot.slane %v475, 1
      %v478 = vor.u32 %v473, %v477
      %v480 = vshrl.u32 %v453, 16
      %v482 = vshll.u32 %v453, 16
      %v484 = vrot.slane %v482, 1
      %v485 = vor.u32 %v480, %v484
      %v487 = vshrl.u32 %v454, 16
      %v489 = vshll.u32 %v454, 16
      %v491 = vrot.slane %v489, 1
      %v492 = vor.u32 %v487, %v491
      %v494 = vshrl.u32 %v455, 16
      %v496 = vshll.u32 %v455, 16
      %v498 = vrot.slane %v496, 1
      %v499 = vor.u32 %v494, %v498
      %v501 = vshrl.u32 %v456, 16
      %v503 = vshll.u32 %v456, 16
      %v505 = vrot.slane %v503, 1
      %v506 = vor.u32 %v501, %v505
      %v508 = vshrl.u32 %v457, 16
      %v510 = vshll.u32 %v457, 16
      %v512 = vrot.slane %v510, 1
      %v513 = vor.u32 %v508, %v512
      %v514 = vrot.slane %v450, 1
      %v515 = vrot.slane %v451, 1
      %v516 = vrot.slane %v452, 1
      %v517 = vrot.slane %v453, 1
      %v518 = vrot.slane %v454, 1
      %v519 = vrot.slane %v455, 1
      %v520 = vrot.slane %v456, 1
      %v521 = vrot.slane %v457, 1
      %v524 = vunpack.c.l.b16 %v414
      %v525 = vunpack.c.l.b16 %v415
      %v526 = vpack.c.b16 %v525, %v524
      %v528 = vshrl.u32 %v526, 16
      %v530 = vshll.u32 %v526, 16
      %v532 = vrot.slane %v530, 1
      %v533 = vor.u32 %v528, %v532
      %v534 = vrot.slane %v526, 1
      %v537 = vunpack.c.l.b16 %v416
      %v538 = vunpack.c.l.b16 %v417
      %v539 = vpack.c.b16 %v538, %v537
      %v541 = vshrl.u32 %v539, 16
      %v543 = vshll.u32 %v539, 16
      %v545 = vrot.slane %v543, 1
      %v546 = vor.u32 %v541, %v545
      %v547 = vrot.slane %v539, 1
      %v548 = vunpack.c.l.b16 %v464
      %v549 = vunpack.c.l.b16 %v514
      %v550 = vunpack.c.l.b16 %v471
      %v551 = vunpack.c.l.b16 %v515
      %v552 = vunpack.c.l.b16 %v478
      %v553 = vunpack.c.l.b16 %v516
      %v554 = vunpack.c.l.b16 %v485
      %v555 = vunpack.c.l.b16 %v517
      %v556 = vunpack.c.l.b16 %v492
      %v557 = vunpack.c.l.b16 %v518
      %v558 = vunpack.c.l.b16 %v499
      %v559 = vunpack.c.l.b16 %v519
      %v560 = vunpack.c.l.b16 %v506
      %v561 = vunpack.c.l.b16 %v520
      %v562 = vunpack.c.l.b16 %v513
      %v563 = vunpack.c.l.b16 %v521
      %v564 = vunpack.c.l.b16 %v533
      %v565 = vunpack.c.l.b16 %v534
      %v566 = vunpack.c.l.b16 %v546
      %v567 = vunpack.c.l.b16 %v547
      %v568 = vld [vmem:[%s3] sm:$0xf]
      %v569 = vld [vmem:[%s3 + $0x4] sm:$0xf]
      %v570 = vld [vmem:[%s3 + $0x8] sm:$0xf]
      %v571 = vld [vmem:[%s3 + $0xc] sm:$0xf]
      %v572 = vld [vmem:[%s3 + $0x10] sm:$0xf]
      %v573 = vld [vmem:[%s3 + $0x14] sm:$0xf]
      %v574 = vld [vmem:[%s3 + $0x18] sm:$0xf]
      %v575 = vld [vmem:[%s3 + $0x1c] sm:$0xf]
      %v576 = vld [vmem:[%s3 + $0x20] sm:$0xf]
      %v577 = vld [vmem:[%s3 + $0x24] sm:$0xf]
      %v578 = vld [vmem:[%s3 + $0x28] sm:$0xf]
      %v579 = vld [vmem:[%s3 + $0x2c] sm:$0xf]
      %v580 = vld [vmem:[%s3 + $0x30] sm:$0xf]
      %v581 = vld [vmem:[%s3 + $0x34] sm:$0xf]
      %v582 = vld [vmem:[%s3 + $0x38] sm:$0xf]
      %v583 = vld [vmem:[%s3 + $0x3c] sm:$0xf]
      %v584 = vld [vmem:[%s3 + $0x40] sm:$0xf]
      %v585 = vld [vmem:[%s3 + $0x44] sm:$0xf]
      %v586 = vld [vmem:[%s3 + $0x48] sm:$0xf]
      %v587 = vld [vmem:[%s3 + $0x4c] sm:$0xf]
      %v588 = vld [vmem:[%s3 + $0x50] sm:$0xf]
      %v589 = vld [vmem:[%s3 + $0x54] sm:$0xf]
      %v590 = vld [vmem:[%s3 + $0x58] sm:$0xf]
      %v591 = vld [vmem:[%s3 + $0x5c] sm:$0xf]
      %v592 = vld [vmem:[%s3 + $0x60] sm:$0xf]
      %v593 = vld [vmem:[%s3 + $0x64] sm:$0xf]
      %v594 = vld [vmem:[%s3 + $0x68] sm:$0xf]
      %v595 = vld [vmem:[%s3 + $0x6c] sm:$0xf]
      %v596 = vld [vmem:[%s3 + $0x70] sm:$0xf]
      %v597 = vld [vmem:[%s3 + $0x74] sm:$0xf]
      %v598 = vld [vmem:[%s3 + $0x78] sm:$0xf]
      %v599 = vld [vmem:[%s3 + $0x7c] sm:$0xf]
      %v600 = vld [vmem:[%s3 + $0x80] sm:$0xf]
      %v601 = vld [vmem:[%s3 + $0x84] sm:$0xf]
      %v602 = vld [vmem:[%s3 + $0x88] sm:$0xf]
      %v603 = vld [vmem:[%s3 + $0x8c] sm:$0xf]
      %v604 = vld [vmem:[%s3 + $0x90] sm:$0xf]
      %v605 = vld [vmem:[%s3 + $0x94] sm:$0xf]
      %v606 = vld [vmem:[%s3 + $0x98] sm:$0xf]
      %v607 = vld [vmem:[%s3 + $0x9c] sm:$0xf]
      %v608 = vld [vmem:[%s3 + $0xa0] sm:$0xf]
      %v609 = vld [vmem:[%s3 + $0xa4] sm:$0xf]
      %v610 = vld [vmem:[%s3 + $0xa8] sm:$0xf]
      %v611 = vld [vmem:[%s3 + $0xac] sm:$0xf]
      %v612 = vld [vmem:[%s3 + $0xb0] sm:$0xf]
      %v613 = vld [vmem:[%s3 + $0xb4] sm:$0xf]
      %v614 = vld [vmem:[%s3 + $0xb8] sm:$0xf]
      %v615 = vld [vmem:[%s3 + $0xbc] sm:$0xf]
      %v616 = vld [vmem:[%s3 + $0xc0] sm:$0xf]
      %v617 = vld [vmem:[%s3 + $0xc4] sm:$0xf]
      %v618 = vld [vmem:[%s3 + $0xc8] sm:$0xf]
      %v619 = vld [vmem:[%s3 + $0xcc] sm:$0xf]
      %v620 = vld [vmem:[%s3 + $0xd0] sm:$0xf]
      %v621 = vld [vmem:[%s3 + $0xd4] sm:$0xf]
      %v622 = vld [vmem:[%s3 + $0xd8] sm:$0xf]
      %v623 = vld [vmem:[%s3 + $0xdc] sm:$0xf]
      %v624 = vld [vmem:[%s3 + $0xe0] sm:$0xf]
      %v625 = vld [vmem:[%s3 + $0xe4] sm:$0xf]
      %v626 = vld [vmem:[%s3 + $0xe8] sm:$0xf]
      %v627 = vld [vmem:[%s3 + $0xec] sm:$0xf]
      %v628 = vld [vmem:[%s3 + $0xf0] sm:$0xf]
      %v629 = vld [vmem:[%s3 + $0xf4] sm:$0xf]
      %v630 = vld [vmem:[%s3 + $0xf8] sm:$0xf]
      %v631 = vld [vmem:[%s3 + $0xfc] sm:$0xf]
      %v632 = vld [vmem:[%s3 + $0x100] sm:$0xf]
      %v633 = vld [vmem:[%s3 + $0x104] sm:$0xf]
      %v634 = vld [vmem:[%s3 + $0x108] sm:$0xf]
      %v635 = vld [vmem:[%s3 + $0x10c] sm:$0xf]
      %v636 = vld [vmem:[%s3 + $0x110] sm:$0xf]
      %v637 = vld [vmem:[%s3 + $0x114] sm:$0xf]
      %v638 = vld [vmem:[%s3 + $0x118] sm:$0xf]
      %v639 = vld [vmem:[%s3 + $0x11c] sm:$0xf]
      %v640 = vld [vmem:[%s3 + $0x120] sm:$0xf]
      %v641 = vld [vmem:[%s3 + $0x124] sm:$0xf]
      %v642 = vld [vmem:[%s3 + $0x128] sm:$0xf]
      %v643 = vld [vmem:[%s3 + $0x12c] sm:$0xf]
      %v644 = vld [vmem:[%s3 + $0x130] sm:$0xf]
      %v645 = vld [vmem:[%s3 + $0x134] sm:$0xf]
      %v646 = vld [vmem:[%s3 + $0x138] sm:$0xf]
      %v647 = vld [vmem:[%s3 + $0x13c] sm:$0xf]
      %v648 = vld [vmem:[%s3 + $0x140] sm:$0xf]
      %v649 = vld [vmem:[%s3 + $0x144] sm:$0xf]
      %v650 = vld [vmem:[%s3 + $0x148] sm:$0xf]
      %v651 = vld [vmem:[%s3 + $0x14c] sm:$0xf]
      %v652 = vld [vmem:[%s3 + $0x150] sm:$0xf]
      %v653 = vld [vmem:[%s3 + $0x154] sm:$0xf]
      %v654 = vld [vmem:[%s3 + $0x158] sm:$0xf]
      %v655 = vld [vmem:[%s3 + $0x15c] sm:$0xf]
      %v656 = vld [vmem:[%s3 + $0x160] sm:$0xf]
      %v657 = vld [vmem:[%s3 + $0x164] sm:$0xf]
      %v658 = vld [vmem:[%s3 + $0x168] sm:$0xf]
      %v659 = vld [vmem:[%s3 + $0x16c] sm:$0xf]
      %v660 = vld [vmem:[%s3 + $0x170] sm:$0xf]
      %v661 = vld [vmem:[%s3 + $0x174] sm:$0xf]
      %v662 = vld [vmem:[%s3 + $0x178] sm:$0xf]
      %v663 = vld [vmem:[%s3 + $0x17c] sm:$0xf]
      %v664 = vld [vmem:[%s3 + $0x180] sm:$0xf]
      %v665 = vld [vmem:[%s3 + $0x184] sm:$0xf]
      %v666 = vld [vmem:[%s3 + $0x188] sm:$0xf]
      %v667 = vld [vmem:[%s3 + $0x18c] sm:$0xf]
      %v668 = vld [vmem:[%s3 + $0x190] sm:$0xf]
      %v669 = vld [vmem:[%s3 + $0x194] sm:$0xf]
      %v670 = vld [vmem:[%s3 + $0x198] sm:$0xf]
      %v671 = vld [vmem:[%s3 + $0x19c] sm:$0xf]
      %v672 = vld [vmem:[%s3 + $0x1a0] sm:$0xf]
      %v673 = vld [vmem:[%s3 + $0x1a4] sm:$0xf]
      %v674 = vld [vmem:[%s3 + $0x1a8] sm:$0xf]
      %v675 = vld [vmem:[%s3 + $0x1ac] sm:$0xf]
      %v676 = vld [vmem:[%s3 + $0x1b0] sm:$0xf]
      %v677 = vld [vmem:[%s3 + $0x1b4] sm:$0xf]
      %v678 = vld [vmem:[%s3 + $0x1b8] sm:$0xf]
      %v679 = vld [vmem:[%s3 + $0x1bc] sm:$0xf]
      %v680 = vld [vmem:[%s3 + $0x1c0] sm:$0xf]
      %v681 = vld [vmem:[%s3 + $0x1c4] sm:$0xf]
      %v682 = vld [vmem:[%s3 + $0x1c8] sm:$0xf]
      %v683 = vld [vmem:[%s3 + $0x1cc] sm:$0xf]
      %v684 = vld [vmem:[%s3 + $0x1d0] sm:$0xf]
      %v685 = vld [vmem:[%s3 + $0x1d4] sm:$0xf]
      %v686 = vld [vmem:[%s3 + $0x1d8] sm:$0xf]
      %v687 = vld [vmem:[%s3 + $0x1dc] sm:$0xf]
      %v688 = vld [vmem:[%s3 + $0x1e0] sm:$0xf]
      %v689 = vld [vmem:[%s3 + $0x1e4] sm:$0xf]
      %v690 = vld [vmem:[%s3 + $0x1e8] sm:$0xf]
      %v691 = vld [vmem:[%s3 + $0x1ec] sm:$0xf]
      %v692 = vld [vmem:[%s3 + $0x1f0] sm:$0xf]
      %v693 = vld [vmem:[%s3 + $0x1f4] sm:$0xf]
      %v694 = vld [vmem:[%s3 + $0x1f8] sm:$0xf]
      %v695 = vld [vmem:[%s3 + $0x1fc] sm:$0xf]
      %v696 = vld [vmem:[%s3 + $0x200] sm:$0xf]
      %v697 = vld [vmem:[%s3 + $0x204] sm:$0xf]
      %v698 = vld [vmem:[%s3 + $0x208] sm:$0xf]
      %v699 = vld [vmem:[%s3 + $0x20c] sm:$0xf]
      %v700 = vld [vmem:[%s3 + $0x210] sm:$0xf]
      %v701 = vld [vmem:[%s3 + $0x214] sm:$0xf]
      %v702 = vld [vmem:[%s3 + $0x218] sm:$0xf]
      %v703 = vld [vmem:[%s3 + $0x21c] sm:$0xf]
      %v704 = vld [vmem:[%s3 + $0x220] sm:$0xf]
      %v705 = vld [vmem:[%s3 + $0x224] sm:$0xf]
      %v706 = vld [vmem:[%s3 + $0x228] sm:$0xf]
      %v707 = vld [vmem:[%s3 + $0x22c] sm:$0xf]
      %v708 = vld [vmem:[%s3 + $0x230] sm:$0xf]
      %v709 = vld [vmem:[%s3 + $0x234] sm:$0xf]
      %v710 = vld [vmem:[%s3 + $0x238] sm:$0xf]
      %v711 = vld [vmem:[%s3 + $0x23c] sm:$0xf]
      %v712 = vpack.c.b16 %v436, %v434
      %v713 = vpack.c.b16 %v550, %v548
      %v714 = vpack.c.b16 %v551, %v549
      %v715 = vpack.c.b16 %v438, %v436
      %v716 = vpack.c.b16 %v552, %v550
      %v717 = vpack.c.b16 %v553, %v551
      %v718 = vpack.c.b16 %v440, %v438
      %v719 = vpack.c.b16 %v554, %v552
      %v720 = vpack.c.b16 %v555, %v553
      %v721 = vpack.c.b16 %v442, %v440
      %v722 = vpack.c.b16 %v556, %v554
      %v723 = vpack.c.b16 %v557, %v555
      %v724 = vpack.c.b16 %v444, %v442
      %v725 = vpack.c.b16 %v558, %v556
      %v726 = vpack.c.b16 %v559, %v557
      %v727 = vpack.c.b16 %v446, %v444
      %v728 = vpack.c.b16 %v560, %v558
      %v729 = vpack.c.b16 %v561, %v559
      %v730 = vpack.c.b16 %v448, %v446
      %v731 = vpack.c.b16 %v562, %v560
      %v732 = vpack.c.b16 %v563, %v561
      %v733 = vpack.c.b16 %v524, %v448
      %v734 = vpack.c.b16 %v564, %v562
      %v735 = vpack.c.b16 %v565, %v563
      %v736 = vpack.c.b16 %v537, %v524
      %v737 = vpack.c.b16 %v566, %v564
      %v738 = vpack.c.b16 %v567, %v565
      %v910 = vunpack.c.l.b16 %v568
      %v911 = vunpack.c.l.b16 %v569
      %v912 = vunpack.c.l.b16 %v570
      %v913 = vunpack.c.l.b16 %v571
      %v914 = vunpack.c.l.b16 %v572
      %v915 = vunpack.c.l.b16 %v573
      %v916 = vunpack.c.l.b16 %v574
      %v917 = vunpack.c.l.b16 %v575
      %v918 = vunpack.c.l.b16 %v576
      %v919 = vunpack.c.l.b16 %v577
      %v920 = vunpack.c.l.b16 %v578
      %v921 = vunpack.c.l.b16 %v579
      %v922 = vunpack.c.l.b16 %v580
      %v923 = vunpack.c.l.b16 %v581
      %v924 = vunpack.c.l.b16 %v582
      %v925 = vunpack.c.l.b16 %v583
      %v926 = vunpack.c.l.b16 %v584
      %v927 = vunpack.c.l.b16 %v585
      %v928 = vunpack.c.l.b16 %v586
      %v929 = vunpack.c.l.b16 %v587
      %v930 = vunpack.c.l.b16 %v588
      %v931 = vunpack.c.l.b16 %v589
      %v932 = vunpack.c.l.b16 %v590
      %v933 = vunpack.c.l.b16 %v591
      %v934 = vunpack.c.l.b16 %v592
      %v935 = vunpack.c.l.b16 %v593
      %v936 = vunpack.c.l.b16 %v594
      %v937 = vunpack.c.l.b16 %v595
      %v938 = vunpack.c.l.b16 %v596
      %v939 = vunpack.c.l.b16 %v597
      %v940 = vunpack.c.l.b16 %v598
      %v941 = vunpack.c.l.b16 %v599
      %v942 = vunpack.c.l.b16 %v600
      %v943 = vunpack.c.l.b16 %v601
      %v944 = vunpack.c.l.b16 %v602
      %v945 = vunpack.c.l.b16 %v603
      %v946 = vunpack.c.l.b16 %v604
      %v947 = vunpack.c.l.b16 %v605
      %v948 = vunpack.c.l.b16 %v606
      %v949 = vunpack.c.l.b16 %v607
      %v950 = vunpack.c.l.b16 %v608
      %v951 = vunpack.c.l.b16 %v609
      %v952 = vunpack.c.l.b16 %v610
      %v953 = vunpack.c.l.b16 %v611
      %v954 = vunpack.c.l.b16 %v612
      %v955 = vunpack.c.l.b16 %v613
      %v956 = vunpack.c.l.b16 %v614
      %v957 = vunpack.c.l.b16 %v615
      %v958 = vunpack.c.l.b16 %v616
      %v959 = vunpack.c.l.b16 %v617
      %v960 = vunpack.c.l.b16 %v618
      %v961 = vunpack.c.l.b16 %v619
      %v962 = vunpack.c.l.b16 %v620
      %v963 = vunpack.c.l.b16 %v621
      %v964 = vunpack.c.l.b16 %v622
      %v965 = vunpack.c.l.b16 %v623
      %v966 = vunpack.c.l.b16 %v624
      %v967 = vunpack.c.l.b16 %v625
      %v968 = vunpack.c.l.b16 %v626
      %v969 = vunpack.c.l.b16 %v627
      %v970 = vunpack.c.l.b16 %v628
      %v971 = vunpack.c.l.b16 %v629
      %v972 = vunpack.c.l.b16 %v630
      %v973 = vunpack.c.l.b16 %v631
      %v974 = vunpack.c.l.b16 %v632
      %v975 = vunpack.c.l.b16 %v633
      %v976 = vunpack.c.l.b16 %v634
      %v977 = vunpack.c.l.b16 %v635
      %v978 = vunpack.c.l.b16 %v636
      %v979 = vunpack.c.l.b16 %v637
      %v980 = vunpack.c.l.b16 %v638
      %v981 = vunpack.c.l.b16 %v639
      %v982 = vunpack.c.l.b16 %v640
      %v983 = vunpack.c.l.b16 %v641
      %v984 = vunpack.c.l.b16 %v642
      %v985 = vunpack.c.l.b16 %v643
      %v986 = vunpack.c.l.b16 %v644
      %v987 = vunpack.c.l.b16 %v645
      %v988 = vunpack.c.l.b16 %v646
      %v989 = vunpack.c.l.b16 %v647
      %v990 = vunpack.c.l.b16 %v648
      %v991 = vunpack.c.l.b16 %v649
      %v992 = vunpack.c.l.b16 %v650
      %v993 = vunpack.c.l.b16 %v651
      %v994 = vunpack.c.l.b16 %v652
      %v995 = vunpack.c.l.b16 %v653
      %v996 = vunpack.c.l.b16 %v654
      %v997 = vunpack.c.l.b16 %v655
      %v998 = vunpack.c.l.b16 %v656
      %v999 = vunpack.c.l.b16 %v657
      %v1000 = vunpack.c.l.b16 %v658
      %v1001 = vunpack.c.l.b16 %v659
      %v1002 = vunpack.c.l.b16 %v660
      %v1003 = vunpack.c.l.b16 %v661
      %v1004 = vunpack.c.l.b16 %v662
      %v1005 = vunpack.c.l.b16 %v663
      %v1006 = vunpack.c.l.b16 %v664
      %v1007 = vunpack.c.l.b16 %v665
      %v1008 = vunpack.c.l.b16 %v666
      %v1009 = vunpack.c.l.b16 %v667
      %v1010 = vunpack.c.l.b16 %v668
      %v1011 = vunpack.c.l.b16 %v669
      %v1012 = vunpack.c.l.b16 %v670
      %v1013 = vunpack.c.l.b16 %v671
      %v1014 = vunpack.c.l.b16 %v672
      %v1015 = vunpack.c.l.b16 %v673
      %v1016 = vunpack.c.l.b16 %v674
      %v1017 = vunpack.c.l.b16 %v675
      %v1018 = vunpack.c.l.b16 %v676
      %v1019 = vunpack.c.l.b16 %v677
      %v1020 = vunpack.c.l.b16 %v678
      %v1021 = vunpack.c.l.b16 %v679
      %v1022 = vunpack.c.l.b16 %v680
      %v1023 = vunpack.c.l.b16 %v681
      %v1024 = vunpack.c.l.b16 %v682
      %v1025 = vunpack.c.l.b16 %v683
      %v1026 = vunpack.c.l.b16 %v684
      %v1027 = vunpack.c.l.b16 %v685
      %v1028 = vunpack.c.l.b16 %v686
      %v1029 = vunpack.c.l.b16 %v687
      %v1030 = vunpack.c.l.b16 %v688
      %v1031 = vunpack.c.l.b16 %v689
      %v1032 = vunpack.c.l.b16 %v690
      %v1033 = vunpack.c.l.b16 %v691
      %v1034 = vunpack.c.l.b16 %v692
      %v1035 = vunpack.c.l.b16 %v693
      %v1036 = vunpack.c.l.b16 %v694
      %v1037 = vunpack.c.l.b16 %v695
      %v1038 = vunpack.c.l.b16 %v696
      %v1039 = vunpack.c.l.b16 %v697
      %v1040 = vunpack.c.l.b16 %v698
      %v1041 = vunpack.c.l.b16 %v699
      %v1042 = vunpack.c.l.b16 %v700
      %v1043 = vunpack.c.l.b16 %v701
      %v1044 = vunpack.c.l.b16 %v702
      %v1045 = vunpack.c.l.b16 %v703
      %v1046 = vunpack.c.l.b16 %v704
      %v1047 = vunpack.c.l.b16 %v705
      %v1048 = vunpack.c.l.b16 %v706
      %v1049 = vunpack.c.l.b16 %v707
      %v1050 = vunpack.c.l.b16 %v708
      %v1051 = vunpack.c.l.b16 %v709
      %v1052 = vunpack.c.l.b16 %v710
      %v1053 = vunpack.c.l.b16 %v711
      %v1054 = vpack.c.b16 %v911, %v910
      %v1055 = vpack.c.b16 %v913, %v912
      %v1056 = vpack.c.b16 %v915, %v914
      %v1057 = vpack.c.b16 %v917, %v916
      %v1058 = vpack.c.b16 %v919, %v918
      %v1059 = vpack.c.b16 %v921, %v920
      %v1060 = vpack.c.b16 %v923, %v922
      %v1061 = vpack.c.b16 %v925, %v924
      %v1062 = vpack.c.b16 %v927, %v926
      %v1063 = vpack.c.b16 %v929, %v928
      %v1064 = vpack.c.b16 %v931, %v930
      %v1065 = vpack.c.b16 %v933, %v932
      %v1066 = vpack.c.b16 %v935, %v934
      %v1067 = vpack.c.b16 %v937, %v936
      %v1068 = vpack.c.b16 %v939, %v938
      %v1069 = vpack.c.b16 %v941, %v940
      %v1070 = vpack.c.b16 %v943, %v942
      %v1071 = vpack.c.b16 %v945, %v944
      %v1072 = vpack.c.b16 %v947, %v946
      %v1073 = vpack.c.b16 %v949, %v948
      %v1074 = vpack.c.b16 %v951, %v950
      %v1075 = vpack.c.b16 %v953, %v952
      %v1076 = vpack.c.b16 %v955, %v954
      %v1077 = vpack.c.b16 %v957, %v956
      %v1078 = vpack.c.b16 %v959, %v958
      %v1079 = vpack.c.b16 %v961, %v960
      %v1080 = vpack.c.b16 %v963, %v962
      %v1081 = vpack.c.b16 %v965, %v964
      %v1082 = vpack.c.b16 %v967, %v966
      %v1083 = vpack.c.b16 %v969, %v968
      %v1084 = vpack.c.b16 %v971, %v970
      %v1085 = vpack.c.b16 %v973, %v972
      %v1086 = vpack.c.b16 %v975, %v974
      %v1087 = vpack.c.b16 %v977, %v976
      %v1088 = vpack.c.b16 %v979, %v978
      %v1089 = vpack.c.b16 %v981, %v980
      %v1090 = vpack.c.b16 %v983, %v982
      %v1091 = vpack.c.b16 %v985, %v984
      %v1092 = vpack.c.b16 %v987, %v986
      %v1093 = vpack.c.b16 %v989, %v988
      %v1094 = vpack.c.b16 %v991, %v990
      %v1095 = vpack.c.b16 %v993, %v992
      %v1096 = vpack.c.b16 %v995, %v994
      %v1097 = vpack.c.b16 %v997, %v996
      %v1098 = vpack.c.b16 %v999, %v998
      %v1099 = vpack.c.b16 %v1001, %v1000
      %v1100 = vpack.c.b16 %v1003, %v1002
      %v1101 = vpack.c.b16 %v1005, %v1004
      %v1102 = vpack.c.b16 %v1007, %v1006
      %v1103 = vpack.c.b16 %v1009, %v1008
      %v1104 = vpack.c.b16 %v1011, %v1010
      %v1105 = vpack.c.b16 %v1013, %v1012
      %v1106 = vpack.c.b16 %v1015, %v1014
      %v1107 = vpack.c.b16 %v1017, %v1016
      %v1108 = vpack.c.b16 %v1019, %v1018
      %v1109 = vpack.c.b16 %v1021, %v1020
      %v1110 = vpack.c.b16 %v1023, %v1022
      %v1111 = vpack.c.b16 %v1025, %v1024
      %v1112 = vpack.c.b16 %v1027, %v1026
      %v1113 = vpack.c.b16 %v1029, %v1028
      %v1114 = vpack.c.b16 %v1031, %v1030
      %v1115 = vpack.c.b16 %v1033, %v1032
      %v1116 = vpack.c.b16 %v1035, %v1034
      %v1117 = vpack.c.b16 %v1037, %v1036
      %v1118 = vpack.c.b16 %v1039, %v1038
      %v1119 = vpack.c.b16 %v1041, %v1040
      %v1120 = vpack.c.b16 %v1043, %v1042
      %v1121 = vpack.c.b16 %v1045, %v1044
      %v1122 = vpack.c.b16 %v1047, %v1046
      %v1123 = vpack.c.b16 %v1049, %v1048
      %v1124 = vpack.c.b16 %v1051, %v1050
      %v1125 = vpack.c.b16 %v1053, %v1052
      %1198 = vmatpush.bf16.msra.mxu0 %v1061
      %1199 = vmatpush.bf16.msra.mxu0 %v1060
      %1200 = vmatpush.bf16.msra.mxu0 %v1059
      %1201 = vmatpush.bf16.msra.mxu0 %v1058
      %1202 = vmatpush.bf16.msra.mxu0 %v1057
      %1203 = vmatpush.bf16.msra.mxu0 %v1056
      %1204 = vmatpush.bf16.msra.mxu0 %v1055
      %1205 = vmatpush.bf16.msra.mxu0 %v1054
      %1206 = vmatmul.bf16.gmra.mxu0 %v712
      %v1207 = vpop.f32.mrf.mxu0
      %v1208 = vadd.f32 0.0, %v1207
      %v1209 = vpop.f32.mrf.mxu0
      %v1210 = vadd.f32 0.0, %v1209
      %1211 = vmatmul.bf16.gmra.mxu0 %v718
      %v1212 = vpop.f32.mrf.mxu0
      %v1213 = vadd.f32 0.0, %v1212
      %v1214 = vpop.f32.mrf.mxu0
      %v1215 = vadd.f32 0.0, %v1214
      %1216 = vmatmul.bf16.gmra.mxu0 %v724
      %v1217 = vpop.f32.mrf.mxu0
      %v1218 = vadd.f32 0.0, %v1217
      %v1219 = vpop.f32.mrf.mxu0
      %v1220 = vadd.f32 0.0, %v1219
      %1221 = vmatmul.bf16.gmra.mxu0 %v730
      %v1222 = vpop.f32.mrf.mxu0
      %v1223 = vadd.f32 0.0, %v1222
      %v1224 = vpop.f32.mrf.mxu0
      %v1225 = vadd.f32 0.0, %v1224
      %1226 = vdwg.mxu0
      %1227 = vmatpush.bf16.msra.mxu0 %v1069
      %1228 = vmatpush.bf16.msra.mxu0 %v1068
      %1229 = vmatpush.bf16.msra.mxu0 %v1067
      %1230 = vmatpush.bf16.msra.mxu0 %v1066
      %1231 = vmatpush.bf16.msra.mxu0 %v1065
      %1232 = vmatpush.bf16.msra.mxu0 %v1064
      %1233 = vmatpush.bf16.msra.mxu0 %v1063
      %1234 = vmatpush.bf16.msra.mxu0 %v1062
      %1235 = vmatmul.bf16.gmra.mxu0 %v713
      %v1236 = vpop.f32.mrf.mxu0
      %v1237 = vadd.f32 %v1208, %v1236
      %v1238 = vpop.f32.mrf.mxu0
      %v1239 = vadd.f32 %v1210, %v1238
      %1240 = vmatmul.bf16.gmra.mxu0 %v719
      %v1241 = vpop.f32.mrf.mxu0
      %v1242 = vadd.f32 %v1213, %v1241
      %v1243 = vpop.f32.mrf.mxu0
      %v1244 = vadd.f32 %v1215, %v1243
      %1245 = vmatmul.bf16.gmra.mxu0 %v725
      %v1246 = vpop.f32.mrf.mxu0
      %v1247 = vadd.f32 %v1218, %v1246
      %v1248 = vpop.f32.mrf.mxu0
      %v1249 = vadd.f32 %v1220, %v1248
      %1250 = vmatmul.bf16.gmra.mxu0 %v731
      %v1251 = vpop.f32.mrf.mxu0
      %v1252 = vadd.f32 %v1223, %v1251
      %v1253 = vpop.f32.mrf.mxu0
      %v1254 = vadd.f32 %v1225, %v1253
      %1255 = vdwg.mxu0
      %1256 = vmatpush.bf16.msra.mxu0 %v1077
      %1257 = vmatpush.bf16.msra.mxu0 %v1076
      %1258 = vmatpush.bf16.msra.mxu0 %v1075
      %1259 = vmatpush.bf16.msra.mxu0 %v1074
      %1260 = vmatpush.bf16.msra.mxu0 %v1073
      %1261 = vmatpush.bf16.msra.mxu0 %v1072
      %1262 = vmatpush.bf16.msra.mxu0 %v1071
      %1263 = vmatpush.bf16.msra.mxu0 %v1070
      %1264 = vmatmul.bf16.gmra.mxu0 %v714
      %v1265 = vpop.f32.mrf.mxu0
      %v1266 = vadd.f32 %v1237, %v1265
      %v1267 = vpop.f32.mrf.mxu0
      %v1268 = vadd.f32 %v1239, %v1267
      %1269 = vmatmul.bf16.gmra.mxu0 %v720
      %v1270 = vpop.f32.mrf.mxu0
      %v1271 = vadd.f32 %v1242, %v1270
      %v1272 = vpop.f32.mrf.mxu0
      %v1273 = vadd.f32 %v1244, %v1272
      %1274 = vmatmul.bf16.gmra.mxu0 %v726
      %v1275 = vpop.f32.mrf.mxu0
      %v1276 = vadd.f32 %v1247, %v1275
      %v1277 = vpop.f32.mrf.mxu0
      %v1278 = vadd.f32 %v1249, %v1277
      %1279 = vmatmul.bf16.gmra.mxu0 %v732
      %v1280 = vpop.f32.mrf.mxu0
      %v1281 = vadd.f32 %v1252, %v1280
      %v1282 = vpop.f32.mrf.mxu0
      %v1283 = vadd.f32 %v1254, %v1282
      %1284 = vdwg.mxu0
      %1285 = vmatpush.bf16.msra.mxu0 %v1085
      %1286 = vmatpush.bf16.msra.mxu0 %v1084
      %1287 = vmatpush.bf16.msra.mxu0 %v1083
      %1288 = vmatpush.bf16.msra.mxu0 %v1082
      %1289 = vmatpush.bf16.msra.mxu0 %v1081
      %1290 = vmatpush.bf16.msra.mxu0 %v1080
      %1291 = vmatpush.bf16.msra.mxu0 %v1079
      %1292 = vmatpush.bf16.msra.mxu0 %v1078
      %1293 = vmatmul.bf16.gmra.mxu0 %v715
      %v1294 = vpop.f32.mrf.mxu0
      %v1295 = vadd.f32 %v1266, %v1294
      %v1296 = vpop.f32.mrf.mxu0
      %v1297 = vadd.f32 %v1268, %v1296
      %1298 = vmatmul.bf16.gmra.mxu0 %v721
      %v1299 = vpop.f32.mrf.mxu0
      %v1300 = vadd.f32 %v1271, %v1299
      %v1301 = vpop.f32.mrf.mxu0
      %v1302 = vadd.f32 %v1273, %v1301
      %1303 = vmatmul.bf16.gmra.mxu0 %v727
      %v1304 = vpop.f32.mrf.mxu0
      %v1305 = vadd.f32 %v1276, %v1304
      %v1306 = vpop.f32.mrf.mxu0
      %v1307 = vadd.f32 %v1278, %v1306
      %1308 = vmatmul.bf16.gmra.mxu0 %v733
      %v1309 = vpop.f32.mrf.mxu0
      %v1310 = vadd.f32 %v1281, %v1309
      %v1311 = vpop.f32.mrf.mxu0
      %v1312 = vadd.f32 %v1283, %v1311
      %1313 = vdwg.mxu0
      %1314 = vmatpush.bf16.msra.mxu0 %v1093
      %1315 = vmatpush.bf16.msra.mxu0 %v1092
      %1316 = vmatpush.bf16.msra.mxu0 %v1091
      %1317 = vmatpush.bf16.msra.mxu0 %v1090
      %1318 = vmatpush.bf16.msra.mxu0 %v1089
      %1319 = vmatpush.bf16.msra.mxu0 %v1088
      %1320 = vmatpush.bf16.msra.mxu0 %v1087
      %1321 = vmatpush.bf16.msra.mxu0 %v1086
      %1322 = vmatmul.bf16.gmra.mxu0 %v716
      %v1323 = vpop.f32.mrf.mxu0
      %v1324 = vadd.f32 %v1295, %v1323
      %v1325 = vpop.f32.mrf.mxu0
      %v1326 = vadd.f32 %v1297, %v1325
      %1327 = vmatmul.bf16.gmra.mxu0 %v722
      %v1328 = vpop.f32.mrf.mxu0
      %v1329 = vadd.f32 %v1300, %v1328
      %v1330 = vpop.f32.mrf.mxu0
      %v1331 = vadd.f32 %v1302, %v1330
      %1332 = vmatmul.bf16.gmra.mxu0 %v728
      %v1333 = vpop.f32.mrf.mxu0
      %v1334 = vadd.f32 %v1305, %v1333
      %v1335 = vpop.f32.mrf.mxu0
      %v1336 = vadd.f32 %v1307, %v1335
      %1337 = vmatmul.bf16.gmra.mxu0 %v734
      %v1338 = vpop.f32.mrf.mxu0
      %v1339 = vadd.f32 %v1310, %v1338
      %v1340 = vpop.f32.mrf.mxu0
      %v1341 = vadd.f32 %v1312, %v1340
      %1342 = vdwg.mxu0
      %1343 = vmatpush.bf16.msra.mxu0 %v1101
      %1344 = vmatpush.bf16.msra.mxu0 %v1100
      %1345 = vmatpush.bf16.msra.mxu0 %v1099
      %1346 = vmatpush.bf16.msra.mxu0 %v1098
      %1347 = vmatpush.bf16.msra.mxu0 %v1097
      %1348 = vmatpush.bf16.msra.mxu0 %v1096
      %1349 = vmatpush.bf16.msra.mxu0 %v1095
      %1350 = vmatpush.bf16.msra.mxu0 %v1094
      %1351 = vmatmul.bf16.gmra.mxu0 %v717
      %v1352 = vpop.f32.mrf.mxu0
      %v1353 = vadd.f32 %v1324, %v1352
      %v1354 = vpop.f32.mrf.mxu0
      %v1355 = vadd.f32 %v1326, %v1354
      %1356 = vmatmul.bf16.gmra.mxu0 %v723
      %v1357 = vpop.f32.mrf.mxu0
      %v1358 = vadd.f32 %v1329, %v1357
      %v1359 = vpop.f32.mrf.mxu0
      %v1360 = vadd.f32 %v1331, %v1359
      %1361 = vmatmul.bf16.gmra.mxu0 %v729
      %v1362 = vpop.f32.mrf.mxu0
      %v1363 = vadd.f32 %v1334, %v1362
      %v1364 = vpop.f32.mrf.mxu0
      %v1365 = vadd.f32 %v1336, %v1364
      %1366 = vmatmul.bf16.gmra.mxu0 %v735
      %v1367 = vpop.f32.mrf.mxu0
      %v1368 = vadd.f32 %v1339, %v1367
      %v1369 = vpop.f32.mrf.mxu0
      %v1370 = vadd.f32 %v1341, %v1369
      %1371 = vdwg.mxu0
      %1372 = vmatpush.bf16.msra.mxu0 %v1109
      %1373 = vmatpush.bf16.msra.mxu0 %v1108
      %1374 = vmatpush.bf16.msra.mxu0 %v1107
      %1375 = vmatpush.bf16.msra.mxu0 %v1106
      %1376 = vmatpush.bf16.msra.mxu0 %v1105
      %1377 = vmatpush.bf16.msra.mxu0 %v1104
      %1378 = vmatpush.bf16.msra.mxu0 %v1103
      %1379 = vmatpush.bf16.msra.mxu0 %v1102
      %1380 = vmatmul.bf16.gmra.mxu0 %v718
      %v1381 = vpop.f32.mrf.mxu0
      %v1382 = vadd.f32 %v1353, %v1381
      %v1383 = vpop.f32.mrf.mxu0
      %v1384 = vadd.f32 %v1355, %v1383
      %1385 = vmatmul.bf16.gmra.mxu0 %v724
      %v1386 = vpop.f32.mrf.mxu0
      %v1387 = vadd.f32 %v1358, %v1386
      %v1388 = vpop.f32.mrf.mxu0
      %v1389 = vadd.f32 %v1360, %v1388
      %1390 = vmatmul.bf16.gmra.mxu0 %v730
      %v1391 = vpop.f32.mrf.mxu0
      %v1392 = vadd.f32 %v1363, %v1391
      %v1393 = vpop.f32.mrf.mxu0
      %v1394 = vadd.f32 %v1365, %v1393
      %1395 = vmatmul.bf16.gmra.mxu0 %v736
      %v1396 = vpop.f32.mrf.mxu0
      %v1397 = vadd.f32 %v1368, %v1396
      %v1398 = vpop.f32.mrf.mxu0
      %v1399 = vadd.f32 %v1370, %v1398
      %1400 = vdwg.mxu0
      %1401 = vmatpush.bf16.msra.mxu0 %v1117
      %1402 = vmatpush.bf16.msra.mxu0 %v1116
      %1403 = vmatpush.bf16.msra.mxu0 %v1115
      %1404 = vmatpush.bf16.msra.mxu0 %v1114
      %1405 = vmatpush.bf16.msra.mxu0 %v1113
      %1406 = vmatpush.bf16.msra.mxu0 %v1112
      %1407 = vmatpush.bf16.msra.mxu0 %v1111
      %1408 = vmatpush.bf16.msra.mxu0 %v1110
      %1409 = vmatmul.bf16.gmra.mxu0 %v719
      %v1410 = vpop.f32.mrf.mxu0
      %v1411 = vadd.f32 %v1382, %v1410
      %v1412 = vpop.f32.mrf.mxu0
      %v1413 = vadd.f32 %v1384, %v1412
      %1414 = vmatmul.bf16.gmra.mxu0 %v725
      %v1415 = vpop.f32.mrf.mxu0
      %v1416 = vadd.f32 %v1387, %v1415
      %v1417 = vpop.f32.mrf.mxu0
      %v1418 = vadd.f32 %v1389, %v1417
      %1419 = vmatmul.bf16.gmra.mxu0 %v731
      %v1420 = vpop.f32.mrf.mxu0
      %v1421 = vadd.f32 %v1392, %v1420
      %v1422 = vpop.f32.mrf.mxu0
      %v1423 = vadd.f32 %v1394, %v1422
      %1424 = vmatmul.bf16.gmra.mxu0 %v737
      %v1425 = vpop.f32.mrf.mxu0
      %v1426 = vadd.f32 %v1397, %v1425
      %v1427 = vpop.f32.mrf.mxu0
      %v1428 = vadd.f32 %v1399, %v1427
      %1429 = vdwg.mxu0
      %1430 = vmatpush.bf16.msra.mxu0 %v1125
      %1431 = vmatpush.bf16.msra.mxu0 %v1124
      %1432 = vmatpush.bf16.msra.mxu0 %v1123
      %1433 = vmatpush.bf16.msra.mxu0 %v1122
      %1434 = vmatpush.bf16.msra.mxu0 %v1121
      %1435 = vmatpush.bf16.msra.mxu0 %v1120
      %1436 = vmatpush.bf16.msra.mxu0 %v1119
      %1437 = vmatpush.bf16.msra.mxu0 %v1118
      %1438 = vmatmul.bf16.gmra.mxu0 %v720
      %v1439 = vpop.f32.mrf.mxu0
      %v1440 = vadd.f32 %v1411, %v1439
      %v1441 = vpop.f32.mrf.mxu0
      %v1442 = vadd.f32 %v1413, %v1441
      %1443 = vmatmul.bf16.gmra.mxu0 %v726
      %v1444 = vpop.f32.mrf.mxu0
      %v1445 = vadd.f32 %v1416, %v1444
      %v1446 = vpop.f32.mrf.mxu0
      %v1447 = vadd.f32 %v1418, %v1446
      %1448 = vmatmul.bf16.gmra.mxu0 %v732
      %v1449 = vpop.f32.mrf.mxu0
      %v1450 = vadd.f32 %v1421, %v1449
      %v1451 = vpop.f32.mrf.mxu0
      %v1452 = vadd.f32 %v1423, %v1451
      %1453 = vmatmul.bf16.gmra.mxu0 %v738
      %v1454 = vpop.f32.mrf.mxu0
      %v1455 = vadd.f32 %v1426, %v1454
      %v1456 = vpop.f32.mrf.mxu0
      %v1457 = vadd.f32 %v1428, %v1456
      %1458 = vdwg.mxu0
      %v1459 = vstv %s394
      %v1460 = vmul.f32 %v1440, %v1459
      %v1461 = vmul.f32 %v1442, %v1459
      %v1462 = vmul.f32 %v1445, %v1459
      %v1463 = vmul.f32 %v1447, %v1459
      %v1464 = vmul.f32 %v1450, %v1459
      %v1465 = vmul.f32 %v1452, %v1459
      %v1466 = vmul.f32 %v1455, %v1459
      %v1467 = vmul.f32 %v1457, %v1459
      %v1468 = vadd.f32 %v1460, 0.0
      %v1469 = vadd.f32 %v1461, 0.0
      %v1470 = vadd.f32 %v1462, 0.0
      %v1471 = vadd.f32 %v1463, 0.0
      %v1472 = vadd.f32 %v1464, 0.0
      %v1473 = vadd.f32 %v1465, 0.0
      %v1474 = vadd.f32 %v1466, 0.0
      %v1475 = vadd.f32 %v1467, 0.0
      %v1476 = vld [vmem:[%s359] sm:$0xf]
      %v1477 = vld [vmem:[%s359 + $0x4] sm:$0x1]
      %v1478 = vld [vmem:[%s359 + $0x8] sm:$0xf]
      %v1479 = vld [vmem:[%s359 + $0xc] sm:$0x1]
      %v1480 = vld [vmem:[%s359 + $0x10] sm:$0xf]
      %v1481 = vld [vmem:[%s359 + $0x14] sm:$0x1]
      %v1482 = vld [vmem:[%s359 + $0x18] sm:$0xf]
      %v1483 = vld [vmem:[%s359 + $0x1c] sm:$0x1]
      %v1484 = vld [vmem:[%s359 + $0x20] sm:$0xf]
      %v1485 = vld [vmem:[%s359 + $0x24] sm:$0x1]
      %v1486 = vld [vmem:[%s359 + $0x28] sm:$0xf]
      %v1487 = vld [vmem:[%s359 + $0x2c] sm:$0x1]
      %v1488 = vld [vmem:[%s359 + $0x30] sm:$0xf]
      %v1489 = vld [vmem:[%s359 + $0x34] sm:$0x1]
      %v1490 = vld [vmem:[%s359 + $0x38] sm:$0xf]
      %v1491 = vld [vmem:[%s359 + $0x3c] sm:$0x1]
      %v1492 = vld [vmem:[%s359 + $0x40] sm:$0xf]
      %v1493 = vld [vmem:[%s359 + $0x44] sm:$0x1]
      %v1494 = vld [vmem:[%s359 + $0x48] sm:$0xf]
      %v1495 = vld [vmem:[%s359 + $0x4c] sm:$0x1]
      %v1512 = vunpack.c.l.b16 %v1476
      %v1513 = vunpack.c.l.b16 %v1477
      %v1514 = vunpack.c.l.b16 %v1478
      %v1515 = vunpack.c.l.b16 %v1479
      %v1516 = vunpack.c.l.b16 %v1480
      %v1517 = vunpack.c.l.b16 %v1481
      %v1518 = vunpack.c.l.b16 %v1482
      %v1519 = vunpack.c.l.b16 %v1483
      %v1520 = vunpack.c.l.b16 %v1484
      %v1521 = vunpack.c.l.b16 %v1485
      %v1522 = vunpack.c.l.b16 %v1486
      %v1523 = vunpack.c.l.b16 %v1487
      %v1524 = vunpack.c.l.b16 %v1488
      %v1525 = vunpack.c.l.b16 %v1489
      %v1526 = vunpack.c.l.b16 %v1490
      %v1527 = vunpack.c.l.b16 %v1491
      %v1528 = vpack.c.b16 %v1513, %v1512
      %v1529 = vpack.c.b16 %v1515, %v1514
      %v1530 = vpack.c.b16 %v1517, %v1516
      %v1531 = vpack.c.b16 %v1519, %v1518
      %v1532 = vpack.c.b16 %v1521, %v1520
      %v1533 = vpack.c.b16 %v1523, %v1522
      %v1534 = vpack.c.b16 %v1525, %v1524
      %v1535 = vpack.c.b16 %v1527, %v1526
      %v1537 = vshrl.u32 %v1528, 16
      %v1539 = vshll.u32 %v1528, 16
      %v1541 = vrot.slane %v1539, 1
      %v1542 = vor.u32 %v1537, %v1541
      %v1544 = vshrl.u32 %v1529, 16
      %v1546 = vshll.u32 %v1529, 16
      %v1548 = vrot.slane %v1546, 1
      %v1549 = vor.u32 %v1544, %v1548
      %v1551 = vshrl.u32 %v1530, 16
      %v1553 = vshll.u32 %v1530, 16
      %v1555 = vrot.slane %v1553, 1
      %v1556 = vor.u32 %v1551, %v1555
      %v1558 = vshrl.u32 %v1531, 16
      %v1560 = vshll.u32 %v1531, 16
      %v1562 = vrot.slane %v1560, 1
      %v1563 = vor.u32 %v1558, %v1562
      %v1565 = vshrl.u32 %v1532, 16
      %v1567 = vshll.u32 %v1532, 16
      %v1569 = vrot.slane %v1567, 1
      %v1570 = vor.u32 %v1565, %v1569
      %v1572 = vshrl.u32 %v1533, 16
      %v1574 = vshll.u32 %v1533, 16
      %v1576 = vrot.slane %v1574, 1
      %v1577 = vor.u32 %v1572, %v1576
      %v1579 = vshrl.u32 %v1534, 16
      %v1581 = vshll.u32 %v1534, 16
      %v1583 = vrot.slane %v1581, 1
      %v1584 = vor.u32 %v1579, %v1583
      %v1586 = vshrl.u32 %v1535, 16
      %v1588 = vshll.u32 %v1535, 16
      %v1590 = vrot.slane %v1588, 1
      %v1591 = vor.u32 %v1586, %v1590
      %v1592 = vrot.slane %v1528, 1
      %v1593 = vrot.slane %v1529, 1
      %v1594 = vrot.slane %v1530, 1
      %v1595 = vrot.slane %v1531, 1
      %v1596 = vrot.slane %v1532, 1
      %v1597 = vrot.slane %v1533, 1
      %v1598 = vrot.slane %v1534, 1
      %v1599 = vrot.slane %v1535, 1
      %v1602 = vunpack.c.l.b16 %v1492
      %v1603 = vunpack.c.l.b16 %v1493
      %v1604 = vpack.c.b16 %v1603, %v1602
      %v1606 = vshrl.u32 %v1604, 16
      %v1608 = vshll.u32 %v1604, 16
      %v1610 = vrot.slane %v1608, 1
      %v1611 = vor.u32 %v1606, %v1610
      %v1612 = vrot.slane %v1604, 1
      %v1615 = vunpack.c.l.b16 %v1494
      %v1616 = vunpack.c.l.b16 %v1495
      %v1617 = vpack.c.b16 %v1616, %v1615
      %v1619 = vshrl.u32 %v1617, 16
      %v1621 = vshll.u32 %v1617, 16
      %v1623 = vrot.slane %v1621, 1
      %v1624 = vor.u32 %v1619, %v1623
      %v1625 = vrot.slane %v1617, 1
      %v1626 = vunpack.c.l.b16 %v1542
      %v1627 = vunpack.c.l.b16 %v1592
      %v1628 = vunpack.c.l.b16 %v1549
      %v1629 = vunpack.c.l.b16 %v1593
      %v1630 = vunpack.c.l.b16 %v1556
      %v1631 = vunpack.c.l.b16 %v1594
      %v1632 = vunpack.c.l.b16 %v1563
      %v1633 = vunpack.c.l.b16 %v1595
      %v1634 = vunpack.c.l.b16 %v1570
      %v1635 = vunpack.c.l.b16 %v1596
      %v1636 = vunpack.c.l.b16 %v1577
      %v1637 = vunpack.c.l.b16 %v1597
      %v1638 = vunpack.c.l.b16 %v1584
      %v1639 = vunpack.c.l.b16 %v1598
      %v1640 = vunpack.c.l.b16 %v1591
      %v1641 = vunpack.c.l.b16 %v1599
      %v1642 = vunpack.c.l.b16 %v1611
      %v1643 = vunpack.c.l.b16 %v1612
      %v1644 = vunpack.c.l.b16 %v1624
      %v1645 = vunpack.c.l.b16 %v1625
      %s1646 = scalar_lea.vmem %s3, 576
      %v1647 = vld [vmem:[%s1646] sm:$0xf]
      %v1648 = vld [vmem:[%s1646 + $0x4] sm:$0xf]
      %v1649 = vld [vmem:[%s1646 + $0x8] sm:$0xf]
      %v1650 = vld [vmem:[%s1646 + $0xc] sm:$0xf]
      %v1651 = vld [vmem:[%s1646 + $0x10] sm:$0xf]
      %v1652 = vld [vmem:[%s1646 + $0x14] sm:$0xf]
      %v1653 = vld [vmem:[%s1646 + $0x18] sm:$0xf]
      %v1654 = vld [vmem:[%s1646 + $0x1c] sm:$0xf]
      %v1655 = vld [vmem:[%s1646 + $0x20] sm:$0xf]
      %v1656 = vld [vmem:[%s1646 + $0x24] sm:$0xf]
      %v1657 = vld [vmem:[%s1646 + $0x28] sm:$0xf]
      %v1658 = vld [vmem:[%s1646 + $0x2c] sm:$0xf]
      %v1659 = vld [vmem:[%s1646 + $0x30] sm:$0xf]
      %v1660 = vld [vmem:[%s1646 + $0x34] sm:$0xf]
      %v1661 = vld [vmem:[%s1646 + $0x38] sm:$0xf]
      %v1662 = vld [vmem:[%s1646 + $0x3c] sm:$0xf]
      %v1663 = vld [vmem:[%s1646 + $0x40] sm:$0xf]
      %v1664 = vld [vmem:[%s1646 + $0x44] sm:$0xf]
      %v1665 = vld [vmem:[%s1646 + $0x48] sm:$0xf]
      %v1666 = vld [vmem:[%s1646 + $0x4c] sm:$0xf]
      %v1667 = vld [vmem:[%s1646 + $0x50] sm:$0xf]
      %v1668 = vld [vmem:[%s1646 + $0x54] sm:$0xf]
      %v1669 = vld [vmem:[%s1646 + $0x58] sm:$0xf]
      %v1670 = vld [vmem:[%s1646 + $0x5c] sm:$0xf]
      %v1671 = vld [vmem:[%s1646 + $0x60] sm:$0xf]
      %v1672 = vld [vmem:[%s1646 + $0x64] sm:$0xf]
      %v1673 = vld [vmem:[%s1646 + $0x68] sm:$0xf]
      %v1674 = vld [vmem:[%s1646 + $0x6c] sm:$0xf]
      %v1675 = vld [vmem:[%s1646 + $0x70] sm:$0xf]
      %v1676 = vld [vmem:[%s1646 + $0x74] sm:$0xf]
      %v1677 = vld [vmem:[%s1646 + $0x78] sm:$0xf]
      %v1678 = vld [vmem:[%s1646 + $0x7c] sm:$0xf]
      %v1679 = vld [vmem:[%s1646 + $0x80] sm:$0xf]
      %v1680 = vld [vmem:[%s1646 + $0x84] sm:$0xf]
      %v1681 = vld [vmem:[%s1646 + $0x88] sm:$0xf]
      %v1682 = vld [vmem:[%s1646 + $0x8c] sm:$0xf]
      %v1683 = vld [vmem:[%s1646 + $0x90] sm:$0xf]
      %v1684 = vld [vmem:[%s1646 + $0x94] sm:$0xf]
      %v1685 = vld [vmem:[%s1646 + $0x98] sm:$0xf]
      %v1686 = vld [vmem:[%s1646 + $0x9c] sm:$0xf]
      %v1687 = vld [vmem:[%s1646 + $0xa0] sm:$0xf]
      %v1688 = vld [vmem:[%s1646 + $0xa4] sm:$0xf]
      %v1689 = vld [vmem:[%s1646 + $0xa8] sm:$0xf]
      %v1690 = vld [vmem:[%s1646 + $0xac] sm:$0xf]
      %v1691 = vld [vmem:[%s1646 + $0xb0] sm:$0xf]
      %v1692 = vld [vmem:[%s1646 + $0xb4] sm:$0xf]
      %v1693 = vld [vmem:[%s1646 + $0xb8] sm:$0xf]
      %v1694 = vld [vmem:[%s1646 + $0xbc] sm:$0xf]
      %v1695 = vld [vmem:[%s1646 + $0xc0] sm:$0xf]
      %v1696 = vld [vmem:[%s1646 + $0xc4] sm:$0xf]
      %v1697 = vld [vmem:[%s1646 + $0xc8] sm:$0xf]
      %v1698 = vld [vmem:[%s1646 + $0xcc] sm:$0xf]
      %v1699 = vld [vmem:[%s1646 + $0xd0] sm:$0xf]
      %v1700 = vld [vmem:[%s1646 + $0xd4] sm:$0xf]
      %v1701 = vld [vmem:[%s1646 + $0xd8] sm:$0xf]
      %v1702 = vld [vmem:[%s1646 + $0xdc] sm:$0xf]
      %v1703 = vld [vmem:[%s1646 + $0xe0] sm:$0xf]
      %v1704 = vld [vmem:[%s1646 + $0xe4] sm:$0xf]
      %v1705 = vld [vmem:[%s1646 + $0xe8] sm:$0xf]
      %v1706 = vld [vmem:[%s1646 + $0xec] sm:$0xf]
      %v1707 = vld [vmem:[%s1646 + $0xf0] sm:$0xf]
      %v1708 = vld [vmem:[%s1646 + $0xf4] sm:$0xf]
      %v1709 = vld [vmem:[%s1646 + $0xf8] sm:$0xf]
      %v1710 = vld [vmem:[%s1646 + $0xfc] sm:$0xf]
      %v1711 = vld [vmem:[%s1646 + $0x100] sm:$0xf]
      %v1712 = vld [vmem:[%s1646 + $0x104] sm:$0xf]
      %v1713 = vld [vmem:[%s1646 + $0x108] sm:$0xf]
      %v1714 = vld [vmem:[%s1646 + $0x10c] sm:$0xf]
      %v1715 = vld [vmem:[%s1646 + $0x110] sm:$0xf]
      %v1716 = vld [vmem:[%s1646 + $0x114] sm:$0xf]
      %v1717 = vld [vmem:[%s1646 + $0x118] sm:$0xf]
      %v1718 = vld [vmem:[%s1646 + $0x11c] sm:$0xf]
      %v1719 = vld [vmem:[%s1646 + $0x120] sm:$0xf]
      %v1720 = vld [vmem:[%s1646 + $0x124] sm:$0xf]
      %v1721 = vld [vmem:[%s1646 + $0x128] sm:$0xf]
      %v1722 = vld [vmem:[%s1646 + $0x12c] sm:$0xf]
      %v1723 = vld [vmem:[%s1646 + $0x130] sm:$0xf]
      %v1724 = vld [vmem:[%s1646 + $0x134] sm:$0xf]
      %v1725 = vld [vmem:[%s1646 + $0x138] sm:$0xf]
      %v1726 = vld [vmem:[%s1646 + $0x13c] sm:$0xf]
      %v1727 = vld [vmem:[%s1646 + $0x140] sm:$0xf]
      %v1728 = vld [vmem:[%s1646 + $0x144] sm:$0xf]
      %v1729 = vld [vmem:[%s1646 + $0x148] sm:$0xf]
      %v1730 = vld [vmem:[%s1646 + $0x14c] sm:$0xf]
      %v1731 = vld [vmem:[%s1646 + $0x150] sm:$0xf]
      %v1732 = vld [vmem:[%s1646 + $0x154] sm:$0xf]
      %v1733 = vld [vmem:[%s1646 + $0x158] sm:$0xf]
      %v1734 = vld [vmem:[%s1646 + $0x15c] sm:$0xf]
      %v1735 = vld [vmem:[%s1646 + $0x160] sm:$0xf]
      %v1736 = vld [vmem:[%s1646 + $0x164] sm:$0xf]
      %v1737 = vld [vmem:[%s1646 + $0x168] sm:$0xf]
      %v1738 = vld [vmem:[%s1646 + $0x16c] sm:$0xf]
      %v1739 = vld [vmem:[%s1646 + $0x170] sm:$0xf]
      %v1740 = vld [vmem:[%s1646 + $0x174] sm:$0xf]
      %v1741 = vld [vmem:[%s1646 + $0x178] sm:$0xf]
      %v1742 = vld [vmem:[%s1646 + $0x17c] sm:$0xf]
      %v1743 = vld [vmem:[%s1646 + $0x180] sm:$0xf]
      %v1744 = vld [vmem:[%s1646 + $0x184] sm:$0xf]
      %v1745 = vld [vmem:[%s1646 + $0x188] sm:$0xf]
      %v1746 = vld [vmem:[%s1646 + $0x18c] sm:$0xf]
      %v1747 = vld [vmem:[%s1646 + $0x190] sm:$0xf]
      %v1748 = vld [vmem:[%s1646 + $0x194] sm:$0xf]
      %v1749 = vld [vmem:[%s1646 + $0x198] sm:$0xf]
      %v1750 = vld [vmem:[%s1646 + $0x19c] sm:$0xf]
      %v1751 = vld [vmem:[%s1646 + $0x1a0] sm:$0xf]
      %v1752 = vld [vmem:[%s1646 + $0x1a4] sm:$0xf]
      %v1753 = vld [vmem:[%s1646 + $0x1a8] sm:$0xf]
      %v1754 = vld [vmem:[%s1646 + $0x1ac] sm:$0xf]
      %v1755 = vld [vmem:[%s1646 + $0x1b0] sm:$0xf]
      %v1756 = vld [vmem:[%s1646 + $0x1b4] sm:$0xf]
      %v1757 = vld [vmem:[%s1646 + $0x1b8] sm:$0xf]
      %v1758 = vld [vmem:[%s1646 + $0x1bc] sm:$0xf]
      %v1759 = vld [vmem:[%s1646 + $0x1c0] sm:$0xf]
      %v1760 = vld [vmem:[%s1646 + $0x1c4] sm:$0xf]
      %v1761 = vld [vmem:[%s1646 + $0x1c8] sm:$0xf]
      %v1762 = vld [vmem:[%s1646 + $0x1cc] sm:$0xf]
      %v1763 = vld [vmem:[%s1646 + $0x1d0] sm:$0xf]
      %v1764 = vld [vmem:[%s1646 + $0x1d4] sm:$0xf]
      %v1765 = vld [vmem:[%s1646 + $0x1d8] sm:$0xf]
      %v1766 = vld [vmem:[%s1646 + $0x1dc] sm:$0xf]
      %v1767 = vld [vmem:[%s1646 + $0x1e0] sm:$0xf]
      %v1768 = vld [vmem:[%s1646 + $0x1e4] sm:$0xf]
      %v1769 = vld [vmem:[%s1646 + $0x1e8] sm:$0xf]
      %v1770 = vld [vmem:[%s1646 + $0x1ec] sm:$0xf]
      %v1771 = vld [vmem:[%s1646 + $0x1f0] sm:$0xf]
      %v1772 = vld [vmem:[%s1646 + $0x1f4] sm:$0xf]
      %v1773 = vld [vmem:[%s1646 + $0x1f8] sm:$0xf]
      %v1774 = vld [vmem:[%s1646 + $0x1fc] sm:$0xf]
      %v1775 = vld [vmem:[%s1646 + $0x200] sm:$0xf]
      %v1776 = vld [vmem:[%s1646 + $0x204] sm:$0xf]
      %v1777 = vld [vmem:[%s1646 + $0x208] sm:$0xf]
      %v1778 = vld [vmem:[%s1646 + $0x20c] sm:$0xf]
      %v1779 = vld [vmem:[%s1646 + $0x210] sm:$0xf]
      %v1780 = vld [vmem:[%s1646 + $0x214] sm:$0xf]
      %v1781 = vld [vmem:[%s1646 + $0x218] sm:$0xf]
      %v1782 = vld [vmem:[%s1646 + $0x21c] sm:$0xf]
      %v1783 = vld [vmem:[%s1646 + $0x220] sm:$0xf]
      %v1784 = vld [vmem:[%s1646 + $0x224] sm:$0xf]
      %v1785 = vld [vmem:[%s1646 + $0x228] sm:$0xf]
      %v1786 = vld [vmem:[%s1646 + $0x22c] sm:$0xf]
      %v1787 = vld [vmem:[%s1646 + $0x230] sm:$0xf]
      %v1788 = vld [vmem:[%s1646 + $0x234] sm:$0xf]
      %v1789 = vld [vmem:[%s1646 + $0x238] sm:$0xf]
      %v1790 = vld [vmem:[%s1646 + $0x23c] sm:$0xf]
      %v1791 = vpack.c.b16 %v1514, %v1512
      %v1792 = vpack.c.b16 %v1628, %v1626
      %v1793 = vpack.c.b16 %v1629, %v1627
      %v1794 = vpack.c.b16 %v1516, %v1514
      %v1795 = vpack.c.b16 %v1630, %v1628
      %v1796 = vpack.c.b16 %v1631, %v1629
      %v1797 = vpack.c.b16 %v1518, %v1516
      %v1798 = vpack.c.b16 %v1632, %v1630
      %v1799 = vpack.c.b16 %v1633, %v1631
      %v1800 = vpack.c.b16 %v1520, %v1518
      %v1801 = vpack.c.b16 %v1634, %v1632
      %v1802 = vpack.c.b16 %v1635, %v1633
      %v1803 = vpack.c.b16 %v1522, %v1520
      %v1804 = vpack.c.b16 %v1636, %v1634
      %v1805 = vpack.c.b16 %v1637, %v1635
      %v1806 = vpack.c.b16 %v1524, %v1522
      %v1807 = vpack.c.b16 %v1638, %v1636
      %v1808 = vpack.c.b16 %v1639, %v1637
      %v1809 = vpack.c.b16 %v1526, %v1524
      %v1810 = vpack.c.b16 %v1640, %v1638
      %v1811 = vpack.c.b16 %v1641, %v1639
      %v1812 = vpack.c.b16 %v1602, %v1526
      %v1813 = vpack.c.b16 %v1642, %v1640
      %v1814 = vpack.c.b16 %v1643, %v1641
      %v1815 = vpack.c.b16 %v1615, %v1602
      %v1816 = vpack.c.b16 %v1644, %v1642
      %v1817 = vpack.c.b16 %v1645, %v1643
      %v1989 = vunpack.c.l.b16 %v1647
      %v1990 = vunpack.c.l.b16 %v1648
      %v1991 = vunpack.c.l.b16 %v1649
      %v1992 = vunpack.c.l.b16 %v1650
      %v1993 = vunpack.c.l.b16 %v1651
      %v1994 = vunpack.c.l.b16 %v1652
      %v1995 = vunpack.c.l.b16 %v1653
      %v1996 = vunpack.c.l.b16 %v1654
      %v1997 = vunpack.c.l.b16 %v1655
      %v1998 = vunpack.c.l.b16 %v1656
      %v1999 = vunpack.c.l.b16 %v1657
      %v2000 = vunpack.c.l.b16 %v1658
      %v2001 = vunpack.c.l.b16 %v1659
      %v2002 = vunpack.c.l.b16 %v1660
      %v2003 = vunpack.c.l.b16 %v1661
      %v2004 = vunpack.c.l.b16 %v1662
      %v2005 = vunpack.c.l.b16 %v1663
      %v2006 = vunpack.c.l.b16 %v1664
      %v2007 = vunpack.c.l.b16 %v1665
      %v2008 = vunpack.c.l.b16 %v1666
      %v2009 = vunpack.c.l.b16 %v1667
      %v2010 = vunpack.c.l.b16 %v1668
      %v2011 = vunpack.c.l.b16 %v1669
      %v2012 = vunpack.c.l.b16 %v1670
      %v2013 = vunpack.c.l.b16 %v1671
      %v2014 = vunpack.c.l.b16 %v1672
      %v2015 = vunpack.c.l.b16 %v1673
      %v2016 = vunpack.c.l.b16 %v1674
      %v2017 = vunpack.c.l.b16 %v1675
      %v2018 = vunpack.c.l.b16 %v1676
      %v2019 = vunpack.c.l.b16 %v1677
      %v2020 = vunpack.c.l.b16 %v1678
      %v2021 = vunpack.c.l.b16 %v1679
      %v2022 = vunpack.c.l.b16 %v1680
      %v2023 = vunpack.c.l.b16 %v1681
      %v2024 = vunpack.c.l.b16 %v1682
      %v2025 = vunpack.c.l.b16 %v1683
      %v2026 = vunpack.c.l.b16 %v1684
      %v2027 = vunpack.c.l.b16 %v1685
      %v2028 = vunpack.c.l.b16 %v1686
      %v2029 = vunpack.c.l.b16 %v1687
      %v2030 = vunpack.c.l.b16 %v1688
      %v2031 = vunpack.c.l.b16 %v1689
      %v2032 = vunpack.c.l.b16 %v1690
      %v2033 = vunpack.c.l.b16 %v1691
      %v2034 = vunpack.c.l.b16 %v1692
      %v2035 = vunpack.c.l.b16 %v1693
      %v2036 = vunpack.c.l.b16 %v1694
      %v2037 = vunpack.c.l.b16 %v1695
      %v2038 = vunpack.c.l.b16 %v1696
      %v2039 = vunpack.c.l.b16 %v1697
      %v2040 = vunpack.c.l.b16 %v1698
      %v2041 = vunpack.c.l.b16 %v1699
      %v2042 = vunpack.c.l.b16 %v1700
      %v2043 = vunpack.c.l.b16 %v1701
      %v2044 = vunpack.c.l.b16 %v1702
      %v2045 = vunpack.c.l.b16 %v1703
      %v2046 = vunpack.c.l.b16 %v1704
      %v2047 = vunpack.c.l.b16 %v1705
      %v2048 = vunpack.c.l.b16 %v1706
      %v2049 = vunpack.c.l.b16 %v1707
      %v2050 = vunpack.c.l.b16 %v1708
      %v2051 = vunpack.c.l.b16 %v1709
      %v2052 = vunpack.c.l.b16 %v1710
      %v2053 = vunpack.c.l.b16 %v1711
      %v2054 = vunpack.c.l.b16 %v1712
      %v2055 = vunpack.c.l.b16 %v1713
      %v2056 = vunpack.c.l.b16 %v1714
      %v2057 = vunpack.c.l.b16 %v1715
      %v2058 = vunpack.c.l.b16 %v1716
      %v2059 = vunpack.c.l.b16 %v1717
      %v2060 = vunpack.c.l.b16 %v1718
      %v2061 = vunpack.c.l.b16 %v1719
      %v2062 = vunpack.c.l.b16 %v1720
      %v2063 = vunpack.c.l.b16 %v1721
      %v2064 = vunpack.c.l.b16 %v1722
      %v2065 = vunpack.c.l.b16 %v1723
      %v2066 = vunpack.c.l.b16 %v1724
      %v2067 = vunpack.c.l.b16 %v1725
      %v2068 = vunpack.c.l.b16 %v1726
      %v2069 = vunpack.c.l.b16 %v1727
      %v2070 = vunpack.c.l.b16 %v1728
      %v2071 = vunpack.c.l.b16 %v1729
      %v2072 = vunpack.c.l.b16 %v1730
      %v2073 = vunpack.c.l.b16 %v1731
      %v2074 = vunpack.c.l.b16 %v1732
      %v2075 = vunpack.c.l.b16 %v1733
      %v2076 = vunpack.c.l.b16 %v1734
      %v2077 = vunpack.c.l.b16 %v1735
      %v2078 = vunpack.c.l.b16 %v1736
      %v2079 = vunpack.c.l.b16 %v1737
      %v2080 = vunpack.c.l.b16 %v1738
      %v2081 = vunpack.c.l.b16 %v1739
      %v2082 = vunpack.c.l.b16 %v1740
      %v2083 = vunpack.c.l.b16 %v1741
      %v2084 = vunpack.c.l.b16 %v1742
      %v2085 = vunpack.c.l.b16 %v1743
      %v2086 = vunpack.c.l.b16 %v1744
      %v2087 = vunpack.c.l.b16 %v1745
      %v2088 = vunpack.c.l.b16 %v1746
      %v2089 = vunpack.c.l.b16 %v1747
      %v2090 = vunpack.c.l.b16 %v1748
      %v2091 = vunpack.c.l.b16 %v1749
      %v2092 = vunpack.c.l.b16 %v1750
      %v2093 = vunpack.c.l.b16 %v1751
      %v2094 = vunpack.c.l.b16 %v1752
      %v2095 = vunpack.c.l.b16 %v1753
      %v2096 = vunpack.c.l.b16 %v1754
      %v2097 = vunpack.c.l.b16 %v1755
      %v2098 = vunpack.c.l.b16 %v1756
      %v2099 = vunpack.c.l.b16 %v1757
      %v2100 = vunpack.c.l.b16 %v1758
      %v2101 = vunpack.c.l.b16 %v1759
      %v2102 = vunpack.c.l.b16 %v1760
      %v2103 = vunpack.c.l.b16 %v1761
      %v2104 = vunpack.c.l.b16 %v1762
      %v2105 = vunpack.c.l.b16 %v1763
      %v2106 = vunpack.c.l.b16 %v1764
      %v2107 = vunpack.c.l.b16 %v1765
      %v2108 = vunpack.c.l.b16 %v1766
      %v2109 = vunpack.c.l.b16 %v1767
      %v2110 = vunpack.c.l.b16 %v1768
      %v2111 = vunpack.c.l.b16 %v1769
      %v2112 = vunpack.c.l.b16 %v1770
      %v2113 = vunpack.c.l.b16 %v1771
      %v2114 = vunpack.c.l.b16 %v1772
      %v2115 = vunpack.c.l.b16 %v1773
      %v2116 = vunpack.c.l.b16 %v1774
      %v2117 = vunpack.c.l.b16 %v1775
      %v2118 = vunpack.c.l.b16 %v1776
      %v2119 = vunpack.c.l.b16 %v1777
      %v2120 = vunpack.c.l.b16 %v1778
      %v2121 = vunpack.c.l.b16 %v1779
      %v2122 = vunpack.c.l.b16 %v1780
      %v2123 = vunpack.c.l.b16 %v1781
      %v2124 = vunpack.c.l.b16 %v1782
      %v2125 = vunpack.c.l.b16 %v1783
      %v2126 = vunpack.c.l.b16 %v1784
      %v2127 = vunpack.c.l.b16 %v1785
      %v2128 = vunpack.c.l.b16 %v1786
      %v2129 = vunpack.c.l.b16 %v1787
      %v2130 = vunpack.c.l.b16 %v1788
      %v2131 = vunpack.c.l.b16 %v1789
      %v2132 = vunpack.c.l.b16 %v1790
      %v2133 = vpack.c.b16 %v1990, %v1989
      %v2134 = vpack.c.b16 %v1992, %v1991
      %v2135 = vpack.c.b16 %v1994, %v1993
      %v2136 = vpack.c.b16 %v1996, %v1995
      %v2137 = vpack.c.b16 %v1998, %v1997
      %v2138 = vpack.c.b16 %v2000, %v1999
      %v2139 = vpack.c.b16 %v2002, %v2001
      %v2140 = vpack.c.b16 %v2004, %v2003
      %v2141 = vpack.c.b16 %v2006, %v2005
      %v2142 = vpack.c.b16 %v2008, %v2007
      %v2143 = vpack.c.b16 %v2010, %v2009
      %v2144 = vpack.c.b16 %v2012, %v2011
      %v2145 = vpack.c.b16 %v2014, %v2013
      %v2146 = vpack.c.b16 %v2016, %v2015
      %v2147 = vpack.c.b16 %v2018, %v2017
      %v2148 = vpack.c.b16 %v2020, %v2019
      %v2149 = vpack.c.b16 %v2022, %v2021
      %v2150 = vpack.c.b16 %v2024, %v2023
      %v2151 = vpack.c.b16 %v2026, %v2025
      %v2152 = vpack.c.b16 %v2028, %v2027
      %v2153 = vpack.c.b16 %v2030, %v2029
      %v2154 = vpack.c.b16 %v2032, %v2031
      %v2155 = vpack.c.b16 %v2034, %v2033
      %v2156 = vpack.c.b16 %v2036, %v2035
      %v2157 = vpack.c.b16 %v2038, %v2037
      %v2158 = vpack.c.b16 %v2040, %v2039
      %v2159 = vpack.c.b16 %v2042, %v2041
      %v2160 = vpack.c.b16 %v2044, %v2043
      %v2161 = vpack.c.b16 %v2046, %v2045
      %v2162 = vpack.c.b16 %v2048, %v2047
      %v2163 = vpack.c.b16 %v2050, %v2049
      %v2164 = vpack.c.b16 %v2052, %v2051
      %v2165 = vpack.c.b16 %v2054, %v2053
      %v2166 = vpack.c.b16 %v2056, %v2055
      %v2167 = vpack.c.b16 %v2058, %v2057
      %v2168 = vpack.c.b16 %v2060, %v2059
      %v2169 = vpack.c.b16 %v2062, %v2061
      %v2170 = vpack.c.b16 %v2064, %v2063
      %v2171 = vpack.c.b16 %v2066, %v2065
      %v2172 = vpack.c.b16 %v2068, %v2067
      %v2173 = vpack.c.b16 %v2070, %v2069
      %v2174 = vpack.c.b16 %v2072, %v2071
      %v2175 = vpack.c.b16 %v2074, %v2073
      %v2176 = vpack.c.b16 %v2076, %v2075
      %v2177 = vpack.c.b16 %v2078, %v2077
      %v2178 = vpack.c.b16 %v2080, %v2079
      %v2179 = vpack.c.b16 %v2082, %v2081
      %v2180 = vpack.c.b16 %v2084, %v2083
      %v2181 = vpack.c.b16 %v2086, %v2085
      %v2182 = vpack.c.b16 %v2088, %v2087
      %v2183 = vpack.c.b16 %v2090, %v2089
      %v2184 = vpack.c.b16 %v2092, %v2091
      %v2185 = vpack.c.b16 %v2094, %v2093
      %v2186 = vpack.c.b16 %v2096, %v2095
      %v2187 = vpack.c.b16 %v2098, %v2097
      %v2188 = vpack.c.b16 %v2100, %v2099
      %v2189 = vpack.c.b16 %v2102, %v2101
      %v2190 = vpack.c.b16 %v2104, %v2103
      %v2191 = vpack.c.b16 %v2106, %v2105
      %v2192 = vpack.c.b16 %v2108, %v2107
      %v2193 = vpack.c.b16 %v2110, %v2109
      %v2194 = vpack.c.b16 %v2112, %v2111
      %v2195 = vpack.c.b16 %v2114, %v2113
      %v2196 = vpack.c.b16 %v2116, %v2115
      %v2197 = vpack.c.b16 %v2118, %v2117
      %v2198 = vpack.c.b16 %v2120, %v2119
      %v2199 = vpack.c.b16 %v2122, %v2121
      %v2200 = vpack.c.b16 %v2124, %v2123
      %v2201 = vpack.c.b16 %v2126, %v2125
      %v2202 = vpack.c.b16 %v2128, %v2127
      %v2203 = vpack.c.b16 %v2130, %v2129
      %v2204 = vpack.c.b16 %v2132, %v2131
      %2277 = vmatpush.bf16.msra.mxu0 %v2140
      %2278 = vmatpush.bf16.msra.mxu0 %v2139
      %2279 = vmatpush.bf16.msra.mxu0 %v2138
      %2280 = vmatpush.bf16.msra.mxu0 %v2137
      %2281 = vmatpush.bf16.msra.mxu0 %v2136
      %2282 = vmatpush.bf16.msra.mxu0 %v2135
      %2283 = vmatpush.bf16.msra.mxu0 %v2134
      %2284 = vmatpush.bf16.msra.mxu0 %v2133
      %2285 = vmatmul.bf16.gmra.mxu0 %v1791
      %v2286 = vpop.f32.mrf.mxu0
      %v2287 = vadd.f32 0.0, %v2286
      %v2288 = vpop.f32.mrf.mxu0
      %v2289 = vadd.f32 0.0, %v2288
      %2290 = vmatmul.bf16.gmra.mxu0 %v1797
      %v2291 = vpop.f32.mrf.mxu0
      %v2292 = vadd.f32 0.0, %v2291
      %v2293 = vpop.f32.mrf.mxu0
      %v2294 = vadd.f32 0.0, %v2293
      %2295 = vmatmul.bf16.gmra.mxu0 %v1803
      %v2296 = vpop.f32.mrf.mxu0
      %v2297 = vadd.f32 0.0, %v2296
      %v2298 = vpop.f32.mrf.mxu0
      %v2299 = vadd.f32 0.0, %v2298
      %2300 = vmatmul.bf16.gmra.mxu0 %v1809
      %v2301 = vpop.f32.mrf.mxu0
      %v2302 = vadd.f32 0.0, %v2301
      %v2303 = vpop.f32.mrf.mxu0
      %v2304 = vadd.f32 0.0, %v2303
      %2305 = vdwg.mxu0
      %2306 = vmatpush.bf16.msra.mxu0 %v2148
      %2307 = vmatpush.bf16.msra.mxu0 %v2147
      %2308 = vmatpush.bf16.msra.mxu0 %v2146
      %2309 = vmatpush.bf16.msra.mxu0 %v2145
      %2310 = vmatpush.bf16.msra.mxu0 %v2144
      %2311 = vmatpush.bf16.msra.mxu0 %v2143
      %2312 = vmatpush.bf16.msra.mxu0 %v2142
      %2313 = vmatpush.bf16.msra.mxu0 %v2141
      %2314 = vmatmul.bf16.gmra.mxu0 %v1792
      %v2315 = vpop.f32.mrf.mxu0
      %v2316 = vadd.f32 %v2287, %v2315
      %v2317 = vpop.f32.mrf.mxu0
      %v2318 = vadd.f32 %v2289, %v2317
      %2319 = vmatmul.bf16.gmra.mxu0 %v1798
      %v2320 = vpop.f32.mrf.mxu0
      %v2321 = vadd.f32 %v2292, %v2320
      %v2322 = vpop.f32.mrf.mxu0
      %v2323 = vadd.f32 %v2294, %v2322
      %2324 = vmatmul.bf16.gmra.mxu0 %v1804
      %v2325 = vpop.f32.mrf.mxu0
      %v2326 = vadd.f32 %v2297, %v2325
      %v2327 = vpop.f32.mrf.mxu0
      %v2328 = vadd.f32 %v2299, %v2327
      %2329 = vmatmul.bf16.gmra.mxu0 %v1810
      %v2330 = vpop.f32.mrf.mxu0
      %v2331 = vadd.f32 %v2302, %v2330
      %v2332 = vpop.f32.mrf.mxu0
      %v2333 = vadd.f32 %v2304, %v2332
      %2334 = vdwg.mxu0
      %2335 = vmatpush.bf16.msra.mxu0 %v2156
      %2336 = vmatpush.bf16.msra.mxu0 %v2155
      %2337 = vmatpush.bf16.msra.mxu0 %v2154
      %2338 = vmatpush.bf16.msra.mxu0 %v2153
      %2339 = vmatpush.bf16.msra.mxu0 %v2152
      %2340 = vmatpush.bf16.msra.mxu0 %v2151
      %2341 = vmatpush.bf16.msra.mxu0 %v2150
      %2342 = vmatpush.bf16.msra.mxu0 %v2149
      %2343 = vmatmul.bf16.gmra.mxu0 %v1793
      %v2344 = vpop.f32.mrf.mxu0
      %v2345 = vadd.f32 %v2316, %v2344
      %v2346 = vpop.f32.mrf.mxu0
      %v2347 = vadd.f32 %v2318, %v2346
      %2348 = vmatmul.bf16.gmra.mxu0 %v1799
      %v2349 = vpop.f32.mrf.mxu0
      %v2350 = vadd.f32 %v2321, %v2349
      %v2351 = vpop.f32.mrf.mxu0
      %v2352 = vadd.f32 %v2323, %v2351
      %2353 = vmatmul.bf16.gmra.mxu0 %v1805
      %v2354 = vpop.f32.mrf.mxu0
      %v2355 = vadd.f32 %v2326, %v2354
      %v2356 = vpop.f32.mrf.mxu0
      %v2357 = vadd.f32 %v2328, %v2356
      %2358 = vmatmul.bf16.gmra.mxu0 %v1811
      %v2359 = vpop.f32.mrf.mxu0
      %v2360 = vadd.f32 %v2331, %v2359
      %v2361 = vpop.f32.mrf.mxu0
      %v2362 = vadd.f32 %v2333, %v2361
      %2363 = vdwg.mxu0
      %2364 = vmatpush.bf16.msra.mxu0 %v2164
      %2365 = vmatpush.bf16.msra.mxu0 %v2163
      %2366 = vmatpush.bf16.msra.mxu0 %v2162
      %2367 = vmatpush.bf16.msra.mxu0 %v2161
      %2368 = vmatpush.bf16.msra.mxu0 %v2160
      %2369 = vmatpush.bf16.msra.mxu0 %v2159
      %2370 = vmatpush.bf16.msra.mxu0 %v2158
      %2371 = vmatpush.bf16.msra.mxu0 %v2157
      %2372 = vmatmul.bf16.gmra.mxu0 %v1794
      %v2373 = vpop.f32.mrf.mxu0
      %v2374 = vadd.f32 %v2345, %v2373
      %v2375 = vpop.f32.mrf.mxu0
      %v2376 = vadd.f32 %v2347, %v2375
      %2377 = vmatmul.bf16.gmra.mxu0 %v1800
      %v2378 = vpop.f32.mrf.mxu0
      %v2379 = vadd.f32 %v2350, %v2378
      %v2380 = vpop.f32.mrf.mxu0
      %v2381 = vadd.f32 %v2352, %v2380
      %2382 = vmatmul.bf16.gmra.mxu0 %v1806
      %v2383 = vpop.f32.mrf.mxu0
      %v2384 = vadd.f32 %v2355, %v2383
      %v2385 = vpop.f32.mrf.mxu0
      %v2386 = vadd.f32 %v2357, %v2385
      %2387 = vmatmul.bf16.gmra.mxu0 %v1812
      %v2388 = vpop.f32.mrf.mxu0
      %v2389 = vadd.f32 %v2360, %v2388
      %v2390 = vpop.f32.mrf.mxu0
      %v2391 = vadd.f32 %v2362, %v2390
      %2392 = vdwg.mxu0
      %2393 = vmatpush.bf16.msra.mxu0 %v2172
      %2394 = vmatpush.bf16.msra.mxu0 %v2171
      %2395 = vmatpush.bf16.msra.mxu0 %v2170
      %2396 = vmatpush.bf16.msra.mxu0 %v2169
      %2397 = vmatpush.bf16.msra.mxu0 %v2168
      %2398 = vmatpush.bf16.msra.mxu0 %v2167
      %2399 = vmatpush.bf16.msra.mxu0 %v2166
      %2400 = vmatpush.bf16.msra.mxu0 %v2165
      %2401 = vmatmul.bf16.gmra.mxu0 %v1795
      %v2402 = vpop.f32.mrf.mxu0
      %v2403 = vadd.f32 %v2374, %v2402
      %v2404 = vpop.f32.mrf.mxu0
      %v2405 = vadd.f32 %v2376, %v2404
      %2406 = vmatmul.bf16.gmra.mxu0 %v1801
      %v2407 = vpop.f32.mrf.mxu0
      %v2408 = vadd.f32 %v2379, %v2407
      %v2409 = vpop.f32.mrf.mxu0
      %v2410 = vadd.f32 %v2381, %v2409
      %2411 = vmatmul.bf16.gmra.mxu0 %v1807
      %v2412 = vpop.f32.mrf.mxu0
      %v2413 = vadd.f32 %v2384, %v2412
      %v2414 = vpop.f32.mrf.mxu0
      %v2415 = vadd.f32 %v2386, %v2414
      %2416 = vmatmul.bf16.gmra.mxu0 %v1813
      %v2417 = vpop.f32.mrf.mxu0
      %v2418 = vadd.f32 %v2389, %v2417
      %v2419 = vpop.f32.mrf.mxu0
      %v2420 = vadd.f32 %v2391, %v2419
      %2421 = vdwg.mxu0
      %2422 = vmatpush.bf16.msra.mxu0 %v2180
      %2423 = vmatpush.bf16.msra.mxu0 %v2179
      %2424 = vmatpush.bf16.msra.mxu0 %v2178
      %2425 = vmatpush.bf16.msra.mxu0 %v2177
      %2426 = vmatpush.bf16.msra.mxu0 %v2176
      %2427 = vmatpush.bf16.msra.mxu0 %v2175
      %2428 = vmatpush.bf16.msra.mxu0 %v2174
      %2429 = vmatpush.bf16.msra.mxu0 %v2173
      %2430 = vmatmul.bf16.gmra.mxu0 %v1796
      %v2431 = vpop.f32.mrf.mxu0
      %v2432 = vadd.f32 %v2403, %v2431
      %v2433 = vpop.f32.mrf.mxu0
      %v2434 = vadd.f32 %v2405, %v2433
      %2435 = vmatmul.bf16.gmra.mxu0 %v1802
      %v2436 = vpop.f32.mrf.mxu0
      %v2437 = vadd.f32 %v2408, %v2436
      %v2438 = vpop.f32.mrf.mxu0
      %v2439 = vadd.f32 %v2410, %v2438
      %2440 = vmatmul.bf16.gmra.mxu0 %v1808
      %v2441 = vpop.f32.mrf.mxu0
      %v2442 = vadd.f32 %v2413, %v2441
      %v2443 = vpop.f32.mrf.mxu0
      %v2444 = vadd.f32 %v2415, %v2443
      %2445 = vmatmul.bf16.gmra.mxu0 %v1814
      %v2446 = vpop.f32.mrf.mxu0
      %v2447 = vadd.f32 %v2418, %v2446
      %v2448 = vpop.f32.mrf.mxu0
      %v2449 = vadd.f32 %v2420, %v2448
      %2450 = vdwg.mxu0
      %2451 = vmatpush.bf16.msra.mxu0 %v2188
      %2452 = vmatpush.bf16.msra.mxu0 %v2187
      %2453 = vmatpush.bf16.msra.mxu0 %v2186
      %2454 = vmatpush.bf16.msra.mxu0 %v2185
      %2455 = vmatpush.bf16.msra.mxu0 %v2184
      %2456 = vmatpush.bf16.msra.mxu0 %v2183
      %2457 = vmatpush.bf16.msra.mxu0 %v2182
      %2458 = vmatpush.bf16.msra.mxu0 %v2181
      %2459 = vmatmul.bf16.gmra.mxu0 %v1797
      %v2460 = vpop.f32.mrf.mxu0
      %v2461 = vadd.f32 %v2432, %v2460
      %v2462 = vpop.f32.mrf.mxu0
      %v2463 = vadd.f32 %v2434, %v2462
      %2464 = vmatmul.bf16.gmra.mxu0 %v1803
      %v2465 = vpop.f32.mrf.mxu0
      %v2466 = vadd.f32 %v2437, %v2465
      %v2467 = vpop.f32.mrf.mxu0
      %v2468 = vadd.f32 %v2439, %v2467
      %2469 = vmatmul.bf16.gmra.mxu0 %v1809
      %v2470 = vpop.f32.mrf.mxu0
      %v2471 = vadd.f32 %v2442, %v2470
      %v2472 = vpop.f32.mrf.mxu0
      %v2473 = vadd.f32 %v2444, %v2472
      %2474 = vmatmul.bf16.gmra.mxu0 %v1815
      %v2475 = vpop.f32.mrf.mxu0
      %v2476 = vadd.f32 %v2447, %v2475
      %v2477 = vpop.f32.mrf.mxu0
      %v2478 = vadd.f32 %v2449, %v2477
      %2479 = vdwg.mxu0
      %2480 = vmatpush.bf16.msra.mxu0 %v2196
      %2481 = vmatpush.bf16.msra.mxu0 %v2195
      %2482 = vmatpush.bf16.msra.mxu0 %v2194
      %2483 = vmatpush.bf16.msra.mxu0 %v2193
      %2484 = vmatpush.bf16.msra.mxu0 %v2192
      %2485 = vmatpush.bf16.msra.mxu0 %v2191
      %2486 = vmatpush.bf16.msra.mxu0 %v2190
      %2487 = vmatpush.bf16.msra.mxu0 %v2189
      %2488 = vmatmul.bf16.gmra.mxu0 %v1798
      %v2489 = vpop.f32.mrf.mxu0
      %v2490 = vadd.f32 %v2461, %v2489
      %v2491 = vpop.f32.mrf.mxu0
      %v2492 = vadd.f32 %v2463, %v2491
      %2493 = vmatmul.bf16.gmra.mxu0 %v1804
      %v2494 = vpop.f32.mrf.mxu0
      %v2495 = vadd.f32 %v2466, %v2494
      %v2496 = vpop.f32.mrf.mxu0
      %v2497 = vadd.f32 %v2468, %v2496
      %2498 = vmatmul.bf16.gmra.mxu0 %v1810
      %v2499 = vpop.f32.mrf.mxu0
      %v2500 = vadd.f32 %v2471, %v2499
      %v2501 = vpop.f32.mrf.mxu0
      %v2502 = vadd.f32 %v2473, %v2501
      %2503 = vmatmul.bf16.gmra.mxu0 %v1816
      %v2504 = vpop.f32.mrf.mxu0
      %v2505 = vadd.f32 %v2476, %v2504
      %v2506 = vpop.f32.mrf.mxu0
      %v2507 = vadd.f32 %v2478, %v2506
      %2508 = vdwg.mxu0
      %2509 = vmatpush.bf16.msra.mxu0 %v2204
      %2510 = vmatpush.bf16.msra.mxu0 %v2203
      %2511 = vmatpush.bf16.msra.mxu0 %v2202
      %2512 = vmatpush.bf16.msra.mxu0 %v2201
      %2513 = vmatpush.bf16.msra.mxu0 %v2200
      %2514 = vmatpush.bf16.msra.mxu0 %v2199
      %2515 = vmatpush.bf16.msra.mxu0 %v2198
      %2516 = vmatpush.bf16.msra.mxu0 %v2197
      %2517 = vmatmul.bf16.gmra.mxu0 %v1799
      %v2518 = vpop.f32.mrf.mxu0
      %v2519 = vadd.f32 %v2490, %v2518
      %v2520 = vpop.f32.mrf.mxu0
      %v2521 = vadd.f32 %v2492, %v2520
      %2522 = vmatmul.bf16.gmra.mxu0 %v1805
      %v2523 = vpop.f32.mrf.mxu0
      %v2524 = vadd.f32 %v2495, %v2523
      %v2525 = vpop.f32.mrf.mxu0
      %v2526 = vadd.f32 %v2497, %v2525
      %2527 = vmatmul.bf16.gmra.mxu0 %v1811
      %v2528 = vpop.f32.mrf.mxu0
      %v2529 = vadd.f32 %v2500, %v2528
      %v2530 = vpop.f32.mrf.mxu0
      %v2531 = vadd.f32 %v2502, %v2530
      %2532 = vmatmul.bf16.gmra.mxu0 %v1817
      %v2533 = vpop.f32.mrf.mxu0
      %v2534 = vadd.f32 %v2505, %v2533
      %v2535 = vpop.f32.mrf.mxu0
      %v2536 = vadd.f32 %v2507, %v2535
      %2537 = vdwg.mxu0
      %v2538 = vadd.f32 %v1468, %v2519
      %v2539 = vadd.f32 %v1469, %v2521
      %v2540 = vadd.f32 %v1470, %v2524
      %v2541 = vadd.f32 %v1471, %v2526
      %v2542 = vadd.f32 %v1472, %v2529
      %v2543 = vadd.f32 %v1473, %v2531
      %v2544 = vadd.f32 %v1474, %v2534
      %v2545 = vadd.f32 %v1475, %v2536
      %v2546 = vld [vmem:[%s371] sm:$0xf]
      %v2547 = vld [vmem:[%s371 + $0x4] sm:$0x1]
      %v2548 = vld [vmem:[%s371 + $0x8] sm:$0xf]
      %v2549 = vld [vmem:[%s371 + $0xc] sm:$0x1]
      %v2550 = vld [vmem:[%s371 + $0x10] sm:$0xf]
      %v2551 = vld [vmem:[%s371 + $0x14] sm:$0x1]
      %v2552 = vld [vmem:[%s371 + $0x18] sm:$0xf]
      %v2553 = vld [vmem:[%s371 + $0x1c] sm:$0x1]
      %v2554 = vld [vmem:[%s371 + $0x20] sm:$0xf]
      %v2555 = vld [vmem:[%s371 + $0x24] sm:$0x1]
      %v2556 = vld [vmem:[%s371 + $0x28] sm:$0xf]
      %v2557 = vld [vmem:[%s371 + $0x2c] sm:$0x1]
      %v2558 = vld [vmem:[%s371 + $0x30] sm:$0xf]
      %v2559 = vld [vmem:[%s371 + $0x34] sm:$0x1]
      %v2560 = vld [vmem:[%s371 + $0x38] sm:$0xf]
      %v2561 = vld [vmem:[%s371 + $0x3c] sm:$0x1]
      %v2562 = vld [vmem:[%s371 + $0x40] sm:$0xf]
      %v2563 = vld [vmem:[%s371 + $0x44] sm:$0x1]
      %v2564 = vld [vmem:[%s371 + $0x48] sm:$0xf]
      %v2565 = vld [vmem:[%s371 + $0x4c] sm:$0x1]
      %v2582 = vunpack.c.l.b16 %v2546
      %v2583 = vunpack.c.l.b16 %v2547
      %v2584 = vunpack.c.l.b16 %v2548
      %v2585 = vunpack.c.l.b16 %v2549
      %v2586 = vunpack.c.l.b16 %v2550
      %v2587 = vunpack.c.l.b16 %v2551
      %v2588 = vunpack.c.l.b16 %v2552
      %v2589 = vunpack.c.l.b16 %v2553
      %v2590 = vunpack.c.l.b16 %v2554
      %v2591 = vunpack.c.l.b16 %v2555
      %v2592 = vunpack.c.l.b16 %v2556
      %v2593 = vunpack.c.l.b16 %v2557
      %v2594 = vunpack.c.l.b16 %v2558
      %v2595 = vunpack.c.l.b16 %v2559
      %v2596 = vunpack.c.l.b16 %v2560
      %v2597 = vunpack.c.l.b16 %v2561
      %v2598 = vpack.c.b16 %v2583, %v2582
      %v2599 = vpack.c.b16 %v2585, %v2584
      %v2600 = vpack.c.b16 %v2587, %v2586
      %v2601 = vpack.c.b16 %v2589, %v2588
      %v2602 = vpack.c.b16 %v2591, %v2590
      %v2603 = vpack.c.b16 %v2593, %v2592
      %v2604 = vpack.c.b16 %v2595, %v2594
      %v2605 = vpack.c.b16 %v2597, %v2596
      %v2607 = vshrl.u32 %v2598, 16
      %v2609 = vshll.u32 %v2598, 16
      %v2611 = vrot.slane %v2609, 1
      %v2612 = vor.u32 %v2607, %v2611
      %v2614 = vshrl.u32 %v2599, 16
      %v2616 = vshll.u32 %v2599, 16
      %v2618 = vrot.slane %v2616, 1
      %v2619 = vor.u32 %v2614, %v2618
      %v2621 = vshrl.u32 %v2600, 16
      %v2623 = vshll.u32 %v2600, 16
      %v2625 = vrot.slane %v2623, 1
      %v2626 = vor.u32 %v2621, %v2625
      %v2628 = vshrl.u32 %v2601, 16
      %v2630 = vshll.u32 %v2601, 16
      %v2632 = vrot.slane %v2630, 1
      %v2633 = vor.u32 %v2628, %v2632
      %v2635 = vshrl.u32 %v2602, 16
      %v2637 = vshll.u32 %v2602, 16
      %v2639 = vrot.slane %v2637, 1
      %v2640 = vor.u32 %v2635, %v2639
      %v2642 = vshrl.u32 %v2603, 16
      %v2644 = vshll.u32 %v2603, 16
      %v2646 = vrot.slane %v2644, 1
      %v2647 = vor.u32 %v2642, %v2646
      %v2649 = vshrl.u32 %v2604, 16
      %v2651 = vshll.u32 %v2604, 16
      %v2653 = vrot.slane %v2651, 1
      %v2654 = vor.u32 %v2649, %v2653
      %v2656 = vshrl.u32 %v2605, 16
      %v2658 = vshll.u32 %v2605, 16
      %v2660 = vrot.slane %v2658, 1
      %v2661 = vor.u32 %v2656, %v2660
      %v2662 = vrot.slane %v2598, 1
      %v2663 = vrot.slane %v2599, 1
      %v2664 = vrot.slane %v2600, 1
      %v2665 = vrot.slane %v2601, 1
      %v2666 = vrot.slane %v2602, 1
      %v2667 = vrot.slane %v2603, 1
      %v2668 = vrot.slane %v2604, 1
      %v2669 = vrot.slane %v2605, 1
      %v2672 = vunpack.c.l.b16 %v2562
      %v2673 = vunpack.c.l.b16 %v2563
      %v2674 = vpack.c.b16 %v2673, %v2672
      %v2676 = vshrl.u32 %v2674, 16
      %v2678 = vshll.u32 %v2674, 16
      %v2680 = vrot.slane %v2678, 1
      %v2681 = vor.u32 %v2676, %v2680
      %v2682 = vrot.slane %v2674, 1
      %v2685 = vunpack.c.l.b16 %v2564
      %v2686 = vunpack.c.l.b16 %v2565
      %v2687 = vpack.c.b16 %v2686, %v2685
      %v2689 = vshrl.u32 %v2687, 16
      %v2691 = vshll.u32 %v2687, 16
      %v2693 = vrot.slane %v2691, 1
      %v2694 = vor.u32 %v2689, %v2693
      %v2695 = vrot.slane %v2687, 1
      %v2696 = vunpack.c.l.b16 %v2612
      %v2697 = vunpack.c.l.b16 %v2662
      %v2698 = vunpack.c.l.b16 %v2619
      %v2699 = vunpack.c.l.b16 %v2663
      %v2700 = vunpack.c.l.b16 %v2626
      %v2701 = vunpack.c.l.b16 %v2664
      %v2702 = vunpack.c.l.b16 %v2633
      %v2703 = vunpack.c.l.b16 %v2665
      %v2704 = vunpack.c.l.b16 %v2640
      %v2705 = vunpack.c.l.b16 %v2666
      %v2706 = vunpack.c.l.b16 %v2647
      %v2707 = vunpack.c.l.b16 %v2667
      %v2708 = vunpack.c.l.b16 %v2654
      %v2709 = vunpack.c.l.b16 %v2668
      %v2710 = vunpack.c.l.b16 %v2661
      %v2711 = vunpack.c.l.b16 %v2669
      %v2712 = vunpack.c.l.b16 %v2681
      %v2713 = vunpack.c.l.b16 %v2682
      %v2714 = vunpack.c.l.b16 %v2694
      %v2715 = vunpack.c.l.b16 %v2695
      %s2716 = scalar_lea.vmem %s3, 1152
      %v2717 = vld [vmem:[%s2716] sm:$0xf]
      %v2718 = vld [vmem:[%s2716 + $0x4] sm:$0xf]
      %v2719 = vld [vmem:[%s2716 + $0x8] sm:$0xf]
      %v2720 = vld [vmem:[%s2716 + $0xc] sm:$0xf]
      %v2721 = vld [vmem:[%s2716 + $0x10] sm:$0xf]
      %v2722 = vld [vmem:[%s2716 + $0x14] sm:$0xf]
      %v2723 = vld [vmem:[%s2716 + $0x18] sm:$0xf]
      %v2724 = vld [vmem:[%s2716 + $0x1c] sm:$0xf]
      %v2725 = vld [vmem:[%s2716 + $0x20] sm:$0xf]
      %v2726 = vld [vmem:[%s2716 + $0x24] sm:$0xf]
      %v2727 = vld [vmem:[%s2716 + $0x28] sm:$0xf]
      %v2728 = vld [vmem:[%s2716 + $0x2c] sm:$0xf]
      %v2729 = vld [vmem:[%s2716 + $0x30] sm:$0xf]
      %v2730 = vld [vmem:[%s2716 + $0x34] sm:$0xf]
      %v2731 = vld [vmem:[%s2716 + $0x38] sm:$0xf]
      %v2732 = vld [vmem:[%s2716 + $0x3c] sm:$0xf]
      %v2733 = vld [vmem:[%s2716 + $0x40] sm:$0xf]
      %v2734 = vld [vmem:[%s2716 + $0x44] sm:$0xf]
      %v2735 = vld [vmem:[%s2716 + $0x48] sm:$0xf]
      %v2736 = vld [vmem:[%s2716 + $0x4c] sm:$0xf]
      %v2737 = vld [vmem:[%s2716 + $0x50] sm:$0xf]
      %v2738 = vld [vmem:[%s2716 + $0x54] sm:$0xf]
      %v2739 = vld [vmem:[%s2716 + $0x58] sm:$0xf]
      %v2740 = vld [vmem:[%s2716 + $0x5c] sm:$0xf]
      %v2741 = vld [vmem:[%s2716 + $0x60] sm:$0xf]
      %v2742 = vld [vmem:[%s2716 + $0x64] sm:$0xf]
      %v2743 = vld [vmem:[%s2716 + $0x68] sm:$0xf]
      %v2744 = vld [vmem:[%s2716 + $0x6c] sm:$0xf]
      %v2745 = vld [vmem:[%s2716 + $0x70] sm:$0xf]
      %v2746 = vld [vmem:[%s2716 + $0x74] sm:$0xf]
      %v2747 = vld [vmem:[%s2716 + $0x78] sm:$0xf]
      %v2748 = vld [vmem:[%s2716 + $0x7c] sm:$0xf]
      %v2749 = vld [vmem:[%s2716 + $0x80] sm:$0xf]
      %v2750 = vld [vmem:[%s2716 + $0x84] sm:$0xf]
      %v2751 = vld [vmem:[%s2716 + $0x88] sm:$0xf]
      %v2752 = vld [vmem:[%s2716 + $0x8c] sm:$0xf]
      %v2753 = vld [vmem:[%s2716 + $0x90] sm:$0xf]
      %v2754 = vld [vmem:[%s2716 + $0x94] sm:$0xf]
      %v2755 = vld [vmem:[%s2716 + $0x98] sm:$0xf]
      %v2756 = vld [vmem:[%s2716 + $0x9c] sm:$0xf]
      %v2757 = vld [vmem:[%s2716 + $0xa0] sm:$0xf]
      %v2758 = vld [vmem:[%s2716 + $0xa4] sm:$0xf]
      %v2759 = vld [vmem:[%s2716 + $0xa8] sm:$0xf]
      %v2760 = vld [vmem:[%s2716 + $0xac] sm:$0xf]
      %v2761 = vld [vmem:[%s2716 + $0xb0] sm:$0xf]
      %v2762 = vld [vmem:[%s2716 + $0xb4] sm:$0xf]
      %v2763 = vld [vmem:[%s2716 + $0xb8] sm:$0xf]
      %v2764 = vld [vmem:[%s2716 + $0xbc] sm:$0xf]
      %v2765 = vld [vmem:[%s2716 + $0xc0] sm:$0xf]
      %v2766 = vld [vmem:[%s2716 + $0xc4] sm:$0xf]
      %v2767 = vld [vmem:[%s2716 + $0xc8] sm:$0xf]
      %v2768 = vld [vmem:[%s2716 + $0xcc] sm:$0xf]
      %v2769 = vld [vmem:[%s2716 + $0xd0] sm:$0xf]
      %v2770 = vld [vmem:[%s2716 + $0xd4] sm:$0xf]
      %v2771 = vld [vmem:[%s2716 + $0xd8] sm:$0xf]
      %v2772 = vld [vmem:[%s2716 + $0xdc] sm:$0xf]
      %v2773 = vld [vmem:[%s2716 + $0xe0] sm:$0xf]
      %v2774 = vld [vmem:[%s2716 + $0xe4] sm:$0xf]
      %v2775 = vld [vmem:[%s2716 + $0xe8] sm:$0xf]
      %v2776 = vld [vmem:[%s2716 + $0xec] sm:$0xf]
      %v2777 = vld [vmem:[%s2716 + $0xf0] sm:$0xf]
      %v2778 = vld [vmem:[%s2716 + $0xf4] sm:$0xf]
      %v2779 = vld [vmem:[%s2716 + $0xf8] sm:$0xf]
      %v2780 = vld [vmem:[%s2716 + $0xfc] sm:$0xf]
      %v2781 = vld [vmem:[%s2716 + $0x100] sm:$0xf]
      %v2782 = vld [vmem:[%s2716 + $0x104] sm:$0xf]
      %v2783 = vld [vmem:[%s2716 + $0x108] sm:$0xf]
      %v2784 = vld [vmem:[%s2716 + $0x10c] sm:$0xf]
      %v2785 = vld [vmem:[%s2716 + $0x110] sm:$0xf]
      %v2786 = vld [vmem:[%s2716 + $0x114] sm:$0xf]
      %v2787 = vld [vmem:[%s2716 + $0x118] sm:$0xf]
      %v2788 = vld [vmem:[%s2716 + $0x11c] sm:$0xf]
      %v2789 = vld [vmem:[%s2716 + $0x120] sm:$0xf]
      %v2790 = vld [vmem:[%s2716 + $0x124] sm:$0xf]
      %v2791 = vld [vmem:[%s2716 + $0x128] sm:$0xf]
      %v2792 = vld [vmem:[%s2716 + $0x12c] sm:$0xf]
      %v2793 = vld [vmem:[%s2716 + $0x130] sm:$0xf]
      %v2794 = vld [vmem:[%s2716 + $0x134] sm:$0xf]
      %v2795 = vld [vmem:[%s2716 + $0x138] sm:$0xf]
      %v2796 = vld [vmem:[%s2716 + $0x13c] sm:$0xf]
      %v2797 = vld [vmem:[%s2716 + $0x140] sm:$0xf]
      %v2798 = vld [vmem:[%s2716 + $0x144] sm:$0xf]
      %v2799 = vld [vmem:[%s2716 + $0x148] sm:$0xf]
      %v2800 = vld [vmem:[%s2716 + $0x14c] sm:$0xf]
      %v2801 = vld [vmem:[%s2716 + $0x150] sm:$0xf]
      %v2802 = vld [vmem:[%s2716 + $0x154] sm:$0xf]
      %v2803 = vld [vmem:[%s2716 + $0x158] sm:$0xf]
      %v2804 = vld [vmem:[%s2716 + $0x15c] sm:$0xf]
      %v2805 = vld [vmem:[%s2716 + $0x160] sm:$0xf]
      %v2806 = vld [vmem:[%s2716 + $0x164] sm:$0xf]
      %v2807 = vld [vmem:[%s2716 + $0x168] sm:$0xf]
      %v2808 = vld [vmem:[%s2716 + $0x16c] sm:$0xf]
      %v2809 = vld [vmem:[%s2716 + $0x170] sm:$0xf]
      %v2810 = vld [vmem:[%s2716 + $0x174] sm:$0xf]
      %v2811 = vld [vmem:[%s2716 + $0x178] sm:$0xf]
      %v2812 = vld [vmem:[%s2716 + $0x17c] sm:$0xf]
      %v2813 = vld [vmem:[%s2716 + $0x180] sm:$0xf]
      %v2814 = vld [vmem:[%s2716 + $0x184] sm:$0xf]
      %v2815 = vld [vmem:[%s2716 + $0x188] sm:$0xf]
      %v2816 = vld [vmem:[%s2716 + $0x18c] sm:$0xf]
      %v2817 = vld [vmem:[%s2716 + $0x190] sm:$0xf]
      %v2818 = vld [vmem:[%s2716 + $0x194] sm:$0xf]
      %v2819 = vld [vmem:[%s2716 + $0x198] sm:$0xf]
      %v2820 = vld [vmem:[%s2716 + $0x19c] sm:$0xf]
      %v2821 = vld [vmem:[%s2716 + $0x1a0] sm:$0xf]
      %v2822 = vld [vmem:[%s2716 + $0x1a4] sm:$0xf]
      %v2823 = vld [vmem:[%s2716 + $0x1a8] sm:$0xf]
      %v2824 = vld [vmem:[%s2716 + $0x1ac] sm:$0xf]
      %v2825 = vld [vmem:[%s2716 + $0x1b0] sm:$0xf]
      %v2826 = vld [vmem:[%s2716 + $0x1b4] sm:$0xf]
      %v2827 = vld [vmem:[%s2716 + $0x1b8] sm:$0xf]
      %v2828 = vld [vmem:[%s2716 + $0x1bc] sm:$0xf]
      %v2829 = vld [vmem:[%s2716 + $0x1c0] sm:$0xf]
      %v2830 = vld [vmem:[%s2716 + $0x1c4] sm:$0xf]
      %v2831 = vld [vmem:[%s2716 + $0x1c8] sm:$0xf]
      %v2832 = vld [vmem:[%s2716 + $0x1cc] sm:$0xf]
      %v2833 = vld [vmem:[%s2716 + $0x1d0] sm:$0xf]
      %v2834 = vld [vmem:[%s2716 + $0x1d4] sm:$0xf]
      %v2835 = vld [vmem:[%s2716 + $0x1d8] sm:$0xf]
      %v2836 = vld [vmem:[%s2716 + $0x1dc] sm:$0xf]
      %v2837 = vld [vmem:[%s2716 + $0x1e0] sm:$0xf]
      %v2838 = vld [vmem:[%s2716 + $0x1e4] sm:$0xf]
      %v2839 = vld [vmem:[%s2716 + $0x1e8] sm:$0xf]
      %v2840 = vld [vmem:[%s2716 + $0x1ec] sm:$0xf]
      %v2841 = vld [vmem:[%s2716 + $0x1f0] sm:$0xf]
      %v2842 = vld [vmem:[%s2716 + $0x1f4] sm:$0xf]
      %v2843 = vld [vmem:[%s2716 + $0x1f8] sm:$0xf]
      %v2844 = vld [vmem:[%s2716 + $0x1fc] sm:$0xf]
      %v2845 = vld [vmem:[%s2716 + $0x200] sm:$0xf]
      %v2846 = vld [vmem:[%s2716 + $0x204] sm:$0xf]
      %v2847 = vld [vmem:[%s2716 + $0x208] sm:$0xf]
      %v2848 = vld [vmem:[%s2716 + $0x20c] sm:$0xf]
      %v2849 = vld [vmem:[%s2716 + $0x210] sm:$0xf]
      %v2850 = vld [vmem:[%s2716 + $0x214] sm:$0xf]
      %v2851 = vld [vmem:[%s2716 + $0x218] sm:$0xf]
      %v2852 = vld [vmem:[%s2716 + $0x21c] sm:$0xf]
      %v2853 = vld [vmem:[%s2716 + $0x220] sm:$0xf]
      %v2854 = vld [vmem:[%s2716 + $0x224] sm:$0xf]
      %v2855 = vld [vmem:[%s2716 + $0x228] sm:$0xf]
      %v2856 = vld [vmem:[%s2716 + $0x22c] sm:$0xf]
      %v2857 = vld [vmem:[%s2716 + $0x230] sm:$0xf]
      %v2858 = vld [vmem:[%s2716 + $0x234] sm:$0xf]
      %v2859 = vld [vmem:[%s2716 + $0x238] sm:$0xf]
      %v2860 = vld [vmem:[%s2716 + $0x23c] sm:$0xf]
      %v2861 = vpack.c.b16 %v2584, %v2582
      %v2862 = vpack.c.b16 %v2698, %v2696
      %v2863 = vpack.c.b16 %v2699, %v2697
      %v2864 = vpack.c.b16 %v2586, %v2584
      %v2865 = vpack.c.b16 %v2700, %v2698
      %v2866 = vpack.c.b16 %v2701, %v2699
      %v2867 = vpack.c.b16 %v2588, %v2586
      %v2868 = vpack.c.b16 %v2702, %v2700
      %v2869 = vpack.c.b16 %v2703, %v2701
      %v2870 = vpack.c.b16 %v2590, %v2588
      %v2871 = vpack.c.b16 %v2704, %v2702
      %v2872 = vpack.c.b16 %v2705, %v2703
      %v2873 = vpack.c.b16 %v2592, %v2590
      %v2874 = vpack.c.b16 %v2706, %v2704
      %v2875 = vpack.c.b16 %v2707, %v2705
      %v2876 = vpack.c.b16 %v2594, %v2592
      %v2877 = vpack.c.b16 %v2708, %v2706
      %v2878 = vpack.c.b16 %v2709, %v2707
      %v2879 = vpack.c.b16 %v2596, %v2594
      %v2880 = vpack.c.b16 %v2710, %v2708
      %v2881 = vpack.c.b16 %v2711, %v2709
      %v2882 = vpack.c.b16 %v2672, %v2596
      %v2883 = vpack.c.b16 %v2712, %v2710
      %v2884 = vpack.c.b16 %v2713, %v2711
      %v2885 = vpack.c.b16 %v2685, %v2672
      %v2886 = vpack.c.b16 %v2714, %v2712
      %v2887 = vpack.c.b16 %v2715, %v2713
      %v3059 = vunpack.c.l.b16 %v2717
      %v3060 = vunpack.c.l.b16 %v2718
      %v3061 = vunpack.c.l.b16 %v2719
      %v3062 = vunpack.c.l.b16 %v2720
      %v3063 = vunpack.c.l.b16 %v2721
      %v3064 = vunpack.c.l.b16 %v2722
      %v3065 = vunpack.c.l.b16 %v2723
      %v3066 = vunpack.c.l.b16 %v2724
      %v3067 = vunpack.c.l.b16 %v2725
      %v3068 = vunpack.c.l.b16 %v2726
      %v3069 = vunpack.c.l.b16 %v2727
      %v3070 = vunpack.c.l.b16 %v2728
      %v3071 = vunpack.c.l.b16 %v2729
      %v3072 = vunpack.c.l.b16 %v2730
      %v3073 = vunpack.c.l.b16 %v2731
      %v3074 = vunpack.c.l.b16 %v2732
      %v3075 = vunpack.c.l.b16 %v2733
      %v3076 = vunpack.c.l.b16 %v2734
      %v3077 = vunpack.c.l.b16 %v2735
      %v3078 = vunpack.c.l.b16 %v2736
      %v3079 = vunpack.c.l.b16 %v2737
      %v3080 = vunpack.c.l.b16 %v2738
      %v3081 = vunpack.c.l.b16 %v2739
      %v3082 = vunpack.c.l.b16 %v2740
      %v3083 = vunpack.c.l.b16 %v2741
      %v3084 = vunpack.c.l.b16 %v2742
      %v3085 = vunpack.c.l.b16 %v2743
      %v3086 = vunpack.c.l.b16 %v2744
      %v3087 = vunpack.c.l.b16 %v2745
      %v3088 = vunpack.c.l.b16 %v2746
      %v3089 = vunpack.c.l.b16 %v2747
      %v3090 = vunpack.c.l.b16 %v2748
      %v3091 = vunpack.c.l.b16 %v2749
      %v3092 = vunpack.c.l.b16 %v2750
      %v3093 = vunpack.c.l.b16 %v2751
      %v3094 = vunpack.c.l.b16 %v2752
      %v3095 = vunpack.c.l.b16 %v2753
      %v3096 = vunpack.c.l.b16 %v2754
      %v3097 = vunpack.c.l.b16 %v2755
      %v3098 = vunpack.c.l.b16 %v2756
      %v3099 = vunpack.c.l.b16 %v2757
      %v3100 = vunpack.c.l.b16 %v2758
      %v3101 = vunpack.c.l.b16 %v2759
      %v3102 = vunpack.c.l.b16 %v2760
      %v3103 = vunpack.c.l.b16 %v2761
      %v3104 = vunpack.c.l.b16 %v2762
      %v3105 = vunpack.c.l.b16 %v2763
      %v3106 = vunpack.c.l.b16 %v2764
      %v3107 = vunpack.c.l.b16 %v2765
      %v3108 = vunpack.c.l.b16 %v2766
      %v3109 = vunpack.c.l.b16 %v2767
      %v3110 = vunpack.c.l.b16 %v2768
      %v3111 = vunpack.c.l.b16 %v2769
      %v3112 = vunpack.c.l.b16 %v2770
      %v3113 = vunpack.c.l.b16 %v2771
      %v3114 = vunpack.c.l.b16 %v2772
      %v3115 = vunpack.c.l.b16 %v2773
      %v3116 = vunpack.c.l.b16 %v2774
      %v3117 = vunpack.c.l.b16 %v2775
      %v3118 = vunpack.c.l.b16 %v2776
      %v3119 = vunpack.c.l.b16 %v2777
      %v3120 = vunpack.c.l.b16 %v2778
      %v3121 = vunpack.c.l.b16 %v2779
      %v3122 = vunpack.c.l.b16 %v2780
      %v3123 = vunpack.c.l.b16 %v2781
      %v3124 = vunpack.c.l.b16 %v2782
      %v3125 = vunpack.c.l.b16 %v2783
      %v3126 = vunpack.c.l.b16 %v2784
      %v3127 = vunpack.c.l.b16 %v2785
      %v3128 = vunpack.c.l.b16 %v2786
      %v3129 = vunpack.c.l.b16 %v2787
      %v3130 = vunpack.c.l.b16 %v2788
      %v3131 = vunpack.c.l.b16 %v2789
      %v3132 = vunpack.c.l.b16 %v2790
      %v3133 = vunpack.c.l.b16 %v2791
      %v3134 = vunpack.c.l.b16 %v2792
      %v3135 = vunpack.c.l.b16 %v2793
      %v3136 = vunpack.c.l.b16 %v2794
      %v3137 = vunpack.c.l.b16 %v2795
      %v3138 = vunpack.c.l.b16 %v2796
      %v3139 = vunpack.c.l.b16 %v2797
      %v3140 = vunpack.c.l.b16 %v2798
      %v3141 = vunpack.c.l.b16 %v2799
      %v3142 = vunpack.c.l.b16 %v2800
      %v3143 = vunpack.c.l.b16 %v2801
      %v3144 = vunpack.c.l.b16 %v2802
      %v3145 = vunpack.c.l.b16 %v2803
      %v3146 = vunpack.c.l.b16 %v2804
      %v3147 = vunpack.c.l.b16 %v2805
      %v3148 = vunpack.c.l.b16 %v2806
      %v3149 = vunpack.c.l.b16 %v2807
      %v3150 = vunpack.c.l.b16 %v2808
      %v3151 = vunpack.c.l.b16 %v2809
      %v3152 = vunpack.c.l.b16 %v2810
      %v3153 = vunpack.c.l.b16 %v2811
      %v3154 = vunpack.c.l.b16 %v2812
      %v3155 = vunpack.c.l.b16 %v2813
      %v3156 = vunpack.c.l.b16 %v2814
      %v3157 = vunpack.c.l.b16 %v2815
      %v3158 = vunpack.c.l.b16 %v2816
      %v3159 = vunpack.c.l.b16 %v2817
      %v3160 = vunpack.c.l.b16 %v2818
      %v3161 = vunpack.c.l.b16 %v2819
      %v3162 = vunpack.c.l.b16 %v2820
      %v3163 = vunpack.c.l.b16 %v2821
      %v3164 = vunpack.c.l.b16 %v2822
      %v3165 = vunpack.c.l.b16 %v2823
      %v3166 = vunpack.c.l.b16 %v2824
      %v3167 = vunpack.c.l.b16 %v2825
      %v3168 = vunpack.c.l.b16 %v2826
      %v3169 = vunpack.c.l.b16 %v2827
      %v3170 = vunpack.c.l.b16 %v2828
      %v3171 = vunpack.c.l.b16 %v2829
      %v3172 = vunpack.c.l.b16 %v2830
      %v3173 = vunpack.c.l.b16 %v2831
      %v3174 = vunpack.c.l.b16 %v2832
      %v3175 = vunpack.c.l.b16 %v2833
      %v3176 = vunpack.c.l.b16 %v2834
      %v3177 = vunpack.c.l.b16 %v2835
      %v3178 = vunpack.c.l.b16 %v2836
      %v3179 = vunpack.c.l.b16 %v2837
      %v3180 = vunpack.c.l.b16 %v2838
      %v3181 = vunpack.c.l.b16 %v2839
      %v3182 = vunpack.c.l.b16 %v2840
      %v3183 = vunpack.c.l.b16 %v2841
      %v3184 = vunpack.c.l.b16 %v2842
      %v3185 = vunpack.c.l.b16 %v2843
      %v3186 = vunpack.c.l.b16 %v2844
      %v3187 = vunpack.c.l.b16 %v2845
      %v3188 = vunpack.c.l.b16 %v2846
      %v3189 = vunpack.c.l.b16 %v2847
      %v3190 = vunpack.c.l.b16 %v2848
      %v3191 = vunpack.c.l.b16 %v2849
      %v3192 = vunpack.c.l.b16 %v2850
      %v3193 = vunpack.c.l.b16 %v2851
      %v3194 = vunpack.c.l.b16 %v2852
      %v3195 = vunpack.c.l.b16 %v2853
      %v3196 = vunpack.c.l.b16 %v2854
      %v3197 = vunpack.c.l.b16 %v2855
      %v3198 = vunpack.c.l.b16 %v2856
      %v3199 = vunpack.c.l.b16 %v2857
      %v3200 = vunpack.c.l.b16 %v2858
      %v3201 = vunpack.c.l.b16 %v2859
      %v3202 = vunpack.c.l.b16 %v2860
      %v3203 = vpack.c.b16 %v3060, %v3059
      %v3204 = vpack.c.b16 %v3062, %v3061
      %v3205 = vpack.c.b16 %v3064, %v3063
      %v3206 = vpack.c.b16 %v3066, %v3065
      %v3207 = vpack.c.b16 %v3068, %v3067
      %v3208 = vpack.c.b16 %v3070, %v3069
      %v3209 = vpack.c.b16 %v3072, %v3071
      %v3210 = vpack.c.b16 %v3074, %v3073
      %v3211 = vpack.c.b16 %v3076, %v3075
      %v3212 = vpack.c.b16 %v3078, %v3077
      %v3213 = vpack.c.b16 %v3080, %v3079
      %v3214 = vpack.c.b16 %v3082, %v3081
      %v3215 = vpack.c.b16 %v3084, %v3083
      %v3216 = vpack.c.b16 %v3086, %v3085
      %v3217 = vpack.c.b16 %v3088, %v3087
      %v3218 = vpack.c.b16 %v3090, %v3089
      %v3219 = vpack.c.b16 %v3092, %v3091
      %v3220 = vpack.c.b16 %v3094, %v3093
      %v3221 = vpack.c.b16 %v3096, %v3095
      %v3222 = vpack.c.b16 %v3098, %v3097
      %v3223 = vpack.c.b16 %v3100, %v3099
      %v3224 = vpack.c.b16 %v3102, %v3101
      %v3225 = vpack.c.b16 %v3104, %v3103
      %v3226 = vpack.c.b16 %v3106, %v3105
      %v3227 = vpack.c.b16 %v3108, %v3107
      %v3228 = vpack.c.b16 %v3110, %v3109
      %v3229 = vpack.c.b16 %v3112, %v3111
      %v3230 = vpack.c.b16 %v3114, %v3113
      %v3231 = vpack.c.b16 %v3116, %v3115
      %v3232 = vpack.c.b16 %v3118, %v3117
      %v3233 = vpack.c.b16 %v3120, %v3119
      %v3234 = vpack.c.b16 %v3122, %v3121
      %v3235 = vpack.c.b16 %v3124, %v3123
      %v3236 = vpack.c.b16 %v3126, %v3125
      %v3237 = vpack.c.b16 %v3128, %v3127
      %v3238 = vpack.c.b16 %v3130, %v3129
      %v3239 = vpack.c.b16 %v3132, %v3131
      %v3240 = vpack.c.b16 %v3134, %v3133
      %v3241 = vpack.c.b16 %v3136, %v3135
      %v3242 = vpack.c.b16 %v3138, %v3137
      %v3243 = vpack.c.b16 %v3140, %v3139
      %v3244 = vpack.c.b16 %v3142, %v3141
      %v3245 = vpack.c.b16 %v3144, %v3143
      %v3246 = vpack.c.b16 %v3146, %v3145
      %v3247 = vpack.c.b16 %v3148, %v3147
      %v3248 = vpack.c.b16 %v3150, %v3149
      %v3249 = vpack.c.b16 %v3152, %v3151
      %v3250 = vpack.c.b16 %v3154, %v3153
      %v3251 = vpack.c.b16 %v3156, %v3155
      %v3252 = vpack.c.b16 %v3158, %v3157
      %v3253 = vpack.c.b16 %v3160, %v3159
      %v3254 = vpack.c.b16 %v3162, %v3161
      %v3255 = vpack.c.b16 %v3164, %v3163
      %v3256 = vpack.c.b16 %v3166, %v3165
      %v3257 = vpack.c.b16 %v3168, %v3167
      %v3258 = vpack.c.b16 %v3170, %v3169
      %v3259 = vpack.c.b16 %v3172, %v3171
      %v3260 = vpack.c.b16 %v3174, %v3173
      %v3261 = vpack.c.b16 %v3176, %v3175
      %v3262 = vpack.c.b16 %v3178, %v3177
      %v3263 = vpack.c.b16 %v3180, %v3179
      %v3264 = vpack.c.b16 %v3182, %v3181
      %v3265 = vpack.c.b16 %v3184, %v3183
      %v3266 = vpack.c.b16 %v3186, %v3185
      %v3267 = vpack.c.b16 %v3188, %v3187
      %v3268 = vpack.c.b16 %v3190, %v3189
      %v3269 = vpack.c.b16 %v3192, %v3191
      %v3270 = vpack.c.b16 %v3194, %v3193
      %v3271 = vpack.c.b16 %v3196, %v3195
      %v3272 = vpack.c.b16 %v3198, %v3197
      %v3273 = vpack.c.b16 %v3200, %v3199
      %v3274 = vpack.c.b16 %v3202, %v3201
      %3347 = vmatpush.bf16.msra.mxu0 %v3210
      %3348 = vmatpush.bf16.msra.mxu0 %v3209
      %3349 = vmatpush.bf16.msra.mxu0 %v3208
      %3350 = vmatpush.bf16.msra.mxu0 %v3207
      %3351 = vmatpush.bf16.msra.mxu0 %v3206
      %3352 = vmatpush.bf16.msra.mxu0 %v3205
      %3353 = vmatpush.bf16.msra.mxu0 %v3204
      %3354 = vmatpush.bf16.msra.mxu0 %v3203
      %3355 = vmatmul.bf16.gmra.mxu0 %v2861
      %v3356 = vpop.f32.mrf.mxu0
      %v3357 = vadd.f32 0.0, %v3356
      %v3358 = vpop.f32.mrf.mxu0
      %v3359 = vadd.f32 0.0, %v3358
      %3360 = vmatmul.bf16.gmra.mxu0 %v2867
      %v3361 = vpop.f32.mrf.mxu0
      %v3362 = vadd.f32 0.0, %v3361
      %v3363 = vpop.f32.mrf.mxu0
      %v3364 = vadd.f32 0.0, %v3363
      %3365 = vmatmul.bf16.gmra.mxu0 %v2873
      %v3366 = vpop.f32.mrf.mxu0
      %v3367 = vadd.f32 0.0, %v3366
      %v3368 = vpop.f32.mrf.mxu0
      %v3369 = vadd.f32 0.0, %v3368
      %3370 = vmatmul.bf16.gmra.mxu0 %v2879
      %v3371 = vpop.f32.mrf.mxu0
      %v3372 = vadd.f32 0.0, %v3371
      %v3373 = vpop.f32.mrf.mxu0
      %v3374 = vadd.f32 0.0, %v3373
      %3375 = vdwg.mxu0
      %3376 = vmatpush.bf16.msra.mxu0 %v3218
      %3377 = vmatpush.bf16.msra.mxu0 %v3217
      %3378 = vmatpush.bf16.msra.mxu0 %v3216
      %3379 = vmatpush.bf16.msra.mxu0 %v3215
      %3380 = vmatpush.bf16.msra.mxu0 %v3214
      %3381 = vmatpush.bf16.msra.mxu0 %v3213
      %3382 = vmatpush.bf16.msra.mxu0 %v3212
      %3383 = vmatpush.bf16.msra.mxu0 %v3211
      %3384 = vmatmul.bf16.gmra.mxu0 %v2862
      %v3385 = vpop.f32.mrf.mxu0
      %v3386 = vadd.f32 %v3357, %v3385
      %v3387 = vpop.f32.mrf.mxu0
      %v3388 = vadd.f32 %v3359, %v3387
      %3389 = vmatmul.bf16.gmra.mxu0 %v2868
      %v3390 = vpop.f32.mrf.mxu0
      %v3391 = vadd.f32 %v3362, %v3390
      %v3392 = vpop.f32.mrf.mxu0
      %v3393 = vadd.f32 %v3364, %v3392
      %3394 = vmatmul.bf16.gmra.mxu0 %v2874
      %v3395 = vpop.f32.mrf.mxu0
      %v3396 = vadd.f32 %v3367, %v3395
      %v3397 = vpop.f32.mrf.mxu0
      %v3398 = vadd.f32 %v3369, %v3397
      %3399 = vmatmul.bf16.gmra.mxu0 %v2880
      %v3400 = vpop.f32.mrf.mxu0
      %v3401 = vadd.f32 %v3372, %v3400
      %v3402 = vpop.f32.mrf.mxu0
      %v3403 = vadd.f32 %v3374, %v3402
      %3404 = vdwg.mxu0
      %3405 = vmatpush.bf16.msra.mxu0 %v3226
      %3406 = vmatpush.bf16.msra.mxu0 %v3225
      %3407 = vmatpush.bf16.msra.mxu0 %v3224
      %3408 = vmatpush.bf16.msra.mxu0 %v3223
      %3409 = vmatpush.bf16.msra.mxu0 %v3222
      %3410 = vmatpush.bf16.msra.mxu0 %v3221
      %3411 = vmatpush.bf16.msra.mxu0 %v3220
      %3412 = vmatpush.bf16.msra.mxu0 %v3219
      %3413 = vmatmul.bf16.gmra.mxu0 %v2863
      %v3414 = vpop.f32.mrf.mxu0
      %v3415 = vadd.f32 %v3386, %v3414
      %v3416 = vpop.f32.mrf.mxu0
      %v3417 = vadd.f32 %v3388, %v3416
      %3418 = vmatmul.bf16.gmra.mxu0 %v2869
      %v3419 = vpop.f32.mrf.mxu0
      %v3420 = vadd.f32 %v3391, %v3419
      %v3421 = vpop.f32.mrf.mxu0
      %v3422 = vadd.f32 %v3393, %v3421
      %3423 = vmatmul.bf16.gmra.mxu0 %v2875
      %v3424 = vpop.f32.mrf.mxu0
      %v3425 = vadd.f32 %v3396, %v3424
      %v3426 = vpop.f32.mrf.mxu0
      %v3427 = vadd.f32 %v3398, %v3426
      %3428 = vmatmul.bf16.gmra.mxu0 %v2881
      %v3429 = vpop.f32.mrf.mxu0
      %v3430 = vadd.f32 %v3401, %v3429
      %v3431 = vpop.f32.mrf.mxu0
      %v3432 = vadd.f32 %v3403, %v3431
      %3433 = vdwg.mxu0
      %3434 = vmatpush.bf16.msra.mxu0 %v3234
      %3435 = vmatpush.bf16.msra.mxu0 %v3233
      %3436 = vmatpush.bf16.msra.mxu0 %v3232
      %3437 = vmatpush.bf16.msra.mxu0 %v3231
      %3438 = vmatpush.bf16.msra.mxu0 %v3230
      %3439 = vmatpush.bf16.msra.mxu0 %v3229
      %3440 = vmatpush.bf16.msra.mxu0 %v3228
      %3441 = vmatpush.bf16.msra.mxu0 %v3227
      %3442 = vmatmul.bf16.gmra.mxu0 %v2864
      %v3443 = vpop.f32.mrf.mxu0
      %v3444 = vadd.f32 %v3415, %v3443
      %v3445 = vpop.f32.mrf.mxu0
      %v3446 = vadd.f32 %v3417, %v3445
      %3447 = vmatmul.bf16.gmra.mxu0 %v2870
      %v3448 = vpop.f32.mrf.mxu0
      %v3449 = vadd.f32 %v3420, %v3448
      %v3450 = vpop.f32.mrf.mxu0
      %v3451 = vadd.f32 %v3422, %v3450
      %3452 = vmatmul.bf16.gmra.mxu0 %v2876
      %v3453 = vpop.f32.mrf.mxu0
      %v3454 = vadd.f32 %v3425, %v3453
      %v3455 = vpop.f32.mrf.mxu0
      %v3456 = vadd.f32 %v3427, %v3455
      %3457 = vmatmul.bf16.gmra.mxu0 %v2882
      %v3458 = vpop.f32.mrf.mxu0
      %v3459 = vadd.f32 %v3430, %v3458
      %v3460 = vpop.f32.mrf.mxu0
      %v3461 = vadd.f32 %v3432, %v3460
      %3462 = vdwg.mxu0
      %3463 = vmatpush.bf16.msra.mxu0 %v3242
      %3464 = vmatpush.bf16.msra.mxu0 %v3241
      %3465 = vmatpush.bf16.msra.mxu0 %v3240
      %3466 = vmatpush.bf16.msra.mxu0 %v3239
      %3467 = vmatpush.bf16.msra.mxu0 %v3238
      %3468 = vmatpush.bf16.msra.mxu0 %v3237
      %3469 = vmatpush.bf16.msra.mxu0 %v3236
      %3470 = vmatpush.bf16.msra.mxu0 %v3235
      %3471 = vmatmul.bf16.gmra.mxu0 %v2865
      %v3472 = vpop.f32.mrf.mxu0
      %v3473 = vadd.f32 %v3444, %v3472
      %v3474 = vpop.f32.mrf.mxu0
      %v3475 = vadd.f32 %v3446, %v3474
      %3476 = vmatmul.bf16.gmra.mxu0 %v2871
      %v3477 = vpop.f32.mrf.mxu0
      %v3478 = vadd.f32 %v3449, %v3477
      %v3479 = vpop.f32.mrf.mxu0
      %v3480 = vadd.f32 %v3451, %v3479
      %3481 = vmatmul.bf16.gmra.mxu0 %v2877
      %v3482 = vpop.f32.mrf.mxu0
      %v3483 = vadd.f32 %v3454, %v3482
      %v3484 = vpop.f32.mrf.mxu0
      %v3485 = vadd.f32 %v3456, %v3484
      %3486 = vmatmul.bf16.gmra.mxu0 %v2883
      %v3487 = vpop.f32.mrf.mxu0
      %v3488 = vadd.f32 %v3459, %v3487
      %v3489 = vpop.f32.mrf.mxu0
      %v3490 = vadd.f32 %v3461, %v3489
      %3491 = vdwg.mxu0
      %3492 = vmatpush.bf16.msra.mxu0 %v3250
      %3493 = vmatpush.bf16.msra.mxu0 %v3249
      %3494 = vmatpush.bf16.msra.mxu0 %v3248
      %3495 = vmatpush.bf16.msra.mxu0 %v3247
      %3496 = vmatpush.bf16.msra.mxu0 %v3246
      %3497 = vmatpush.bf16.msra.mxu0 %v3245
      %3498 = vmatpush.bf16.msra.mxu0 %v3244
      %3499 = vmatpush.bf16.msra.mxu0 %v3243
      %3500 = vmatmul.bf16.gmra.mxu0 %v2866
      %v3501 = vpop.f32.mrf.mxu0
      %v3502 = vadd.f32 %v3473, %v3501
      %v3503 = vpop.f32.mrf.mxu0
      %v3504 = vadd.f32 %v3475, %v3503
      %3505 = vmatmul.bf16.gmra.mxu0 %v2872
      %v3506 = vpop.f32.mrf.mxu0
      %v3507 = vadd.f32 %v3478, %v3506
      %v3508 = vpop.f32.mrf.mxu0
      %v3509 = vadd.f32 %v3480, %v3508
      %3510 = vmatmul.bf16.gmra.mxu0 %v2878
      %v3511 = vpop.f32.mrf.mxu0
      %v3512 = vadd.f32 %v3483, %v3511
      %v3513 = vpop.f32.mrf.mxu0
      %v3514 = vadd.f32 %v3485, %v3513
      %3515 = vmatmul.bf16.gmra.mxu0 %v2884
      %v3516 = vpop.f32.mrf.mxu0
      %v3517 = vadd.f32 %v3488, %v3516
      %v3518 = vpop.f32.mrf.mxu0
      %v3519 = vadd.f32 %v3490, %v3518
      %3520 = vdwg.mxu0
      %3521 = vmatpush.bf16.msra.mxu0 %v3258
      %3522 = vmatpush.bf16.msra.mxu0 %v3257
      %3523 = vmatpush.bf16.msra.mxu0 %v3256
      %3524 = vmatpush.bf16.msra.mxu0 %v3255
      %3525 = vmatpush.bf16.msra.mxu0 %v3254
      %3526 = vmatpush.bf16.msra.mxu0 %v3253
      %3527 = vmatpush.bf16.msra.mxu0 %v3252
      %3528 = vmatpush.bf16.msra.mxu0 %v3251
      %3529 = vmatmul.bf16.gmra.mxu0 %v2867
      %v3530 = vpop.f32.mrf.mxu0
      %v3531 = vadd.f32 %v3502, %v3530
      %v3532 = vpop.f32.mrf.mxu0
      %v3533 = vadd.f32 %v3504, %v3532
      %3534 = vmatmul.bf16.gmra.mxu0 %v2873
      %v3535 = vpop.f32.mrf.mxu0
      %v3536 = vadd.f32 %v3507, %v3535
      %v3537 = vpop.f32.mrf.mxu0
      %v3538 = vadd.f32 %v3509, %v3537
      %3539 = vmatmul.bf16.gmra.mxu0 %v2879
      %v3540 = vpop.f32.mrf.mxu0
      %v3541 = vadd.f32 %v3512, %v3540
      %v3542 = vpop.f32.mrf.mxu0
      %v3543 = vadd.f32 %v3514, %v3542
      %3544 = vmatmul.bf16.gmra.mxu0 %v2885
      %v3545 = vpop.f32.mrf.mxu0
      %v3546 = vadd.f32 %v3517, %v3545
      %v3547 = vpop.f32.mrf.mxu0
      %v3548 = vadd.f32 %v3519, %v3547
      %3549 = vdwg.mxu0
      %3550 = vmatpush.bf16.msra.mxu0 %v3266
      %3551 = vmatpush.bf16.msra.mxu0 %v3265
      %3552 = vmatpush.bf16.msra.mxu0 %v3264
      %3553 = vmatpush.bf16.msra.mxu0 %v3263
      %3554 = vmatpush.bf16.msra.mxu0 %v3262
      %3555 = vmatpush.bf16.msra.mxu0 %v3261
      %3556 = vmatpush.bf16.msra.mxu0 %v3260
      %3557 = vmatpush.bf16.msra.mxu0 %v3259
      %3558 = vmatmul.bf16.gmra.mxu0 %v2868
      %v3559 = vpop.f32.mrf.mxu0
      %v3560 = vadd.f32 %v3531, %v3559
      %v3561 = vpop.f32.mrf.mxu0
      %v3562 = vadd.f32 %v3533, %v3561
      %3563 = vmatmul.bf16.gmra.mxu0 %v2874
      %v3564 = vpop.f32.mrf.mxu0
      %v3565 = vadd.f32 %v3536, %v3564
      %v3566 = vpop.f32.mrf.mxu0
      %v3567 = vadd.f32 %v3538, %v3566
      %3568 = vmatmul.bf16.gmra.mxu0 %v2880
      %v3569 = vpop.f32.mrf.mxu0
      %v3570 = vadd.f32 %v3541, %v3569
      %v3571 = vpop.f32.mrf.mxu0
      %v3572 = vadd.f32 %v3543, %v3571
      %3573 = vmatmul.bf16.gmra.mxu0 %v2886
      %v3574 = vpop.f32.mrf.mxu0
      %v3575 = vadd.f32 %v3546, %v3574
      %v3576 = vpop.f32.mrf.mxu0
      %v3577 = vadd.f32 %v3548, %v3576
      %3578 = vdwg.mxu0
      %3579 = vmatpush.bf16.msra.mxu0 %v3274
      %3580 = vmatpush.bf16.msra.mxu0 %v3273
      %3581 = vmatpush.bf16.msra.mxu0 %v3272
      %3582 = vmatpush.bf16.msra.mxu0 %v3271
      %3583 = vmatpush.bf16.msra.mxu0 %v3270
      %3584 = vmatpush.bf16.msra.mxu0 %v3269
      %3585 = vmatpush.bf16.msra.mxu0 %v3268
      %3586 = vmatpush.bf16.msra.mxu0 %v3267
      %3587 = vmatmul.bf16.gmra.mxu0 %v2869
      %v3588 = vpop.f32.mrf.mxu0
      %v3589 = vadd.f32 %v3560, %v3588
      %v3590 = vpop.f32.mrf.mxu0
      %v3591 = vadd.f32 %v3562, %v3590
      %3592 = vmatmul.bf16.gmra.mxu0 %v2875
      %v3593 = vpop.f32.mrf.mxu0
      %v3594 = vadd.f32 %v3565, %v3593
      %v3595 = vpop.f32.mrf.mxu0
      %v3596 = vadd.f32 %v3567, %v3595
      %3597 = vmatmul.bf16.gmra.mxu0 %v2881
      %v3598 = vpop.f32.mrf.mxu0
      %v3599 = vadd.f32 %v3570, %v3598
      %v3600 = vpop.f32.mrf.mxu0
      %v3601 = vadd.f32 %v3572, %v3600
      %3602 = vmatmul.bf16.gmra.mxu0 %v2887
      %v3603 = vpop.f32.mrf.mxu0
      %v3604 = vadd.f32 %v3575, %v3603
      %v3605 = vpop.f32.mrf.mxu0
      %v3606 = vadd.f32 %v3577, %v3605
      %3607 = vdwg.mxu0
      %v3608 = vstv %s397
      %v3609 = vmul.f32 %v3589, %v3608
      %v3610 = vmul.f32 %v3591, %v3608
      %v3611 = vmul.f32 %v3594, %v3608
      %v3612 = vmul.f32 %v3596, %v3608
      %v3613 = vmul.f32 %v3599, %v3608
      %v3614 = vmul.f32 %v3601, %v3608
      %v3615 = vmul.f32 %v3604, %v3608
      %v3616 = vmul.f32 %v3606, %v3608
      %v3617 = vadd.f32 %v2538, %v3609
      %v3618 = vadd.f32 %v2539, %v3610
      %v3619 = vadd.f32 %v2540, %v3611
      %v3620 = vadd.f32 %v2541, %v3612
      %v3621 = vadd.f32 %v2542, %v3613
      %v3622 = vadd.f32 %v2543, %v3614
      %v3623 = vadd.f32 %v2544, %v3615
      %v3624 = vadd.f32 %v2545, %v3616
      %v3625 = vpack.c.bf16 %v3617, %v3617
      %v3626 = vpack.c.bf16 %v3618, %v3618
      %v3627 = vpack.c.bf16 %v3619, %v3619
      %v3628 = vpack.c.bf16 %v3620, %v3620
      %v3629 = vpack.c.bf16 %v3621, %v3621
      %v3630 = vpack.c.bf16 %v3622, %v3622
      %v3631 = vpack.c.bf16 %v3623, %v3623
      %v3632 = vpack.c.bf16 %v3624, %v3624
      %3633 = vst [vmem:[%s383] sm:$0xf] %v3625
      %3634 = vst [vmem:[%s383 + $0x4] sm:$0xf] %v3626
      %3635 = vst [vmem:[%s383 + $0x8] sm:$0xf] %v3627
      %3636 = vst [vmem:[%s383 + $0xc] sm:$0xf] %v3628
      %3637 = vst [vmem:[%s383 + $0x10] sm:$0xf] %v3629
      %3638 = vst [vmem:[%s383 + $0x14] sm:$0xf] %v3630
      %3639 = vst [vmem:[%s383 + $0x18] sm:$0xf] %v3631
      %3640 = vst [vmem:[%s383 + $0x1c] sm:$0xf] %v3632
      %v3641 = vadd.f32 %v3617, %v3618
      %v3642 = vadd.f32 %v3641, %v3619
      %v3643 = vadd.f32 %v3642, %v3620
      %v3644 = vadd.f32 %v3643, %v3621
      %v3645 = vadd.f32 %v3644, %v3622
      %v3646 = vadd.f32 %v3645, %v3623
      %v3647 = vadd.f32 %v3646, %v3624
      %v3648 = vrot.slane %v3647, 4
      %v3649 = vadd.f32 %v3647, %v3648
      %v3650 = vrot.slane %v3649, 2
      %v3651 = vadd.f32 %v3649, %v3650
      %v3652 = vrot.slane %v3651, 1
      %v3653 = vadd.f32 %v3651, %v3652
      %3654 = vst [vmem:[%s391] sm:$0x1] %v3653
      %v3655 = vmul.f32 %v3617, %v3617
      %v3656 = vmul.f32 %v3618, %v3618
      %v3657 = vmul.f32 %v3619, %v3619
      %v3658 = vmul.f32 %v3620, %v3620
      %v3659 = vmul.f32 %v3621, %v3621
      %v3660 = vmul.f32 %v3622, %v3622
      %v3661 = vmul.f32 %v3623, %v3623
      %v3662 = vmul.f32 %v3624, %v3624
      %v3663 = vadd.f32 %v3655, %v3656
      %v3664 = vadd.f32 %v3663, %v3657
      %v3665 = vadd.f32 %v3664, %v3658
      %v3666 = vadd.f32 %v3665, %v3659
      %v3667 = vadd.f32 %v3666, %v3660
      %v3668 = vadd.f32 %v3667, %v3661
      %v3669 = vadd.f32 %v3668, %v3662
      %v3670 = vrot.slane %v3669, 4
      %v3671 = vadd.f32 %v3669, %v3670
      %v3672 = vrot.slane %v3671, 2
      %v3673 = vadd.f32 %v3671, %v3672
      %v3674 = vrot.slane %v3673, 1
      %v3675 = vadd.f32 %v3673, %v3674
      %3676 = vst [vmem:[%s391 + $0x1] sm:$0x1] %v3675
      %p3677 = scmp.lt.s32.totalorder %s21, 1
      %s3678 = scalar_select %p3677, %s21, 1
      %p3679 = scmp.lt.s32.totalorder %s22, 7
      %s3680 = scalar_select %p3679, %s22, 7
      %s3681 = smul.addr %s3680, 8
      %s3682 = smul.addr %s3678, 64
      %s3683 = sadd.s32 %s3681, %s3682
      %s3684 = smul.addr %s3683, 4
      %s3685 = scalar_lea.vmem %s4, %s3684
      %p3686 = scmp.lt.s32.totalorder %s21, 1
      %s3687 = scalar_select %p3686, %s21, 1
      %p3688 = scmp.lt.s32.totalorder %s22, 7
      %s3689 = scalar_select %p3688, %s22, 7
      %s3690 = smul.addr %s3687, 8
      %s3691 = sadd.s32 %s3689, %s3690
      %s3692 = smul.addr %s3691, 2
      %s3693 = scalar_lea.vmem %s5, %s3692
      // Predicated region
      $region37: #{conv_stack_forward.6} parent=35 // pred_check
        %p3694 = pneg %p166
      $region38: #{conv_stack_forward.6} parent=35 // pred_check_branch
        %3696 = sbr.rel (%p3694) target = $region40
      $region39: #{conv_stack_forward.6} parent=35 // pred_region
        _
      $region40: #{conv_stack_forward.6} parent=35 // pred_fallthru
        _
      // Predicated region
      $region41: #{conv_stack_forward.6} parent=35 // pred_check
        %p3697 = pneg %p194
      $region42: #{conv_stack_forward.6} parent=35 // pred_check_branch
        %3699 = sbr.rel (%p3697) target = $region44
      $region43: #{conv_stack_forward.6} parent=35 // pred_region
        _
      $region44: #{conv_stack_forward.6} parent=35 // pred_fallthru
        _
    $region36: #{conv_stack_forward.6} parent=5 // pred_fallthru
      _
    %p3700 = scmp.le.s32.totalorder 2, %s12
    // Predicated region
    $region45: #{conv_stack_forward.6} parent=5 // pred_check
      %p3701 = pneg %p3700
    $region46: #{conv_stack_forward.6} parent=5 // pred_check_branch
      %3703 = sbr.rel (%p3701) target = $region48
    $region47: #{conv_stack_forward.6} parent=5 // pred_region
      %s3704 = ssub.s32 %s12, 2
      // Predicated region
      $region49: #{conv_stack_forward.6} parent=47 // pred_check
        %p3705 = pneg %p172
      $region50: #{conv_stack_forward.6} parent=47 // pred_check_branch
        %3707 = sbr.rel (%p3705) target = $region52
      $region51: #{conv_stack_forward.6} parent=47 // pred_region
        %p3708 = scmp.lt.s32.totalorder %s23, 1
        %s3709 = scalar_select %p3708, %s23, 1
        %p3710 = scmp.lt.s32.totalorder %s24, 7
        %s3711 = scalar_select %p3710, %s24, 7
        %s3712 = smul.addr %s3711, 8
        %s3713 = smul.addr %s3709, 64
        %s3714 = sadd.s32 %s3712, %s3713
        %s3715 = smul.addr %s3714, 4
        %s3716 = scalar_lea.vmem %s4, %s3715
      $region52: #{conv_stack_forward.6} parent=47 // pred_fallthru
        _
      // Predicated region
      $region53: #{conv_stack_forward.6} parent=47 // pred_check
        %p3717 = pneg %p200
      $region54: #{conv_stack_forward.6} parent=47 // pred_check_branch
        %3719 = sbr.rel (%p3717) target = $region56
      $region55: #{conv_stack_forward.6} parent=47 // pred_region
        %p3720 = scmp.lt.s32.totalorder %s23, 1
        %s3721 = scalar_select %p3720, %s23, 1
        %p3722 = scmp.lt.s32.totalorder %s24, 7
        %s3723 = scalar_select %p3722, %s24, 7
        %s3724 = smul.addr %s3721, 8
        %s3725 = sadd.s32 %s3723, %s3724
        %s3726 = smul.addr %s3725, 2
        %s3727 = scalar_lea.vmem %s5, %s3726
      $region56: #{conv_stack_forward.6} parent=47 // pred_fallthru
        _
    $region48: #{conv_stack_forward.6} parent=5 // pred_fallthru
      _
  $region6: #{conv_stack_forward.6} parent=0 // loop_footer
    %s16 = sadd.s32 1, %s12
  $region7: #{conv_stack_forward.6} parent=0 // loop_footer_branch
    %11 = sbr.rel target = $region3
  $region8: #{conv_stack_forward.6} parent=0 // loop_exit
    _

</llo_original>
